<compile_context>
chip_gen: v6e
topology: v6e:2x2x1
jax: 0.10.0
libtpu: 0.0.40
codegen_flags: <defaults>
</compile_context>

<pallas_src>
import functools

import jax
import jax.numpy as jnp
import numpy as np
from jax.experimental import pallas as pl
from jax.experimental.pallas import tpu as pltpu


def _layer_norm(h, gamma, beta, eps):
    """LayerNorm over the last axis. h: [tb, C, H]; gamma/beta: [1, H]."""
    mu = jnp.mean(h, axis=-1, keepdims=True)
    var = jnp.mean(jnp.square(h - mu), axis=-1, keepdims=True)
    return (h - mu) * jax.lax.rsqrt(var + eps) * gamma + beta


def _working_memory_kernel(
        x_ref, mem_ref,
        wx_ref, bx_ref, wgm_ref, ln_g_ref, ln_b_ref,
        wkv_ref, bkv_ref, hones_ref, hones_t_ref, attn_bias_ref,
        w2_ref, b2_ref, wo_ref, bo_ref,
        out_ref, new_mem_ref,
        *, capacity, num_heads, decay, ln_eps):
    f32 = jnp.float32
    x = x_ref[...]                                   # [tb, H]   (compute dtype)
    mem = mem_ref[...]                               # [tb, C, H]
    tb, hidden = x.shape
    cap = capacity
    h3 = 3 * hidden
    cdtype = x.dtype

    # ---- fused x-side projections: [gates_x | q(scaled) | neuromod-1] -----
    px = (jnp.dot(x, wx_ref[...], preferred_element_type=f32)
          + bx_ref[...].astype(f32))                 # [tb, 3H + H + H4]
    pre_x = px[:, :h3]                               # [tb, 3H]
    q = px[:, h3:h3 + hidden]                        # [tb, H] (1/sqrt(hd) folded)
    h1 = jnp.maximum(px[:, h3 + hidden:], 0.0)       # [tb, H4]

    # ---- gate pre-activations for ALL slots in one batched matmul ---------
    pre = (jnp.dot(mem.reshape(tb * cap, hidden), wgm_ref[...],
                   preferred_element_type=f32).reshape(tb, cap, h3)
           + pre_x[:, None, :])                      # [tb, C, 3H]

    ln_g = ln_g_ref[...].astype(f32)                 # [1, 3H]
    ln_b = ln_b_ref[...].astype(f32)
    upd = jax.nn.sigmoid(_layer_norm(pre[:, :, 0:hidden],
                                     ln_g[:, 0:hidden], ln_b[:, 0:hidden],
                                     ln_eps))
    fgt = jax.nn.sigmoid(_layer_norm(pre[:, :, hidden:2 * hidden],
                                     ln_g[:, hidden:2 * hidden],
                                     ln_b[:, hidden:2 * hidden], ln_eps))
    new = jnp.tanh(_layer_norm(pre[:, :, 2 * hidden:h3],
                               ln_g[:, 2 * hidden:h3],
                               ln_b[:, 2 * hidden:h3], ln_eps))

    new_mem = (fgt * mem.astype(f32) + upd * new) * decay          # [tb, C, H]
    new_mem_ref[...] = new_mem.astype(new_mem_ref.dtype)           # one block store

    # ---- K / V projection for all slots in one matmul ---------------------
    kv = (jnp.dot(new_mem.astype(cdtype).reshape(tb * cap, hidden), wkv_ref[...],
                  preferred_element_type=f32)
          + bkv_ref[...].astype(f32))                # [tb*C, 2H]
    k = kv[:, :hidden].reshape(tb, cap, hidden)
    v = kv[:, hidden:].reshape(tb, cap, hidden)      # attention_scale folded into V

    # ---- single-query multi-head attention over the capacity axis ---------
    # Per-head q.k via an MXU segmented sum against a block-diagonal ones
    # matrix (lane-dense, no per-head slices / cross-lane reductions).
    prod = q[:, None, :] * k                                        # [tb, C, H]
    scores = jnp.dot(prod.reshape(tb * cap, hidden), hones_ref[...],
                     preferred_element_type=f32).reshape(tb, cap, num_heads)
    scores = scores - jnp.max(scores, axis=1, keepdims=True)
    e = jnp.exp(scores)
    w = e / jnp.sum(e, axis=1, keepdims=True)                       # [tb, C, NH]
    # Broadcast per-head weights back to H lanes with the transposed ones mat.
    w_full = jnp.dot(w.reshape(tb * cap, num_heads), hones_t_ref[...],
                     preferred_element_type=f32).reshape(tb, cap, hidden)
    attn = jnp.sum(w_full * v, axis=1)                              # [tb, H]

    # ---- neuromodulation MLP ((dop+ser+nor+ach)/4 folded into w2/b2) ------
    neuromod = (jnp.dot(h1.astype(cdtype), w2_ref[...],
                        preferred_element_type=f32)
                + b2_ref[...].astype(f32))                          # [tb, H]

    attn = (attn + attn_bias_ref[...].astype(f32)) * (1.0 + neuromod)
    mem_out = (jnp.dot(attn.astype(cdtype), wo_ref[...],
                       preferred_element_type=f32)
               + bo_ref[...].astype(f32))
    out_ref[...] = (x.astype(f32) + mem_out).astype(out_ref.dtype)


def working_memory_forward(x, memory_state, params, *,
                           capacity=5, decay_factor=0.95, num_heads=4,
                           ln_eps=1e-5):
    """Pallas implementation of WorkingMemoryModule.forward (eval mode)."""
    batch, hidden = x.shape
    assert hidden % num_heads == 0
    head_dim = hidden // num_heads
    h4 = params['w_nm1'].shape[1]
    f32 = jnp.float32
    cdtype = x.dtype                     # MXU operand dtype (bf16 stays bf16)

    if memory_state is None:
        memory_state = jnp.zeros((batch, capacity, hidden), dtype=x.dtype)
    memory_state = memory_state.astype(x.dtype)

    # ---- fold scalars into weights (f32), fuse the x-side projections -----
    qk_scale = jnp.asarray(head_dim ** -0.5, f32)
    attn_scale = params['attention_scale'].astype(f32).reshape(())
    nm_scale = (params['dopamine'] + params['serotonin']
                + params['norepinephrine']
                + params['acetylcholine']).astype(f32).reshape(()) / 4.0

    wg = jnp.concatenate([params['w_update'], params['w_forget'],
                          params['w_transform']], axis=1).astype(f32)   # [2H, 3H]
    wx = jnp.concatenate([wg[:hidden, :],
                          params['w_q'].astype(f32) * qk_scale,
                          params['w_nm1'].astype(f32)],
                         axis=1).astype(cdtype)                          # [H, 4H+H4]
    bx = jnp.concatenate([params['b_update'].astype(f32),
                          params['b_forget'].astype(f32),
                          params['b_transform'].astype(f32),
                          params['b_q'].astype(f32) * qk_scale,
                          params['b_nm1'].astype(f32)]).reshape(1, 4 * hidden + h4)
    wg_m = wg[hidden:, :].astype(cdtype)                                 # [H, 3H]
    ln_g = jnp.concatenate([params['ln_g_update'], params['ln_g_forget'],
                            params['ln_g_transform']]).astype(f32).reshape(1, 3 * hidden)
    ln_b = jnp.concatenate([params['ln_b_update'], params['ln_b_forget'],
                            params['ln_b_transform']]).astype(f32).reshape(1, 3 * hidden)

    wkv = jnp.concatenate([params['w_k'].astype(f32),
                           params['w_v'].astype(f32) * attn_scale],
                          axis=1).astype(cdtype)                         # [H, 2H]
    bkv = jnp.concatenate([params['b_k'].astype(f32),
                           params['b_v'].astype(f32) * attn_scale]).reshape(1, 2 * hidden)
    attn_bias = jnp.broadcast_to(
        params['attention_bias'].astype(f32).reshape(1, 1), (1, hidden))

    w2 = (params['w_nm2'].astype(f32) * nm_scale).astype(cdtype)
    b2 = (params['b_nm2'].astype(f32) * nm_scale).reshape(1, hidden)
    wo = params['w_o'].astype(cdtype)
    bo = params['b_o'].astype(f32).reshape(1, hidden)

    # Block-diagonal ones matrices for the MXU per-head segmented sums.
    d_head = np.arange(hidden) // head_dim
    hones_np = (d_head[:, None] == np.arange(num_heads)[None, :]).astype(np.float32)
    hones = jnp.asarray(hones_np)                                    # [H, NH]
    hones_t = jnp.asarray(np.ascontiguousarray(hones_np.T))          # [NH, H]

    weight_args = (wx, bx, wg_m, ln_g, ln_b, wkv, bkv, hones, hones_t,
                   attn_bias, w2, b2, wo, bo)

    # ---- batch tiling: big tiles, >=2 grid steps when possible, padding ---
    row_bytes = (10 * capacity + 8) * hidden * 4      # rough live f32 bytes/row
    act_budget = 8 << 20                              # activations per tile
    tb = max(1, min(batch, act_budget // max(row_bytes, 1), 1024))
    if batch < 8:
        tb = batch                                    # single full-batch tile
    else:
        tb = max(8, (tb // 8) * 8)
        if batch >= 16 and tb >= batch:
            # keep >=2 grid steps so both v7x TensorCores get work
            half = (batch + 1) // 2
            tb = ((half + 7) // 8) * 8
    num_tiles = pl.cdiv(batch, tb)
    padded = num_tiles * tb
    x_in, mem_in = x, memory_state
    if padded != batch:
        x_in = jnp.pad(x, ((0, padded - batch), (0, 0)))
        mem_in = jnp.pad(memory_state, ((0, padded - batch), (0, 0), (0, 0)))
    grid = (num_tiles,)

    itemsize = jnp.dtype(cdtype).itemsize
    in_specs = [
        pl.BlockSpec((tb, hidden), lambda i: (i, 0)),
        pl.BlockSpec((tb, capacity, hidden), lambda i: (i, 0, 0)),
    ] + [pl.BlockSpec(w.shape, lambda i, n=w.ndim: (0,) * n) for w in weight_args]
    out_specs = [
        pl.BlockSpec((tb, hidden), lambda i: (i, 0)),
        pl.BlockSpec((tb, capacity, hidden), lambda i: (i, 0, 0)),
    ]
    out_shape = [
        jax.ShapeDtypeStruct((padded, hidden), x.dtype),
        jax.ShapeDtypeStruct((padded, capacity, hidden), x.dtype),
    ]

    # VMEM budget: double-buffered weights + i/o tiles + intermediate headroom,
    # clamped to v7x's 64 MiB physical VMEM.
    weight_bytes = sum(int(np.prod(a.shape)) * a.dtype.itemsize for a in weight_args)
    io_bytes = (tb * hidden + tb * capacity * hidden) * itemsize
    need = 2 * weight_bytes + 4 * io_bytes + tb * row_bytes
    vmem_limit = int(min(max(need * 5 // 4, 32 << 20), 64 << 20))

    flops = padded * (
        2 * hidden * (4 * hidden + h4)                 # fused x-side projections
        + capacity * 2 * hidden * 3 * hidden           # gate memory matmul
        + capacity * 2 * hidden * 2 * hidden           # k/v projection
        + capacity * 4 * hidden * num_heads            # score + head-broadcast matmuls
        + 2 * h4 * hidden + 2 * hidden * hidden        # neuromod-2 + out proj
        + 25 * capacity * hidden)                      # gate / attention elementwise
    transcendentals = padded * capacity * (3 * hidden + num_heads)
    bytes_accessed = int(weight_bytes
                         + 2 * (padded * hidden
                                + padded * capacity * hidden) * itemsize)

    kernel = functools.partial(
        _working_memory_kernel,
        capacity=int(capacity), num_heads=int(num_heads),
        decay=float(decay_factor), ln_eps=float(ln_eps))

    out, new_mem = pl.pallas_call(
        kernel,
        out_shape=out_shape,
        grid_spec=pltpu.PrefetchScalarGridSpec(
            num_scalar_prefetch=0,
            grid=grid,
            in_specs=in_specs,
            out_specs=out_specs,
        ),
        compiler_params=pltpu.CompilerParams(
            dimension_semantics=("parallel",),
            vmem_limit_bytes=vmem_limit),
        cost_estimate=pl.CostEstimate(
            flops=int(flops),
            transcendentals=int(transcendentals),
            bytes_accessed=int(bytes_accessed)),
    )(x_in, mem_in, *weight_args)

    if padded != batch:
        out = out[:batch]
        new_mem = new_mem[:batch]
    return out, new_mem


def working_memory_reference(x, memory_state, params, *,
                             capacity=5, decay_factor=0.95, num_heads=4,
                             ln_eps=1e-5):
    """Pure-JAX reference (same semantics) for correctness checking."""
    batch, hidden = x.shape
    hd = hidden // num_heads
    if memory_state is None:
        memory_state = jnp.zeros((batch, capacity, hidden), x.dtype)
    x32 = x.astype(jnp.float32)
    mem = memory_state.astype(jnp.float32)

    def ln(h, g, b):
        mu = jnp.mean(h, -1, keepdims=True)
        var = jnp.mean((h - mu) ** 2, -1, keepdims=True)
        return (h - mu) / jnp.sqrt(var + ln_eps) * g + b

    new_slots = []
    for i in range(capacity):
        slot = mem[:, i, :]
        comb = jnp.concatenate([x32, slot], axis=1)
        upd = jax.nn.sigmoid(ln(comb @ params['w_update'] + params['b_update'],
                                params['ln_g_update'], params['ln_b_update']))
        fgt = jax.nn.sigmoid(ln(comb @ params['w_forget'] + params['b_forget'],
                                params['ln_g_forget'], params['ln_b_forget']))
        new = jnp.tanh(ln(comb @ params['w_transform'] + params['b_transform'],
                          params['ln_g_transform'], params['ln_b_transform']))
        new_slots.append(((fgt * slot + upd * new) * decay_factor)[:, None, :])
    new_mem = jnp.concatenate(new_slots, axis=1)

    q = (x32 @ params['w_q'] + params['b_q']).reshape(batch, num_heads, hd)
    k = (new_mem @ params['w_k'] + params['b_k']).reshape(batch, capacity, num_heads, hd)
    v = (new_mem @ params['w_v'] + params['b_v']).reshape(batch, capacity, num_heads, hd)
    scores = jnp.einsum('bhd,bchd->bhc', q, k) * (hd ** -0.5)
    w = jax.nn.softmax(scores, axis=-1)
    attn = jnp.einsum('bhc,bchd->bhd', w, v).reshape(batch, hidden)

    mod = jnp.maximum(x32 @ params['w_nm1'] + params['b_nm1'], 0.0) \
        @ params['w_nm2'] + params['b_nm2']
    nm = (params['dopamine'] + params['serotonin'] + params['norepinephrine']
          + params['acetylcholine']) / 4.0 * mod
    attn = attn * params['attention_scale'] + params['attention_bias']
    attn = attn * (1.0 + nm)
    out = x32 + (attn @ params['w_o'] + params['b_o'])
    return out.astype(x.dtype), new_mem.astype(x.dtype)


if __name__ == "__main__":
    B, H, C, NH = 2, 32, 5, 4
    H4 = H // 4

    key = jax.random.PRNGKey(0)
    keys = iter(jax.random.split(key, 32))

    def rnd(shape, scale=0.1):
        return jax.random.normal(next(keys), shape, dtype=jnp.float32) * scale

    # Weights stored in [in, out] layout (y = x @ W + b).
    params = {
        'w_update': rnd((2 * H, H)), 'b_update': rnd((H,)),
        'w_forget': rnd((2 * H, H)), 'b_forget': rnd((H,)),
        'w_transform': rnd((2 * H, H)), 'b_transform': rnd((H,)),
        'ln_g_update': jnp.ones((H,), jnp.float32), 'ln_b_update': jnp.zeros((H,), jnp.float32),
        'ln_g_forget': jnp.ones((H,), jnp.float32), 'ln_b_forget': jnp.zeros((H,), jnp.float32),
        'ln_g_transform': jnp.ones((H,), jnp.float32), 'ln_b_transform': jnp.zeros((H,), jnp.float32),
        'w_q': rnd((H, H)), 'b_q': rnd((H,)),
        'w_k': rnd((H, H)), 'b_k': rnd((H,)),
        'w_v': rnd((H, H)), 'b_v': rnd((H,)),
        'w_o': rnd((H, H)), 'b_o': rnd((H,)),
        'w_nm1': rnd((H, H4)), 'b_nm1': rnd((H4,)),
        'w_nm2': rnd((H4, H)), 'b_nm2': rnd((H,)),
        'attention_scale': jnp.ones((1,), jnp.float32),
        'attention_bias': jnp.full((1,), 0.05, jnp.float32),
        'dopamine': jnp.ones((1,), jnp.float32),
        'serotonin': jnp.ones((1,), jnp.float32),
        'norepinephrine': jnp.ones((1,), jnp.float32),
        'acetylcholine': jnp.ones((1,), jnp.float32),
    }

    x = jax.random.normal(next(keys), (B, H), dtype=jnp.float32)
    mem0 = jax.random.normal(next(keys), (B, C, H), dtype=jnp.float32) * 0.5

    # Forward with an existing memory state.
    out1, new_mem1 = working_memory_forward(
        x, mem0, params, capacity=C, decay_factor=0.95, num_heads=NH)
    out1, new_mem1 = jax.block_until_ready((out1, new_mem1))

    # Forward with memory_state=None (zero-initialized memory).
    out2, new_mem2 = working_memory_forward(
        x, None, params, capacity=C, decay_factor=0.95, num_heads=NH)
    jax.block_until_ready((out2, new_mem2))

    # Numerical check against a pure-JAX reference of the same semantics.
    ref_out, ref_mem = working_memory_reference(
        x, mem0, params, capacity=C, decay_factor=0.95, num_heads=NH)
    np.testing.assert_allclose(np.asarray(out1), np.asarray(ref_out),
                               rtol=1e-2, atol=1e-2)
    np.testing.assert_allclose(np.asarray(new_mem1), np.asarray(ref_mem),
                               rtol=1e-2, atol=1e-2)

    # Larger batch exercising the multi-step (grid>1) + padding path.
    B2 = 40
    xb = jax.random.normal(next(keys), (B2, H), dtype=jnp.float32)
    memb = jax.random.normal(next(keys), (B2, C, H), dtype=jnp.float32) * 0.5
    out3, new_mem3 = working_memory_forward(
        xb, memb, params, capacity=C, decay_factor=0.95, num_heads=NH)
    out3, new_mem3 = jax.block_until_ready((out3, new_mem3))
    ref_out3, ref_mem3 = working_memory_reference(
        xb, memb, params, capacity=C, decay_factor=0.95, num_heads=NH)
    np.testing.assert_allclose(np.asarray(out3), np.asarray(ref_out3),
                               rtol=1e-2, atol=1e-2)
    np.testing.assert_allclose(np.asarray(new_mem3), np.asarray(ref_mem3),
                               rtol=1e-2, atol=1e-2)

    assert out1.shape == (B, H) and new_mem1.shape == (B, C, H)
    assert out2.shape == (B, H) and new_mem2.shape == (B, C, H)
    assert out3.shape == (B2, H) and new_mem3.shape == (B2, C, H)
    print("KERNEL_OK")
</pallas_src>

<mosaic_0001>
module attributes {stable_mosaic.version = 11 : i64} {
  func.func @_working_memory_kernel(%arg0: i32, %arg1: memref<2x32xf32, #tpu.memory_space<vmem>>, %arg2: memref<2x5x32xf32, #tpu.memory_space<vmem>>, %arg3: memref<32x136xf32, #tpu.memory_space<vmem>>, %arg4: memref<1x136xf32, #tpu.memory_space<vmem>>, %arg5: memref<32x96xf32, #tpu.memory_space<vmem>>, %arg6: memref<1x96xf32, #tpu.memory_space<vmem>>, %arg7: memref<1x96xf32, #tpu.memory_space<vmem>>, %arg8: memref<32x64xf32, #tpu.memory_space<vmem>>, %arg9: memref<1x64xf32, #tpu.memory_space<vmem>>, %arg10: memref<32x4xf32, #tpu.memory_space<vmem>>, %arg11: memref<4x32xf32, #tpu.memory_space<vmem>>, %arg12: memref<1x32xf32, #tpu.memory_space<vmem>>, %arg13: memref<8x32xf32, #tpu.memory_space<vmem>>, %arg14: memref<1x32xf32, #tpu.memory_space<vmem>>, %arg15: memref<32x32xf32, #tpu.memory_space<vmem>>, %arg16: memref<1x32xf32, #tpu.memory_space<vmem>>, %arg17: memref<2x32xf32, #tpu.memory_space<vmem>>, %arg18: memref<2x5x32xf32, #tpu.memory_space<vmem>>) attributes {dimension_semantics = [#tpu.dimension_semantics<parallel>], iteration_bounds = array<i64: 1>, scalar_prefetch = 0 : i64, scratch_operands = 0 : i64, tpu.core_type = #tpu.core_type<tc>, window_params = [{transform_indices = @transform_0, window_bounds = array<i64: 2, 32>}, {transform_indices = @transform_1, window_bounds = array<i64: 2, 5, 32>}, {pipeline_mode = #tpu.pipeline_mode<synchronous>, transform_indices = @transform_2, window_bounds = array<i64: 32, 136>}, {pipeline_mode = #tpu.pipeline_mode<synchronous>, transform_indices = @transform_3, window_bounds = array<i64: 1, 136>}, {pipeline_mode = #tpu.pipeline_mode<synchronous>, transform_indices = @transform_4, window_bounds = array<i64: 32, 96>}, {pipeline_mode = #tpu.pipeline_mode<synchronous>, transform_indices = @transform_5, window_bounds = array<i64: 1, 96>}, {pipeline_mode = #tpu.pipeline_mode<synchronous>, transform_indices = @transform_6, window_bounds = array<i64: 1, 96>}, {pipeline_mode = #tpu.pipeline_mode<synchronous>, transform_indices = @transform_7, window_bounds = array<i64: 32, 64>}, {pipeline_mode = #tpu.pipeline_mode<synchronous>, transform_indices = @transform_8, window_bounds = array<i64: 1, 64>}, {pipeline_mode = #tpu.pipeline_mode<synchronous>, transform_indices = @transform_9, window_bounds = array<i64: 32, 4>}, {pipeline_mode = #tpu.pipeline_mode<synchronous>, transform_indices = @transform_10, window_bounds = array<i64: 4, 32>}, {pipeline_mode = #tpu.pipeline_mode<synchronous>, transform_indices = @transform_11, window_bounds = array<i64: 1, 32>}, {pipeline_mode = #tpu.pipeline_mode<synchronous>, transform_indices = @transform_12, window_bounds = array<i64: 8, 32>}, {pipeline_mode = #tpu.pipeline_mode<synchronous>, transform_indices = @transform_13, window_bounds = array<i64: 1, 32>}, {pipeline_mode = #tpu.pipeline_mode<synchronous>, transform_indices = @transform_14, window_bounds = array<i64: 32, 32>}, {pipeline_mode = #tpu.pipeline_mode<synchronous>, transform_indices = @transform_15, window_bounds = array<i64: 1, 32>}, {transform_indices = @transform_16, window_bounds = array<i64: 2, 32>}, {transform_indices = @transform_17, window_bounds = array<i64: 2, 5, 32>}]} {
    %c0 = arith.constant 0 : index
    %c0_0 = arith.constant 0 : index
    %0 = vector.load %arg1[%c0, %c0_0] : memref<2x32xf32, #tpu.memory_space<vmem>>, vector<2x32xf32>
    %c0_1 = arith.constant 0 : index
    %c0_2 = arith.constant 0 : index
    %c0_3 = arith.constant 0 : index
    %1 = vector.load %arg2[%c0_1, %c0_2, %c0_3] : memref<2x5x32xf32, #tpu.memory_space<vmem>>, vector<2x5x32xf32>
    %c0_4 = arith.constant 0 : index
    %c0_5 = arith.constant 0 : index
    %2 = vector.load %arg3[%c0_4, %c0_5] : memref<32x136xf32, #tpu.memory_space<vmem>>, vector<32x136xf32>
    %cst = arith.constant dense<0.000000e+00> : vector<2x136xf32>
    %3 = tpu.matmul %0, %2, %cst {dimension_numbers = #tpu.dot_dimension_numbers<[1], [0], [0], [1], [0, 0, 1, 1], [], []>} : vector<2x32xf32>, vector<32x136xf32>, vector<2x136xf32> -> vector<2x136xf32>
    %c0_6 = arith.constant 0 : index
    %c0_7 = arith.constant 0 : index
    %4 = vector.load %arg4[%c0_6, %c0_7] : memref<1x136xf32, #tpu.memory_space<vmem>>, vector<1x136xf32>
    %5 = vector.broadcast %4 : vector<1x136xf32> to vector<2x136xf32>
    %6 = arith.addf %3, %5 : vector<2x136xf32>
    %7 = vector.extract_strided_slice %6 {offsets = [0, 0], sizes = [2, 96], strides = [1, 1]} : vector<2x136xf32> to vector<2x96xf32>
    %8 = vector.extract_strided_slice %6 {offsets = [0, 96], sizes = [2, 32], strides = [1, 1]} : vector<2x136xf32> to vector<2x32xf32>
    %9 = vector.extract_strided_slice %6 {offsets = [0, 128], sizes = [2, 8], strides = [1, 1]} : vector<2x136xf32> to vector<2x8xf32>
    %cst_8 = arith.constant 0.000000e+00 : f32
    %10 = vector.broadcast %cst_8 : f32 to vector<2x8xf32>
    %11 = arith.maximumf %9, %10 : vector<2x8xf32>
    %12 = vector.shape_cast %1 : vector<2x5x32xf32> to vector<10x32xf32>
    %c0_9 = arith.constant 0 : index
    %c0_10 = arith.constant 0 : index
    %13 = vector.load %arg5[%c0_9, %c0_10] : memref<32x96xf32, #tpu.memory_space<vmem>>, vector<32x96xf32>
    %cst_11 = arith.constant dense<0.000000e+00> : vector<10x96xf32>
    %14 = tpu.matmul %12, %13, %cst_11 {dimension_numbers = #tpu.dot_dimension_numbers<[1], [0], [0], [1], [0, 0, 1, 1], [], []>} : vector<10x32xf32>, vector<32x96xf32>, vector<10x96xf32> -> vector<10x96xf32>
    %15 = vector.shape_cast %14 : vector<10x96xf32> to vector<2x5x96xf32>
    %16 = vector.shape_cast %7 : vector<2x96xf32> to vector<2x1x96xf32>
    %17 = vector.broadcast %16 : vector<2x1x96xf32> to vector<2x5x96xf32>
    %18 = arith.addf %15, %17 : vector<2x5x96xf32>
    %c0_12 = arith.constant 0 : index
    %c0_13 = arith.constant 0 : index
    %19 = vector.load %arg6[%c0_12, %c0_13] : memref<1x96xf32, #tpu.memory_space<vmem>>, vector<1x96xf32>
    %c0_14 = arith.constant 0 : index
    %c0_15 = arith.constant 0 : index
    %20 = vector.load %arg7[%c0_14, %c0_15] : memref<1x96xf32, #tpu.memory_space<vmem>>, vector<1x96xf32>
    %21 = vector.extract_strided_slice %18 {offsets = [0, 0, 0], sizes = [2, 5, 32], strides = [1, 1, 1]} : vector<2x5x96xf32> to vector<2x5x32xf32>
    %22 = vector.extract_strided_slice %19 {offsets = [0, 0], sizes = [1, 32], strides = [1, 1]} : vector<1x96xf32> to vector<1x32xf32>
    %23 = vector.extract_strided_slice %20 {offsets = [0, 0], sizes = [1, 32], strides = [1, 1]} : vector<1x96xf32> to vector<1x32xf32>
    %cst_16 = arith.constant dense<0.000000e+00> : vector<2x5xf32>
    %24 = vector.multi_reduction <add>, %21, %cst_16 [2] : vector<2x5x32xf32> to vector<2x5xf32>
    %25 = vector.shape_cast %24 : vector<2x5xf32> to vector<2x5x1xf32>
    %cst_17 = arith.constant 3.200000e+01 : f32
    %26 = vector.broadcast %cst_17 : f32 to vector<2x5x1xf32>
    %27 = arith.divf %25, %26 : vector<2x5x1xf32>
    %28 = vector.broadcast %27 : vector<2x5x1xf32> to vector<2x5x32xf32>
    %29 = arith.subf %21, %28 : vector<2x5x32xf32>
    %30 = arith.mulf %29, %29 : vector<2x5x32xf32>
    %cst_18 = arith.constant dense<0.000000e+00> : vector<2x5xf32>
    %31 = vector.multi_reduction <add>, %30, %cst_18 [2] : vector<2x5x32xf32> to vector<2x5xf32>
    %32 = vector.shape_cast %31 : vector<2x5xf32> to vector<2x5x1xf32>
    %cst_19 = arith.constant 3.200000e+01 : f32
    %33 = vector.broadcast %cst_19 : f32 to vector<2x5x1xf32>
    %34 = arith.divf %32, %33 : vector<2x5x1xf32>
    %35 = vector.broadcast %27 : vector<2x5x1xf32> to vector<2x5x32xf32>
    %36 = arith.subf %21, %35 : vector<2x5x32xf32>
    %cst_20 = arith.constant 9.99999974E-6 : f32
    %37 = vector.broadcast %cst_20 : f32 to vector<2x5x1xf32>
    %38 = arith.addf %34, %37 : vector<2x5x1xf32>
    %39 = math.rsqrt %38 : vector<2x5x1xf32>
    %40 = vector.broadcast %39 : vector<2x5x1xf32> to vector<2x5x32xf32>
    %41 = arith.mulf %36, %40 : vector<2x5x32xf32>
    %42 = vector.shape_cast %22 : vector<1x32xf32> to vector<1x1x32xf32>
    %43 = vector.broadcast %42 : vector<1x1x32xf32> to vector<2x5x32xf32>
    %44 = arith.mulf %41, %43 : vector<2x5x32xf32>
    %45 = vector.shape_cast %23 : vector<1x32xf32> to vector<1x1x32xf32>
    %46 = vector.broadcast %45 : vector<1x1x32xf32> to vector<2x5x32xf32>
    %47 = arith.addf %44, %46 : vector<2x5x32xf32>
    %48 = arith.negf %47 : vector<2x5x32xf32>
    %49 = math.exp %48 : vector<2x5x32xf32>
    %cst_21 = arith.constant 1.000000e+00 : f32
    %50 = vector.broadcast %cst_21 : f32 to vector<2x5x32xf32>
    %51 = arith.addf %50, %49 : vector<2x5x32xf32>
    %52 = arith.divf %50, %51 : vector<2x5x32xf32>
    %53 = vector.extract_strided_slice %18 {offsets = [0, 0, 32], sizes = [2, 5, 32], strides = [1, 1, 1]} : vector<2x5x96xf32> to vector<2x5x32xf32>
    %54 = vector.extract_strided_slice %19 {offsets = [0, 32], sizes = [1, 32], strides = [1, 1]} : vector<1x96xf32> to vector<1x32xf32>
    %55 = vector.extract_strided_slice %20 {offsets = [0, 32], sizes = [1, 32], strides = [1, 1]} : vector<1x96xf32> to vector<1x32xf32>
    %cst_22 = arith.constant dense<0.000000e+00> : vector<2x5xf32>
    %56 = vector.multi_reduction <add>, %53, %cst_22 [2] : vector<2x5x32xf32> to vector<2x5xf32>
    %57 = vector.shape_cast %56 : vector<2x5xf32> to vector<2x5x1xf32>
    %cst_23 = arith.constant 3.200000e+01 : f32
    %58 = vector.broadcast %cst_23 : f32 to vector<2x5x1xf32>
    %59 = arith.divf %57, %58 : vector<2x5x1xf32>
    %60 = vector.broadcast %59 : vector<2x5x1xf32> to vector<2x5x32xf32>
    %61 = arith.subf %53, %60 : vector<2x5x32xf32>
    %62 = arith.mulf %61, %61 : vector<2x5x32xf32>
    %cst_24 = arith.constant dense<0.000000e+00> : vector<2x5xf32>
    %63 = vector.multi_reduction <add>, %62, %cst_24 [2] : vector<2x5x32xf32> to vector<2x5xf32>
    %64 = vector.shape_cast %63 : vector<2x5xf32> to vector<2x5x1xf32>
    %cst_25 = arith.constant 3.200000e+01 : f32
    %65 = vector.broadcast %cst_25 : f32 to vector<2x5x1xf32>
    %66 = arith.divf %64, %65 : vector<2x5x1xf32>
    %67 = vector.broadcast %59 : vector<2x5x1xf32> to vector<2x5x32xf32>
    %68 = arith.subf %53, %67 : vector<2x5x32xf32>
    %cst_26 = arith.constant 9.99999974E-6 : f32
    %69 = vector.broadcast %cst_26 : f32 to vector<2x5x1xf32>
    %70 = arith.addf %66, %69 : vector<2x5x1xf32>
    %71 = math.rsqrt %70 : vector<2x5x1xf32>
    %72 = vector.broadcast %71 : vector<2x5x1xf32> to vector<2x5x32xf32>
    %73 = arith.mulf %68, %72 : vector<2x5x32xf32>
    %74 = vector.shape_cast %54 : vector<1x32xf32> to vector<1x1x32xf32>
    %75 = vector.broadcast %74 : vector<1x1x32xf32> to vector<2x5x32xf32>
    %76 = arith.mulf %73, %75 : vector<2x5x32xf32>
    %77 = vector.shape_cast %55 : vector<1x32xf32> to vector<1x1x32xf32>
    %78 = vector.broadcast %77 : vector<1x1x32xf32> to vector<2x5x32xf32>
    %79 = arith.addf %76, %78 : vector<2x5x32xf32>
    %80 = arith.negf %79 : vector<2x5x32xf32>
    %81 = math.exp %80 : vector<2x5x32xf32>
    %cst_27 = arith.constant 1.000000e+00 : f32
    %82 = vector.broadcast %cst_27 : f32 to vector<2x5x32xf32>
    %83 = arith.addf %82, %81 : vector<2x5x32xf32>
    %84 = arith.divf %82, %83 : vector<2x5x32xf32>
    %85 = vector.extract_strided_slice %18 {offsets = [0, 0, 64], sizes = [2, 5, 32], strides = [1, 1, 1]} : vector<2x5x96xf32> to vector<2x5x32xf32>
    %86 = vector.extract_strided_slice %19 {offsets = [0, 64], sizes = [1, 32], strides = [1, 1]} : vector<1x96xf32> to vector<1x32xf32>
    %87 = vector.extract_strided_slice %20 {offsets = [0, 64], sizes = [1, 32], strides = [1, 1]} : vector<1x96xf32> to vector<1x32xf32>
    %cst_28 = arith.constant dense<0.000000e+00> : vector<2x5xf32>
    %88 = vector.multi_reduction <add>, %85, %cst_28 [2] : vector<2x5x32xf32> to vector<2x5xf32>
    %89 = vector.shape_cast %88 : vector<2x5xf32> to vector<2x5x1xf32>
    %cst_29 = arith.constant 3.200000e+01 : f32
    %90 = vector.broadcast %cst_29 : f32 to vector<2x5x1xf32>
    %91 = arith.divf %89, %90 : vector<2x5x1xf32>
    %92 = vector.broadcast %91 : vector<2x5x1xf32> to vector<2x5x32xf32>
    %93 = arith.subf %85, %92 : vector<2x5x32xf32>
    %94 = arith.mulf %93, %93 : vector<2x5x32xf32>
    %cst_30 = arith.constant dense<0.000000e+00> : vector<2x5xf32>
    %95 = vector.multi_reduction <add>, %94, %cst_30 [2] : vector<2x5x32xf32> to vector<2x5xf32>
    %96 = vector.shape_cast %95 : vector<2x5xf32> to vector<2x5x1xf32>
    %cst_31 = arith.constant 3.200000e+01 : f32
    %97 = vector.broadcast %cst_31 : f32 to vector<2x5x1xf32>
    %98 = arith.divf %96, %97 : vector<2x5x1xf32>
    %99 = vector.broadcast %91 : vector<2x5x1xf32> to vector<2x5x32xf32>
    %100 = arith.subf %85, %99 : vector<2x5x32xf32>
    %cst_32 = arith.constant 9.99999974E-6 : f32
    %101 = vector.broadcast %cst_32 : f32 to vector<2x5x1xf32>
    %102 = arith.addf %98, %101 : vector<2x5x1xf32>
    %103 = math.rsqrt %102 : vector<2x5x1xf32>
    %104 = vector.broadcast %103 : vector<2x5x1xf32> to vector<2x5x32xf32>
    %105 = arith.mulf %100, %104 : vector<2x5x32xf32>
    %106 = vector.shape_cast %86 : vector<1x32xf32> to vector<1x1x32xf32>
    %107 = vector.broadcast %106 : vector<1x1x32xf32> to vector<2x5x32xf32>
    %108 = arith.mulf %105, %107 : vector<2x5x32xf32>
    %109 = vector.shape_cast %87 : vector<1x32xf32> to vector<1x1x32xf32>
    %110 = vector.broadcast %109 : vector<1x1x32xf32> to vector<2x5x32xf32>
    %111 = arith.addf %108, %110 : vector<2x5x32xf32>
    %112 = math.tanh %111 : vector<2x5x32xf32>
    %113 = arith.mulf %84, %1 : vector<2x5x32xf32>
    %114 = arith.mulf %52, %112 : vector<2x5x32xf32>
    %115 = arith.addf %113, %114 : vector<2x5x32xf32>
    %cst_33 = arith.constant 0.949999988 : f32
    %116 = vector.broadcast %cst_33 : f32 to vector<2x5x32xf32>
    %117 = arith.mulf %115, %116 : vector<2x5x32xf32>
    %c0_34 = arith.constant 0 : index
    %c0_35 = arith.constant 0 : index
    %c0_36 = arith.constant 0 : index
    %118 = vector.load %arg18[%c0_34, %c0_35, %c0_36] : memref<2x5x32xf32, #tpu.memory_space<vmem>>, vector<2x5x32xf32>
    tpu.vector_store %arg18[%c0_34, %c0_35, %c0_36], %117 {strides = array<i32>} : memref<2x5x32xf32, #tpu.memory_space<vmem>>, vector<2x5x32xf32>,
    %119 = vector.shape_cast %117 : vector<2x5x32xf32> to vector<10x32xf32>
    %c0_37 = arith.constant 0 : index
    %c0_38 = arith.constant 0 : index
    %120 = vector.load %arg8[%c0_37, %c0_38] : memref<32x64xf32, #tpu.memory_space<vmem>>, vector<32x64xf32>
    %cst_39 = arith.constant dense<0.000000e+00> : vector<10x64xf32>
    %121 = tpu.matmul %119, %120, %cst_39 {dimension_numbers = #tpu.dot_dimension_numbers<[1], [0], [0], [1], [0, 0, 1, 1], [], []>} : vector<10x32xf32>, vector<32x64xf32>, vector<10x64xf32> -> vector<10x64xf32>
    %c0_40 = arith.constant 0 : index
    %c0_41 = arith.constant 0 : index
    %122 = vector.load %arg9[%c0_40, %c0_41] : memref<1x64xf32, #tpu.memory_space<vmem>>, vector<1x64xf32>
    %123 = vector.broadcast %122 : vector<1x64xf32> to vector<10x64xf32>
    %124 = arith.addf %121, %123 : vector<10x64xf32>
    %125 = vector.extract_strided_slice %124 {offsets = [0, 0], sizes = [10, 32], strides = [1, 1]} : vector<10x64xf32> to vector<10x32xf32>
    %126 = vector.shape_cast %125 : vector<10x32xf32> to vector<2x5x32xf32>
    %127 = vector.extract_strided_slice %124 {offsets = [0, 32], sizes = [10, 32], strides = [1, 1]} : vector<10x64xf32> to vector<10x32xf32>
    %128 = vector.shape_cast %127 : vector<10x32xf32> to vector<2x5x32xf32>
    %129 = vector.shape_cast %8 : vector<2x32xf32> to vector<2x1x32xf32>
    %130 = vector.broadcast %129 : vector<2x1x32xf32> to vector<2x5x32xf32>
    %131 = arith.mulf %130, %126 : vector<2x5x32xf32>
    %132 = vector.shape_cast %131 : vector<2x5x32xf32> to vector<10x32xf32>
    %c0_42 = arith.constant 0 : index
    %c0_43 = arith.constant 0 : index
    %133 = vector.load %arg10[%c0_42, %c0_43] : memref<32x4xf32, #tpu.memory_space<vmem>>, vector<32x4xf32>
    %cst_44 = arith.constant dense<0.000000e+00> : vector<10x4xf32>
    %134 = tpu.matmul %132, %133, %cst_44 {dimension_numbers = #tpu.dot_dimension_numbers<[1], [0], [0], [1], [0, 0, 1, 1], [], []>} : vector<10x32xf32>, vector<32x4xf32>, vector<10x4xf32> -> vector<10x4xf32>
    %135 = vector.shape_cast %134 : vector<10x4xf32> to vector<2x5x4xf32>
    %cst_45 = arith.constant dense<0xFF800000> : vector<2x4xf32>
    %136 = vector.multi_reduction <maximumf>, %135, %cst_45 [1] : vector<2x5x4xf32> to vector<2x4xf32>
    %137 = vector.shape_cast %136 : vector<2x4xf32> to vector<2x1x4xf32>
    %138 = vector.broadcast %137 : vector<2x1x4xf32> to vector<2x5x4xf32>
    %139 = arith.subf %135, %138 : vector<2x5x4xf32>
    %140 = math.exp %139 : vector<2x5x4xf32>
    %cst_46 = arith.constant dense<0.000000e+00> : vector<2x4xf32>
    %141 = vector.multi_reduction <add>, %140, %cst_46 [1] : vector<2x5x4xf32> to vector<2x4xf32>
    %142 = vector.shape_cast %141 : vector<2x4xf32> to vector<2x1x4xf32>
    %143 = vector.broadcast %142 : vector<2x1x4xf32> to vector<2x5x4xf32>
    %144 = arith.divf %140, %143 : vector<2x5x4xf32>
    %145 = vector.shape_cast %144 : vector<2x5x4xf32> to vector<10x4xf32>
    %c0_47 = arith.constant 0 : index
    %c0_48 = arith.constant 0 : index
    %146 = vector.load %arg11[%c0_47, %c0_48] : memref<4x32xf32, #tpu.memory_space<vmem>>, vector<4x32xf32>
    %cst_49 = arith.constant dense<0.000000e+00> : vector<10x32xf32>
    %147 = tpu.matmul %145, %146, %cst_49 {dimension_numbers = #tpu.dot_dimension_numbers<[1], [0], [0], [1], [0, 0, 1, 1], [], []>} : vector<10x4xf32>, vector<4x32xf32>, vector<10x32xf32> -> vector<10x32xf32>
    %148 = vector.shape_cast %147 : vector<10x32xf32> to vector<2x5x32xf32>
    %149 = arith.mulf %148, %128 : vector<2x5x32xf32>
    %cst_50 = arith.constant dense<0.000000e+00> : vector<2x32xf32>
    %150 = vector.multi_reduction <add>, %149, %cst_50 [1] : vector<2x5x32xf32> to vector<2x32xf32>
    %c0_51 = arith.constant 0 : index
    %c0_52 = arith.constant 0 : index
    %151 = vector.load %arg13[%c0_51, %c0_52] : memref<8x32xf32, #tpu.memory_space<vmem>>, vector<8x32xf32>
    %cst_53 = arith.constant dense<0.000000e+00> : vector<2x32xf32>
    %152 = tpu.matmul %11, %151, %cst_53 {dimension_numbers = #tpu.dot_dimension_numbers<[1], [0], [0], [1], [0, 0, 1, 1], [], []>} : vector<2x8xf32>, vector<8x32xf32>, vector<2x32xf32> -> vector<2x32xf32>
    %c0_54 = arith.constant 0 : index
    %c0_55 = arith.constant 0 : index
    %153 = vector.load %arg14[%c0_54, %c0_55] : memref<1x32xf32, #tpu.memory_space<vmem>>, vector<1x32xf32>
    %154 = vector.broadcast %153 : vector<1x32xf32> to vector<2x32xf32>
    %155 = arith.addf %152, %154 : vector<2x32xf32>
    %c0_56 = arith.constant 0 : index
    %c0_57 = arith.constant 0 : index
    %156 = vector.load %arg12[%c0_56, %c0_57] : memref<1x32xf32, #tpu.memory_space<vmem>>, vector<1x32xf32>
    %157 = vector.broadcast %156 : vector<1x32xf32> to vector<2x32xf32>
    %158 = arith.addf %150, %157 : vector<2x32xf32>
    %cst_58 = arith.constant 1.000000e+00 : f32
    %159 = vector.broadcast %cst_58 : f32 to vector<2x32xf32>
    %160 = arith.addf %159, %155 : vector<2x32xf32>
    %161 = arith.mulf %158, %160 : vector<2x32xf32>
    %c0_59 = arith.constant 0 : index
    %c0_60 = arith.constant 0 : index
    %162 = vector.load %arg15[%c0_59, %c0_60] : memref<32x32xf32, #tpu.memory_space<vmem>>, vector<32x32xf32>
    %cst_61 = arith.constant dense<0.000000e+00> : vector<2x32xf32>
    %163 = tpu.matmul %161, %162, %cst_61 {dimension_numbers = #tpu.dot_dimension_numbers<[1], [0], [0], [1], [0, 0, 1, 1], [], []>} : vector<2x32xf32>, vector<32x32xf32>, vector<2x32xf32> -> vector<2x32xf32>
    %c0_62 = arith.constant 0 : index
    %c0_63 = arith.constant 0 : index
    %164 = vector.load %arg16[%c0_62, %c0_63] : memref<1x32xf32, #tpu.memory_space<vmem>>, vector<1x32xf32>
    %165 = vector.broadcast %164 : vector<1x32xf32> to vector<2x32xf32>
    %166 = arith.addf %163, %165 : vector<2x32xf32>
    %167 = arith.addf %0, %166 : vector<2x32xf32>
    %c0_64 = arith.constant 0 : index
    %c0_65 = arith.constant 0 : index
    %168 = vector.load %arg17[%c0_64, %c0_65] : memref<2x32xf32, #tpu.memory_space<vmem>>, vector<2x32xf32>
    tpu.vector_store %arg17[%c0_64, %c0_65], %167 {strides = array<i32>} : memref<2x32xf32, #tpu.memory_space<vmem>>, vector<2x32xf32>,
    return
  }
  func.func @transform_0(%arg0: i32) -> (i32, i32) {
    %c0_i32 = arith.constant 0 : i32
    %c0_i32_0 = arith.constant 0 : i32
    return %arg0, %c0_i32 : i32, i32
  }
  func.func @transform_1(%arg0: i32) -> (i32, i32, i32) {
    %c0_i32 = arith.constant 0 : i32
    %c0_i32_0 = arith.constant 0 : i32
    %c0_i32_1 = arith.constant 0 : i32
    return %arg0, %c0_i32, %c0_i32_0 : i32, i32, i32
  }
  func.func @transform_2(%arg0: i32) -> (i32, i32) {
    %c0_i32 = arith.constant 0 : i32
    %c0_i32_0 = arith.constant 0 : i32
    %c0_i32_1 = arith.constant 0 : i32
    return %c0_i32, %c0_i32_0 : i32, i32
  }
  func.func @transform_3(%arg0: i32) -> (i32, i32) {
    %c0_i32 = arith.constant 0 : i32
    %c0_i32_0 = arith.constant 0 : i32
    %c0_i32_1 = arith.constant 0 : i32
    return %c0_i32, %c0_i32_0 : i32, i32
  }
  func.func @transform_4(%arg0: i32) -> (i32, i32) {
    %c0_i32 = arith.constant 0 : i32
    %c0_i32_0 = arith.constant 0 : i32
    %c0_i32_1 = arith.constant 0 : i32
    return %c0_i32, %c0_i32_0 : i32, i32
  }
  func.func @transform_5(%arg0: i32) -> (i32, i32) {
    %c0_i32 = arith.constant 0 : i32
    %c0_i32_0 = arith.constant 0 : i32
    %c0_i32_1 = arith.constant 0 : i32
    return %c0_i32, %c0_i32_0 : i32, i32
  }
  func.func @transform_6(%arg0: i32) -> (i32, i32) {
    %c0_i32 = arith.constant 0 : i32
    %c0_i32_0 = arith.constant 0 : i32
    %c0_i32_1 = arith.constant 0 : i32
    return %c0_i32, %c0_i32_0 : i32, i32
  }
  func.func @transform_7(%arg0: i32) -> (i32, i32) {
    %c0_i32 = arith.constant 0 : i32
    %c0_i32_0 = arith.constant 0 : i32
    %c0_i32_1 = arith.constant 0 : i32
    return %c0_i32, %c0_i32_0 : i32, i32
  }
  func.func @transform_8(%arg0: i32) -> (i32, i32) {
    %c0_i32 = arith.constant 0 : i32
    %c0_i32_0 = arith.constant 0 : i32
    %c0_i32_1 = arith.constant 0 : i32
    return %c0_i32, %c0_i32_0 : i32, i32
  }
  func.func @transform_9(%arg0: i32) -> (i32, i32) {
    %c0_i32 = arith.constant 0 : i32
    %c0_i32_0 = arith.constant 0 : i32
    %c0_i32_1 = arith.constant 0 : i32
    return %c0_i32, %c0_i32_0 : i32, i32
  }
  func.func @transform_10(%arg0: i32) -> (i32, i32) {
    %c0_i32 = arith.constant 0 : i32
    %c0_i32_0 = arith.constant 0 : i32
    %c0_i32_1 = arith.constant 0 : i32
    return %c0_i32, %c0_i32_0 : i32, i32
  }
  func.func @transform_11(%arg0: i32) -> (i32, i32) {
    %c0_i32 = arith.constant 0 : i32
    %c0_i32_0 = arith.constant 0 : i32
    %c0_i32_1 = arith.constant 0 : i32
    return %c0_i32, %c0_i32_0 : i32, i32
  }
  func.func @transform_12(%arg0: i32) -> (i32, i32) {
    %c0_i32 = arith.constant 0 : i32
    %c0_i32_0 = arith.constant 0 : i32
    %c0_i32_1 = arith.constant 0 : i32
    return %c0_i32, %c0_i32_0 : i32, i32
  }
  func.func @transform_13(%arg0: i32) -> (i32, i32) {
    %c0_i32 = arith.constant 0 : i32
    %c0_i32_0 = arith.constant 0 : i32
    %c0_i32_1 = arith.constant 0 : i32
    return %c0_i32, %c0_i32_0 : i32, i32
  }
  func.func @transform_14(%arg0: i32) -> (i32, i32) {
    %c0_i32 = arith.constant 0 : i32
    %c0_i32_0 = arith.constant 0 : i32
    %c0_i32_1 = arith.constant 0 : i32
    return %c0_i32, %c0_i32_0 : i32, i32
  }
  func.func @transform_15(%arg0: i32) -> (i32, i32) {
    %c0_i32 = arith.constant 0 : i32
    %c0_i32_0 = arith.constant 0 : i32
    %c0_i32_1 = arith.constant 0 : i32
    return %c0_i32, %c0_i32_0 : i32, i32
  }
  func.func @transform_16(%arg0: i32) -> (i32, i32) {
    %c0_i32 = arith.constant 0 : i32
    %c0_i32_0 = arith.constant 0 : i32
    return %arg0, %c0_i32 : i32, i32
  }
  func.func @transform_17(%arg0: i32) -> (i32, i32, i32) {
    %c0_i32 = arith.constant 0 : i32
    %c0_i32_0 = arith.constant 0 : i32
    %c0_i32_1 = arith.constant 0 : i32
    return %arg0, %c0_i32, %c0_i32_0 : i32, i32, i32
  }
}

</mosaic_0001>

<llo_original>
// kernel: tpu_custom_call.1
$region0: #{tpu_custom_call.1}
  #allocation0 [shape = 'u32[]', space=smem, size = 0x4, offset = 0x4, fixed_abs, tag = 'smem constant byte address 0x4 - core index']
  #allocation1 [shape = 'u32[144,128]{1,0:T(1,128)}', space=vmem, size = 0x12000, scoped, tag = 'internal scratch']
  %s0 = inlined_call_operand.hbm [shape: f32[2,32], index: 0, kind: input, shape index: {}]
  %s1 = inlined_call_operand.vmem [shape: f32[2,5,32], index: 1, kind: input, shape index: {}]
  %s2 = inlined_call_operand.vmem [shape: f32[32,136], index: 2, kind: input, shape index: {}]
  %s3 = inlined_call_operand.hbm [shape: f32[1,136], index: 3, kind: input, shape index: {}]
  %s4 = inlined_call_operand.hbm [shape: f32[32,96], index: 4, kind: input, shape index: {}]
  %s5 = inlined_call_operand.hbm [shape: f32[1,96], index: 5, kind: input, shape index: {}]
  %s6 = inlined_call_operand.hbm [shape: f32[1,96], index: 6, kind: input, shape index: {}]
  %s7 = inlined_call_operand.hbm [shape: f32[32,64], index: 7, kind: input, shape index: {}]
  %s8 = inlined_call_operand.hbm [shape: f32[1,64], index: 8, kind: input, shape index: {}]
  %s9 = inlined_call_operand.vmem [shape: f32[32,4], index: 9, kind: input, shape index: {}]
  %s10 = inlined_call_operand.vmem [shape: f32[4,32], index: 10, kind: input, shape index: {}]
  %s11 = inlined_call_operand.vmem [shape: f32[1,32], index: 11, kind: input, shape index: {}]
  %s12 = inlined_call_operand.vmem [shape: f32[8,32], index: 12, kind: input, shape index: {}]
  %s13 = inlined_call_operand.vmem [shape: f32[1,32], index: 13, kind: input, shape index: {}]
  %s14 = inlined_call_operand.hbm [shape: f32[32,32], index: 14, kind: input, shape index: {}]
  %s15 = inlined_call_operand.vmem [shape: f32[1,32], index: 15, kind: input, shape index: {}]
  %s16 = inlined_call_operand.hbm [shape: f32[2,32], index: 16, kind: output, shape index: {0}]
  %s17 = inlined_call_operand.vmem [shape: f32[2,5,32], index: 17, kind: output, shape index: {1}]
  %18 = xla_tuple %s16, %s17
  %s19 = sld [smem:[#allocation0]]
  $region114: #{tpu_custom_call.1} parent=0
    _
  %s21 = ssub.s32 1, %s19
  %s22 = scalar_select 0, %s21, %s19
  $region1: #{tpu_custom_call.1} parent=0
    #allocation2 [shape = 'u8[1024]{0}', space=vmem, size = 0x400, scoped, tag = 'input window, operand 0, single buffered']
    #allocation3 [shape = 's32[1]{0}', space=sflag, size = 0x4, scoped, tag = 'scoped memory for tpu_custom_call.1']
    #allocation4 [shape = 's32[1]{0}', space=sflag, size = 0x4, scoped, tag = 'scoped memory for tpu_custom_call.1']
    #allocation5 [shape = 'u8[1024]{0}', space=vmem, size = 0x400, scoped, tag = 'input window, operand 3, single buffered']
    #allocation6 [shape = 's32[1]{0}', space=sflag, size = 0x4, scoped, tag = 'scoped memory for tpu_custom_call.1']
    #allocation7 [shape = 'u8[16384]{0}', space=vmem, size = 0x4000, scoped, tag = 'input window, operand 4, single buffered']
    #allocation8 [shape = 'u8[512]{0}', space=vmem, size = 0x400, scoped, tag = 'input window, operand 5, single buffered']
    #allocation9 [shape = 's32[1]{0}', space=sflag, size = 0x4, scoped, tag = 'scoped memory for tpu_custom_call.1']
    #allocation10 [shape = 'u8[512]{0}', space=vmem, size = 0x400, scoped, tag = 'input window, operand 6, single buffered']
    #allocation11 [shape = 'u8[16384]{0}', space=vmem, size = 0x4000, scoped, tag = 'input window, operand 7, single buffered']
    #allocation12 [shape = 's32[1]{0}', space=sflag, size = 0x4, scoped, tag = 'scoped memory for tpu_custom_call.1']
    #allocation13 [shape = 'u8[512]{0}', space=vmem, size = 0x400, scoped, tag = 'input window, operand 8, single buffered']
    #allocation14 [shape = 'u8[16384]{0}', space=vmem, size = 0x4000, scoped, tag = 'input window, operand 14, single buffered']
    #allocation15 [shape = 's32[1]{0}', space=sflag, size = 0x4, scoped, tag = 'scoped memory for tpu_custom_call.1']
    #allocation16 [shape = 'u8[1024]{0}', space=vmem, size = 0x400, scoped, tag = 'output window, operand 0, single buffered']
    %23 = vsyncpa [#allocation3], 0
    %24 = vsyncpa [#allocation6], 0
    %25 = vsyncpa [#allocation9], 0
    %26 = vsyncpa [#allocation12], 0
    %27 = vsyncpa [#allocation15], 0
    %28 = vsyncpa [#allocation4], 0
    // Predicated region
    $region2: #{tpu_custom_call.1} parent=1 // pred_check
      _
    $region3: #{tpu_custom_call.1} parent=1 // pred_check_branch
      %30 = sbr.rel (0) target = $region5
    $region4: #{tpu_custom_call.1} parent=1 // pred_region
      %s32 = ssub.s32 32, 32
      %33 = vsyncadd [#allocation3], %s32
      %s35 = sshll.u32 [#allocation2], 4
      %s36 = int_to_ptr.vmem [resolvable:$true] %s35
      %38 = dma.hbm_to_vmem [thread:$0]  %s0, 32, %s36, [#allocation3]
    $region5: #{tpu_custom_call.1} parent=1 // pred_fallthru
      _
    // Predicated region
    $region6: #{tpu_custom_call.1} parent=1 // pred_check
      _
    $region7: #{tpu_custom_call.1} parent=1 // pred_check_branch
      %40 = sbr.rel (0) target = $region9
    $region8: #{tpu_custom_call.1} parent=1 // pred_region
      _
    $region9: #{tpu_custom_call.1} parent=1 // pred_fallthru
      _
    // Predicated region
    $region10: #{tpu_custom_call.1} parent=1 // pred_check
      _
    $region11: #{tpu_custom_call.1} parent=1 // pred_check_branch
      %42 = sbr.rel (0) target = $region13
    $region12: #{tpu_custom_call.1} parent=1 // pred_region
      _
    $region13: #{tpu_custom_call.1} parent=1 // pred_fallthru
      _
    // Predicated region
    $region14: #{tpu_custom_call.1} parent=1 // pred_check
      _
    $region15: #{tpu_custom_call.1} parent=1 // pred_check_branch
      %44 = sbr.rel (0) target = $region17
    $region16: #{tpu_custom_call.1} parent=1 // pred_region
      %s46 = ssub.s32 32, 32
      %47 = vsyncadd [#allocation6], %s46
      %s49 = sshll.u32 [#allocation5], 4
      %s50 = int_to_ptr.vmem [resolvable:$true] %s49
      %52 = dma.hbm_to_vmem [thread:$0]  %s3, 32, %s50, [#allocation6]
    $region17: #{tpu_custom_call.1} parent=1 // pred_fallthru
      _
    // Predicated region
    $region18: #{tpu_custom_call.1} parent=1 // pred_check
      _
    $region19: #{tpu_custom_call.1} parent=1 // pred_check_branch
      %54 = sbr.rel (0) target = $region21
    $region20: #{tpu_custom_call.1} parent=1 // pred_region
      %s56 = ssub.s32 512, 512
      %57 = vsyncadd [#allocation6], %s56
      %s58 = sshll.u32 [#allocation7], 4
      %s59 = int_to_ptr.vmem [resolvable:$true] %s58
      %64 = dma.hbm_to_vmem [thread:$0]  %s4, 512, %s59, [#allocation6], 128, 128, 8
    $region21: #{tpu_custom_call.1} parent=1 // pred_fallthru
      _
    // Predicated region
    $region22: #{tpu_custom_call.1} parent=1 // pred_check
      _
    $region23: #{tpu_custom_call.1} parent=1 // pred_check_branch
      %66 = sbr.rel (0) target = $region25
    $region24: #{tpu_custom_call.1} parent=1 // pred_region
      %s68 = ssub.s32 16, 16
      %69 = vsyncadd [#allocation9], %s68
      %s71 = sshll.u32 [#allocation8], 4
      %s72 = int_to_ptr.vmem [resolvable:$true] %s71
      %74 = dma.hbm_to_vmem [thread:$0]  %s5, 16, %s72, [#allocation9]
    $region25: #{tpu_custom_call.1} parent=1 // pred_fallthru
      _
    // Predicated region
    $region26: #{tpu_custom_call.1} parent=1 // pred_check
      _
    $region27: #{tpu_custom_call.1} parent=1 // pred_check_branch
      %76 = sbr.rel (0) target = $region29
    $region28: #{tpu_custom_call.1} parent=1 // pred_region
      %s78 = ssub.s32 16, 16
      %79 = vsyncadd [#allocation9], %s78
      %s81 = sshll.u32 [#allocation10], 4
      %s82 = int_to_ptr.vmem [resolvable:$true] %s81
      %84 = dma.hbm_to_vmem [thread:$0]  %s6, 16, %s82, [#allocation9]
    $region29: #{tpu_custom_call.1} parent=1 // pred_fallthru
      _
    // Predicated region
    $region30: #{tpu_custom_call.1} parent=1 // pred_check
      _
    $region31: #{tpu_custom_call.1} parent=1 // pred_check_branch
      %86 = sbr.rel (0) target = $region33
    $region32: #{tpu_custom_call.1} parent=1 // pred_region
      %s88 = ssub.s32 512, 512
      %89 = vsyncadd [#allocation12], %s88
      %s90 = sshll.u32 [#allocation11], 4
      %s91 = int_to_ptr.vmem [resolvable:$true] %s90
      %96 = dma.hbm_to_vmem [thread:$0]  %s7, 512, %s91, [#allocation12], 128, 128, 8
    $region33: #{tpu_custom_call.1} parent=1 // pred_fallthru
      _
    // Predicated region
    $region34: #{tpu_custom_call.1} parent=1 // pred_check
      _
    $region35: #{tpu_custom_call.1} parent=1 // pred_check_branch
      %98 = sbr.rel (0) target = $region37
    $region36: #{tpu_custom_call.1} parent=1 // pred_region
      %s100 = ssub.s32 16, 16
      %101 = vsyncadd [#allocation12], %s100
      %s103 = sshll.u32 [#allocation13], 4
      %s104 = int_to_ptr.vmem [resolvable:$true] %s103
      %106 = dma.hbm_to_vmem [thread:$0]  %s8, 16, %s104, [#allocation12]
    $region37: #{tpu_custom_call.1} parent=1 // pred_fallthru
      _
    // Predicated region
    $region38: #{tpu_custom_call.1} parent=1 // pred_check
      _
    $region39: #{tpu_custom_call.1} parent=1 // pred_check_branch
      %108 = sbr.rel (0) target = $region41
    $region40: #{tpu_custom_call.1} parent=1 // pred_region
      _
    $region41: #{tpu_custom_call.1} parent=1 // pred_fallthru
      _
    // Predicated region
    $region42: #{tpu_custom_call.1} parent=1 // pred_check
      _
    $region43: #{tpu_custom_call.1} parent=1 // pred_check_branch
      %110 = sbr.rel (0) target = $region45
    $region44: #{tpu_custom_call.1} parent=1 // pred_region
      _
    $region45: #{tpu_custom_call.1} parent=1 // pred_fallthru
      _
    // Predicated region
    $region46: #{tpu_custom_call.1} parent=1 // pred_check
      _
    $region47: #{tpu_custom_call.1} parent=1 // pred_check_branch
      %112 = sbr.rel (0) target = $region49
    $region48: #{tpu_custom_call.1} parent=1 // pred_region
      _
    $region49: #{tpu_custom_call.1} parent=1 // pred_fallthru
      _
    // Predicated region
    $region50: #{tpu_custom_call.1} parent=1 // pred_check
      _
    $region51: #{tpu_custom_call.1} parent=1 // pred_check_branch
      %114 = sbr.rel (0) target = $region53
    $region52: #{tpu_custom_call.1} parent=1 // pred_region
      _
    $region53: #{tpu_custom_call.1} parent=1 // pred_fallthru
      _
    // Predicated region
    $region54: #{tpu_custom_call.1} parent=1 // pred_check
      _
    $region55: #{tpu_custom_call.1} parent=1 // pred_check_branch
      %116 = sbr.rel (0) target = $region57
    $region56: #{tpu_custom_call.1} parent=1 // pred_region
      _
    $region57: #{tpu_custom_call.1} parent=1 // pred_fallthru
      _
    // Predicated region
    $region58: #{tpu_custom_call.1} parent=1 // pred_check
      _
    $region59: #{tpu_custom_call.1} parent=1 // pred_check_branch
      %118 = sbr.rel (0) target = $region61
    $region60: #{tpu_custom_call.1} parent=1 // pred_region
      %s120 = ssub.s32 512, 512
      %121 = vsyncadd [#allocation15], %s120
      %s122 = sshll.u32 [#allocation14], 4
      %s123 = int_to_ptr.vmem [resolvable:$true] %s122
      %128 = dma.hbm_to_vmem [thread:$0]  %s14, 512, %s123, [#allocation15], 128, 128, 8
    $region61: #{tpu_custom_call.1} parent=1 // pred_fallthru
      _
    // Predicated region
    $region62: #{tpu_custom_call.1} parent=1 // pred_check
      _
    $region63: #{tpu_custom_call.1} parent=1 // pred_check_branch
      %130 = sbr.rel (0) target = $region65
    $region64: #{tpu_custom_call.1} parent=1 // pred_region
      _
    $region65: #{tpu_custom_call.1} parent=1 // pred_fallthru
      _
    // Predicated region
    $region66: #{tpu_custom_call.1} parent=1 // pred_check
      _
    $region67: #{tpu_custom_call.1} parent=1 // pred_check_branch
      %132 = sbr.rel (0) target = $region69
    $region68: #{tpu_custom_call.1} parent=1 // pred_region
      %133 = dma.done [#allocation3], 32
    $region69: #{tpu_custom_call.1} parent=1 // pred_fallthru
      _
    // Predicated region
    $region70: #{tpu_custom_call.1} parent=1 // pred_check
      _
    $region71: #{tpu_custom_call.1} parent=1 // pred_check_branch
      %135 = sbr.rel (0) target = $region73
    $region72: #{tpu_custom_call.1} parent=1 // pred_region
      %136 = dma.done [#allocation6], 32
    $region73: #{tpu_custom_call.1} parent=1 // pred_fallthru
      _
    // Predicated region
    $region74: #{tpu_custom_call.1} parent=1 // pred_check
      _
    $region75: #{tpu_custom_call.1} parent=1 // pred_check_branch
      %138 = sbr.rel (0) target = $region77
    $region76: #{tpu_custom_call.1} parent=1 // pred_region
      %139 = dma.done [#allocation6], 512
    $region77: #{tpu_custom_call.1} parent=1 // pred_fallthru
      _
    // Predicated region
    $region78: #{tpu_custom_call.1} parent=1 // pred_check
      _
    $region79: #{tpu_custom_call.1} parent=1 // pred_check_branch
      %141 = sbr.rel (0) target = $region81
    $region80: #{tpu_custom_call.1} parent=1 // pred_region
      %142 = dma.done [#allocation9], 16
    $region81: #{tpu_custom_call.1} parent=1 // pred_fallthru
      _
    // Predicated region
    $region82: #{tpu_custom_call.1} parent=1 // pred_check
      _
    $region83: #{tpu_custom_call.1} parent=1 // pred_check_branch
      %144 = sbr.rel (0) target = $region85
    $region84: #{tpu_custom_call.1} parent=1 // pred_region
      %145 = dma.done [#allocation9], 16
    $region85: #{tpu_custom_call.1} parent=1 // pred_fallthru
      _
    // Predicated region
    $region86: #{tpu_custom_call.1} parent=1 // pred_check
      _
    $region87: #{tpu_custom_call.1} parent=1 // pred_check_branch
      %147 = sbr.rel (0) target = $region89
    $region88: #{tpu_custom_call.1} parent=1 // pred_region
      %148 = dma.done [#allocation12], 512
    $region89: #{tpu_custom_call.1} parent=1 // pred_fallthru
      _
    // Predicated region
    $region90: #{tpu_custom_call.1} parent=1 // pred_check
      _
    $region91: #{tpu_custom_call.1} parent=1 // pred_check_branch
      %150 = sbr.rel (0) target = $region93
    $region92: #{tpu_custom_call.1} parent=1 // pred_region
      %151 = dma.done [#allocation12], 16
    $region93: #{tpu_custom_call.1} parent=1 // pred_fallthru
      _
    // Predicated region
    $region94: #{tpu_custom_call.1} parent=1 // pred_check
      _
    $region95: #{tpu_custom_call.1} parent=1 // pred_check_branch
      %153 = sbr.rel (0) target = $region97
    $region96: #{tpu_custom_call.1} parent=1 // pred_region
      %154 = dma.done [#allocation15], 512
    $region97: #{tpu_custom_call.1} parent=1 // pred_fallthru
      _
    %v155 = vld [vmem:[#allocation2] sm:$0x3]
    %v156 = vld [vmem:[%s1] sm:$0x1f]
    %v157 = vld [vmem:[%s1 + $0x8] sm:$0x1f]
    %v158 = vld [vmem:[%s2] sm:$0xff]
    %v159 = vld [vmem:[%s2 + $0x8] sm:$0xff]
    %v160 = vld [vmem:[%s2 + $0x10] sm:$0xff]
    %v161 = vld [vmem:[%s2 + $0x18] sm:$0xff]
    %v162 = vld [vmem:[%s2 + $0x20] sm:$0xff]
    %v163 = vld [vmem:[%s2 + $0x28] sm:$0xff]
    %v164 = vld [vmem:[%s2 + $0x30] sm:$0xff]
    %v165 = vld [vmem:[%s2 + $0x38] sm:$0xff]
    %v166 = vld [vmem:[#allocation5] sm:$0x3]
    %v168 = vlaneseq
    %v169 = vshrl.u32 %v168, 7
    %v170 = vsub.s32 0, %v169
    %v171 = vrot.slane %v166, %v170
    %v172 = vlaneseq
    %v173 = vshrl.u32 %v172, 7
    %v174 = vsub.s32 1, %v173
    %v175 = vrot.slane %v166, %v174
    %vm178 = vcmask 261120
    %v180 = vsel %vm178, %v155, 0
    %182 = vmatprep.subr.mxu0 0.0
    %183 = vmatpush1.msra.mxu0 0.0
    %184 = vmatprep.subr.mxu0 0.0
    %185 = vmatpush1.msra.mxu0 0.0
    %186 = vmatprep.subr.mxu0 0.0
    %187 = vmatpush1.msra.mxu0 0.0
    %188 = vmatprep.subr.mxu0 0.0
    %189 = vmatpush1.msra.mxu0 0.0
    %190 = vmatprep.subr.mxu0 0.0
    %191 = vmatpush1.msra.mxu0 0.0
    %192 = vmatprep.subr.mxu0 0.0
    %193 = vmatpush1.msra.mxu0 0.0
    %194 = vmatprep.subr.mxu0 0.0
    %195 = vmatpush1.msra.mxu0 0.0
    %196 = vmatprep.subr.mxu0 0.0
    %197 = vmatpush1.msra.mxu0 0.0
    %198 = vmatprep.subr.mxu0 0.0
    %199 = vmatpush1.msra.mxu0 0.0
    %200 = vmatprep.subr.mxu0 0.0
    %201 = vmatpush1.msra.mxu0 0.0
    %202 = vmatprep.subr.mxu0 0.0
    %203 = vmatpush1.msra.mxu0 0.0
    %204 = vmatprep.subr.mxu0 0.0
    %205 = vmatpush1.msra.mxu0 0.0
    %206 = vmatprep.subr.mxu0 %v165
    %207 = vmatpush1.msra.mxu0 %v164
    %208 = vmatprep.subr.mxu0 %v163
    %209 = vmatpush1.msra.mxu0 %v162
    %210 = vmatprep.subr.mxu0 %v161
    %211 = vmatpush1.msra.mxu0 %v160
    %212 = vmatprep.subr.mxu0 %v159
    %213 = vmatpush1.msra.mxu0 %v158
    %214 = vmatprep.subr.mxu0 0.0
    %215 = vmatpush2.msra.mxu0 0.0
    %216 = vmatprep.subr.mxu0 0.0
    %217 = vmatpush2.msra.mxu0 0.0
    %218 = vmatprep.subr.mxu0 0.0
    %219 = vmatpush2.msra.mxu0 0.0
    %220 = vmatprep.subr.mxu0 0.0
    %221 = vmatpush2.msra.mxu0 0.0
    %222 = vmatprep.subr.mxu0 0.0
    %223 = vmatpush2.msra.mxu0 0.0
    %224 = vmatprep.subr.mxu0 0.0
    %225 = vmatpush2.msra.mxu0 0.0
    %226 = vmatprep.subr.mxu0 0.0
    %227 = vmatpush2.msra.mxu0 0.0
    %228 = vmatprep.subr.mxu0 0.0
    %229 = vmatpush2.msra.mxu0 0.0
    %230 = vmatprep.subr.mxu0 0.0
    %231 = vmatpush2.msra.mxu0 0.0
    %232 = vmatprep.subr.mxu0 0.0
    %233 = vmatpush2.msra.mxu0 0.0
    %234 = vmatprep.subr.mxu0 0.0
    %235 = vmatpush2.msra.mxu0 0.0
    %236 = vmatprep.subr.mxu0 0.0
    %237 = vmatpush2.msra.mxu0 0.0
    %238 = vmatprep.subr.mxu0 0.0
    %239 = vmatpush2.msra.mxu0 0.0
    %240 = vmatprep.subr.mxu0 0.0
    %241 = vmatpush2.msra.mxu0 0.0
    %242 = vmatprep.subr.mxu0 0.0
    %243 = vmatpush2.msra.mxu0 0.0
    %244 = vmatprep.subr.mxu0 0.0
    %245 = vmatpush2.msra.mxu0 0.0
    %246 = vmatprep.mubr.f32.mxu0 0.0
    %247 = vmatmul.mubr.f32.gmra.mxu0 %v180
    %v248 = vpop.f32.mrf.mxu0
    %v249 = vadd.f32 %v171, %v248
    %v250 = vpop.f32.mrf.mxu0
    %v251 = vadd.f32 %v175, %v250
    %252 = vdwg.mxu0
    %v253 = vmax.f32 %v251, 0.0
    %v256 = vcombine.high %v156, %v156
    %v258 = vunpack.c.l.s4 1966171168
    %v259 = vunpack.c.0.s8 %v258
    %v260 = vlaneseq
    %v261 = vshrl.u32 %v260, 7
    %v262 = vsub.s32 %v259, %v261
    %v263 = vrot.slane %v156, %v262
    %v265 = vunpack.c.l.s4 1966171168
    %v266 = vunpack.c.0.s8 %v265
    %v267 = vlaneseq
    %v268 = vshrl.u32 %v267, 7
    %v269 = vsub.s32 %v266, %v268
    %v270 = vrot.slane %v256, %v269
    %v271 = vcombine.high %v263, %v263
    %v273 = vunpack.c.l.s4 1966171168
    %v274 = vunpack.c.0.s8 %v273
    %v275 = vlaneseq
    %v276 = vshrl.u32 %v275, 7
    %v277 = vsub.s32 %v274, %v276
    %v278 = vrot.slane %v263, %v277
    %v280 = vunpack.c.l.s4 1966171168
    %v281 = vunpack.c.0.s8 %v280
    %v282 = vlaneseq
    %v283 = vshrl.u32 %v282, 7
    %v284 = vsub.s32 %v281, %v283
    %v285 = vrot.slane %v270, %v284
    %v287 = vunpack.c.l.s4 1966171168
    %v288 = vunpack.c.0.s8 %v287
    %v289 = vlaneseq
    %v290 = vshrl.u32 %v289, 7
    %v291 = vsub.s32 %v288, %v290
    %v292 = vrot.slane %v271, %v291
    %v293 = vcombine.high %v278, %v278
    %v294 = vcombine.high %v292, %v292
    %v295 = vcombine.high %v157, %v157
    %v297 = vunpack.c.l.s4 1966171168
    %v298 = vunpack.c.0.s8 %v297
    %v299 = vlaneseq
    %v300 = vshrl.u32 %v299, 7
    %v301 = vsub.s32 %v298, %v300
    %v302 = vrot.slane %v157, %v301
    %v304 = vunpack.c.l.s4 1966171168
    %v305 = vunpack.c.0.s8 %v304
    %v306 = vlaneseq
    %v307 = vshrl.u32 %v306, 7
    %v308 = vsub.s32 %v305, %v307
    %v309 = vrot.slane %v295, %v308
    %v310 = vcombine.high %v302, %v302
    %v312 = vunpack.c.l.s4 1966171168
    %v313 = vunpack.c.0.s8 %v312
    %v314 = vlaneseq
    %v315 = vshrl.u32 %v314, 7
    %v316 = vsub.s32 %v313, %v315
    %v317 = vrot.slane %v302, %v316
    %v319 = vunpack.c.l.s4 1966171168
    %v320 = vunpack.c.0.s8 %v319
    %v321 = vlaneseq
    %v322 = vshrl.u32 %v321, 7
    %v323 = vsub.s32 %v320, %v322
    %v324 = vrot.slane %v309, %v323
    %v326 = vunpack.c.l.s4 1966171168
    %v327 = vunpack.c.0.s8 %v326
    %v328 = vlaneseq
    %v329 = vshrl.u32 %v328, 7
    %v330 = vsub.s32 %v327, %v329
    %v331 = vrot.slane %v310, %v330
    %v332 = vcombine.high %v317, %v317
    %v333 = vcombine.high %v331, %v331
    %v334 = vld [vmem:[#allocation7] sm:$0xff]
    %v335 = vld [vmem:[#allocation7 + $0x8] sm:$0xff]
    %v336 = vld [vmem:[#allocation7 + $0x10] sm:$0xff]
    %v337 = vld [vmem:[#allocation7 + $0x18] sm:$0xff]
    %v338 = vcombine.low %v278, %v292
    %v339 = vcombine.low %v293, %v294
    %v340 = vcombine.low %v285, %v317
    %v341 = vcombine.low %v331, %v332
    %v343 = vunpack.c.l.s4 1966171168
    %v344 = vunpack.c.0.s8 %v343
    %v345 = vlaneseq
    %v346 = vshrl.u32 %v345, 7
    %v347 = vsub.s32 %v344, %v346
    %v348 = vrot.slane %v338, %v347
    %v350 = vunpack.c.l.s4 1966171168
    %v351 = vunpack.c.0.s8 %v350
    %v352 = vlaneseq
    %v353 = vshrl.u32 %v352, 7
    %v354 = vsub.s32 %v351, %v353
    %v355 = vrot.slane %v339, %v354
    %v357 = vunpack.c.l.s4 1966171168
    %v358 = vunpack.c.0.s8 %v357
    %v359 = vlaneseq
    %v360 = vshrl.u32 %v359, 7
    %v361 = vsub.s32 %v358, %v360
    %v362 = vrot.slane %v340, %v361
    %v364 = vunpack.c.l.s4 1966171168
    %v365 = vunpack.c.0.s8 %v364
    %v366 = vlaneseq
    %v367 = vshrl.u32 %v366, 7
    %v368 = vsub.s32 %v365, %v367
    %v369 = vrot.slane %v341, %v368
    %v370 = vcombine.low %v348, %v355
    %v371 = vcombine.low %v362, %v369
    %v373 = vunpack.c.l.s4 1966171168
    %v374 = vunpack.c.0.s8 %v373
    %v375 = vlaneseq
    %v376 = vshrl.u32 %v375, 7
    %v377 = vsub.s32 %v374, %v376
    %v378 = vrot.slane %v370, %v377
    %v380 = vunpack.c.l.s4 1966171168
    %v381 = vunpack.c.0.s8 %v380
    %v382 = vlaneseq
    %v383 = vshrl.u32 %v382, 7
    %v384 = vsub.s32 %v381, %v383
    %v385 = vrot.slane %v371, %v384
    %v386 = vcombine.low %v378, %v385
    %v387 = vcombine.low %v333, %v324
    %v389 = vunpack.c.l.s4 1966171168
    %v390 = vunpack.c.0.s8 %v389
    %v391 = vlaneseq
    %v392 = vshrl.u32 %v391, 7
    %v393 = vsub.s32 %v390, %v392
    %v394 = vrot.slane %v387, %v393
    %v396 = vunpack.c.l.s4 1966171168
    %v397 = vunpack.c.0.s8 %v396
    %v398 = vlaneseq
    %v399 = vshrl.u32 %v398, 7
    %v400 = vsub.s32 %v397, %v399
    %v401 = vrot.slane %v394, %v400
    %v402 = vsel %vm178, %v386, 0
    %v404 = vsel %vm178, %v401, 0
    %406 = vmatprep.subr.mxu0 0.0
    %407 = vmatpush1.msra.mxu0 0.0
    %408 = vmatprep.subr.mxu0 0.0
    %409 = vmatpush1.msra.mxu0 0.0
    %410 = vmatprep.subr.mxu0 0.0
    %411 = vmatpush1.msra.mxu0 0.0
    %412 = vmatprep.subr.mxu0 0.0
    %413 = vmatpush1.msra.mxu0 0.0
    %414 = vmatprep.subr.mxu0 0.0
    %415 = vmatpush1.msra.mxu0 0.0
    %416 = vmatprep.subr.mxu0 0.0
    %417 = vmatpush1.msra.mxu0 0.0
    %418 = vmatprep.subr.mxu0 0.0
    %419 = vmatpush1.msra.mxu0 0.0
    %420 = vmatprep.subr.mxu0 0.0
    %421 = vmatpush1.msra.mxu0 0.0
    %422 = vmatprep.subr.mxu0 0.0
    %423 = vmatpush1.msra.mxu0 0.0
    %424 = vmatprep.subr.mxu0 0.0
    %425 = vmatpush1.msra.mxu0 0.0
    %426 = vmatprep.subr.mxu0 0.0
    %427 = vmatpush1.msra.mxu0 0.0
    %428 = vmatprep.subr.mxu0 0.0
    %429 = vmatpush1.msra.mxu0 0.0
    %430 = vmatprep.subr.mxu0 0.0
    %431 = vmatpush1.msra.mxu0 %v337
    %432 = vmatprep.subr.mxu0 0.0
    %433 = vmatpush1.msra.mxu0 %v336
    %434 = vmatprep.subr.mxu0 0.0
    %435 = vmatpush1.msra.mxu0 %v335
    %436 = vmatprep.subr.mxu0 0.0
    %437 = vmatpush1.msra.mxu0 %v334
    %438 = vmatprep.subr.mxu0 0.0
    %439 = vmatpush2.msra.mxu0 0.0
    %440 = vmatprep.subr.mxu0 0.0
    %441 = vmatpush2.msra.mxu0 0.0
    %442 = vmatprep.subr.mxu0 0.0
    %443 = vmatpush2.msra.mxu0 0.0
    %444 = vmatprep.subr.mxu0 0.0
    %445 = vmatpush2.msra.mxu0 0.0
    %446 = vmatprep.subr.mxu0 0.0
    %447 = vmatpush2.msra.mxu0 0.0
    %448 = vmatprep.subr.mxu0 0.0
    %449 = vmatpush2.msra.mxu0 0.0
    %450 = vmatprep.subr.mxu0 0.0
    %451 = vmatpush2.msra.mxu0 0.0
    %452 = vmatprep.subr.mxu0 0.0
    %453 = vmatpush2.msra.mxu0 0.0
    %454 = vmatprep.subr.mxu0 0.0
    %455 = vmatpush2.msra.mxu0 0.0
    %456 = vmatprep.subr.mxu0 0.0
    %457 = vmatpush2.msra.mxu0 0.0
    %458 = vmatprep.subr.mxu0 0.0
    %459 = vmatpush2.msra.mxu0 0.0
    %460 = vmatprep.subr.mxu0 0.0
    %461 = vmatpush2.msra.mxu0 0.0
    %462 = vmatprep.subr.mxu0 0.0
    %463 = vmatpush2.msra.mxu0 0.0
    %464 = vmatprep.subr.mxu0 0.0
    %465 = vmatpush2.msra.mxu0 0.0
    %466 = vmatprep.subr.mxu0 0.0
    %467 = vmatpush2.msra.mxu0 0.0
    %468 = vmatprep.subr.mxu0 0.0
    %469 = vmatpush2.msra.mxu0 0.0
    %470 = vmatprep.mubr.f32.mxu0 0.0
    %471 = vmatmul.mubr.f32.gmra.mxu0 %v402
    %v472 = vpop.f32.mrf.mxu0
    %v473 = vadd.f32 0.0, %v472
    %v474 = vpop.f32.mrf.mxu0
    %475 = vmatprep.mubr.f32.mxu0 0.0
    %476 = vmatmul.mubr.f32.gmra.mxu0 %v404
    %v477 = vpop.f32.mrf.mxu0
    %v478 = vadd.f32 0.0, %v477
    %v479 = vpop.f32.mrf.mxu0
    %480 = vdwg.mxu0
    %v483 = vcombine.high %v473, %v473
    %v485 = vunpack.c.l.s4 1966171168
    %v486 = vunpack.c.0.s8 %v485
    %v487 = vlaneseq
    %v488 = vshrl.u32 %v487, 7
    %v489 = vsub.s32 %v486, %v488
    %v490 = vrot.slane %v473, %v489
    %v492 = vunpack.c.l.s4 1966171168
    %v493 = vunpack.c.0.s8 %v492
    %v494 = vlaneseq
    %v495 = vshrl.u32 %v494, 7
    %v496 = vsub.s32 %v493, %v495
    %v497 = vrot.slane %v483, %v496
    %v498 = vcombine.high %v490, %v490
    %v499 = vcombine.high %v497, %v497
    %v501 = vunpack.c.l.s4 1966171168
    %v502 = vunpack.c.0.s8 %v501
    %v503 = vlaneseq
    %v504 = vshrl.u32 %v503, 7
    %v505 = vsub.s32 %v502, %v504
    %v506 = vrot.slane %v490, %v505
    %v508 = vunpack.c.l.s4 1966171168
    %v509 = vunpack.c.0.s8 %v508
    %v510 = vlaneseq
    %v511 = vshrl.u32 %v510, 7
    %v512 = vsub.s32 %v509, %v511
    %v513 = vrot.slane %v497, %v512
    %v515 = vunpack.c.l.s4 1966171168
    %v516 = vunpack.c.0.s8 %v515
    %v517 = vlaneseq
    %v518 = vshrl.u32 %v517, 7
    %v519 = vsub.s32 %v516, %v518
    %v520 = vrot.slane %v498, %v519
    %v522 = vunpack.c.l.s4 1966171168
    %v523 = vunpack.c.0.s8 %v522
    %v524 = vlaneseq
    %v525 = vshrl.u32 %v524, 7
    %v526 = vsub.s32 %v523, %v525
    %v527 = vrot.slane %v499, %v526
    %v528 = vcombine.high %v506, %v506
    %v529 = vcombine.high %v513, %v513
    %v530 = vcombine.high %v520, %v520
    %v531 = vcombine.high %v527, %v527
    %v533 = vunpack.c.l.s4 1966171168
    %v534 = vunpack.c.0.s8 %v533
    %v535 = vlaneseq
    %v536 = vshrl.u32 %v535, 7
    %v537 = vsub.s32 %v534, %v536
    %v538 = vrot.slane %v478, %v537
    %v539 = vcombine.high %v538, %v538
    %v541 = vunpack.c.l.s4 1966171168
    %v542 = vunpack.c.0.s8 %v541
    %v543 = vlaneseq
    %v544 = vshrl.u32 %v543, 7
    %v545 = vsub.s32 %v542, %v544
    %v546 = vrot.slane %v538, %v545
    %v548 = vunpack.c.l.s4 1966171168
    %v549 = vunpack.c.0.s8 %v548
    %v550 = vlaneseq
    %v551 = vshrl.u32 %v550, 7
    %v552 = vsub.s32 %v549, %v551
    %v553 = vrot.slane %v539, %v552
    %v566 = vunpack.c.l.s4 1966171168
    %v567 = vunpack.c.0.s8 %v566
    %v568 = vlaneseq
    %v569 = vshrl.u32 %v568, 7
    %v570 = vsub.s32 %v567, %v569
    %v571 = vrot.slane %v249, %v570
    %v572 = vcombine.high %v571, %v571
    %v574 = vunpack.c.l.s4 1966171168
    %v575 = vunpack.c.0.s8 %v574
    %v576 = vlaneseq
    %v577 = vshrl.u32 %v576, 7
    %v578 = vsub.s32 %v575, %v577
    %v579 = vrot.slane %v571, %v578
    %v581 = vunpack.c.l.s4 1966171168
    %v582 = vunpack.c.0.s8 %v581
    %v583 = vlaneseq
    %v584 = vshrl.u32 %v583, 7
    %v585 = vsub.s32 %v582, %v584
    %v586 = vrot.slane %v572, %v585
    %v587 = vlaneseq
    %v588 = vshrl.u32 %v587, 7
    %v589 = vsub.s32 0, %v588
    %v590 = vrot.slane %v579, %v589
    %v591 = vlaneseq
    %v592 = vshrl.u32 %v591, 7
    %v593 = vsub.s32 0, %v592
    %v594 = vrot.slane %v586, %v593
    %v595 = vcombine.high %v590, %v590
    %v597 = vunpack.c.l.s4 1966171168
    %v598 = vunpack.c.0.s8 %v597
    %v599 = vlaneseq
    %v600 = vshrl.u32 %v599, 7
    %v601 = vsub.s32 %v598, %v600
    %v602 = vrot.slane %v590, %v601
    %v604 = vunpack.c.l.s4 1966171168
    %v605 = vunpack.c.0.s8 %v604
    %v606 = vlaneseq
    %v607 = vshrl.u32 %v606, 7
    %v608 = vsub.s32 %v605, %v607
    %v609 = vrot.slane %v595, %v608
    %v610 = vcombine.high %v602, %v602
    %v612 = vunpack.c.l.s4 1966171168
    %v613 = vunpack.c.0.s8 %v612
    %v614 = vlaneseq
    %v615 = vshrl.u32 %v614, 7
    %v616 = vsub.s32 %v613, %v615
    %v617 = vrot.slane %v602, %v616
    %v619 = vunpack.c.l.s4 1966171168
    %v620 = vunpack.c.0.s8 %v619
    %v621 = vlaneseq
    %v622 = vshrl.u32 %v621, 7
    %v623 = vsub.s32 %v620, %v622
    %v624 = vrot.slane %v609, %v623
    %v626 = vunpack.c.l.s4 1966171168
    %v627 = vunpack.c.0.s8 %v626
    %v628 = vlaneseq
    %v629 = vshrl.u32 %v628, 7
    %v630 = vsub.s32 %v627, %v629
    %v631 = vrot.slane %v610, %v630
    %v632 = vcombine.high %v617, %v617
    %v633 = vcombine.high %v631, %v631
    %v634 = vcombine.high %v594, %v594
    %v636 = vunpack.c.l.s4 1966171168
    %v637 = vunpack.c.0.s8 %v636
    %v638 = vlaneseq
    %v639 = vshrl.u32 %v638, 7
    %v640 = vsub.s32 %v637, %v639
    %v641 = vrot.slane %v594, %v640
    %v643 = vunpack.c.l.s4 1966171168
    %v644 = vunpack.c.0.s8 %v643
    %v645 = vlaneseq
    %v646 = vshrl.u32 %v645, 7
    %v647 = vsub.s32 %v644, %v646
    %v648 = vrot.slane %v634, %v647
    %v649 = vcombine.high %v641, %v641
    %v651 = vunpack.c.l.s4 1966171168
    %v652 = vunpack.c.0.s8 %v651
    %v653 = vlaneseq
    %v654 = vshrl.u32 %v653, 7
    %v655 = vsub.s32 %v652, %v654
    %v656 = vrot.slane %v641, %v655
    %v658 = vunpack.c.l.s4 1966171168
    %v659 = vunpack.c.0.s8 %v658
    %v660 = vlaneseq
    %v661 = vshrl.u32 %v660, 7
    %v662 = vsub.s32 %v659, %v661
    %v663 = vrot.slane %v648, %v662
    %v665 = vunpack.c.l.s4 1966171168
    %v666 = vunpack.c.0.s8 %v665
    %v667 = vlaneseq
    %v668 = vshrl.u32 %v667, 7
    %v669 = vsub.s32 %v666, %v668
    %v670 = vrot.slane %v649, %v669
    %v671 = vcombine.high %v656, %v656
    %v672 = vcombine.high %v670, %v670
    %v683 = vadd.f32 %v506, %v617
    %v684 = vadd.f32 %v520, %v631
    %v685 = vadd.f32 %v528, %v632
    %v686 = vadd.f32 %v530, %v633
    %v687 = vadd.f32 %v513, %v624
    %v688 = vadd.f32 %v527, %v656
    %v689 = vadd.f32 %v529, %v670
    %v690 = vadd.f32 %v531, %v671
    %v691 = vadd.f32 %v546, %v672
    %v692 = vadd.f32 %v553, %v663
    %v693 = vld [vmem:[#allocation8] sm:$0x1]
    %v694 = vld [vmem:[#allocation10] sm:$0x1]
    %v705 = vcombine.low %v683, %v684
    %v706 = vcombine.low %v685, %v686
    %v708 = vunpack.c.l.s4 1966171168
    %v709 = vunpack.c.0.s8 %v708
    %v710 = vlaneseq
    %v711 = vshrl.u32 %v710, 7
    %v712 = vsub.s32 %v709, %v711
    %v713 = vrot.slane %v705, %v712
    %v715 = vunpack.c.l.s4 1966171168
    %v716 = vunpack.c.0.s8 %v715
    %v717 = vlaneseq
    %v718 = vshrl.u32 %v717, 7
    %v719 = vsub.s32 %v716, %v718
    %v720 = vrot.slane %v706, %v719
    %v722 = vunpack.c.l.s4 1966171168
    %v723 = vunpack.c.0.s8 %v722
    %v724 = vlaneseq
    %v725 = vshrl.u32 %v724, 7
    %v726 = vsub.s32 %v723, %v725
    %v727 = vrot.slane %v687, %v726
    %v728 = vcombine.low %v713, %v720
    %v730 = vunpack.c.l.s4 1966171168
    %v731 = vunpack.c.0.s8 %v730
    %v732 = vlaneseq
    %v733 = vshrl.u32 %v732, 7
    %v734 = vsub.s32 %v731, %v733
    %v735 = vrot.slane %v728, %v734
    %v737 = vunpack.c.l.s4 1966171168
    %v738 = vunpack.c.0.s8 %v737
    %v739 = vlaneseq
    %v740 = vshrl.u32 %v739, 7
    %v741 = vsub.s32 %v738, %v740
    %v742 = vrot.slane %v727, %v741
    %v743 = vcombine.low %v735, %v742
    %v744 = vcombine.low %v688, %v689
    %v745 = vcombine.low %v690, %v691
    %v747 = vunpack.c.l.s4 1966171168
    %v748 = vunpack.c.0.s8 %v747
    %v749 = vlaneseq
    %v750 = vshrl.u32 %v749, 7
    %v751 = vsub.s32 %v748, %v750
    %v752 = vrot.slane %v744, %v751
    %v754 = vunpack.c.l.s4 1966171168
    %v755 = vunpack.c.0.s8 %v754
    %v756 = vlaneseq
    %v757 = vshrl.u32 %v756, 7
    %v758 = vsub.s32 %v755, %v757
    %v759 = vrot.slane %v745, %v758
    %v761 = vunpack.c.l.s4 1966171168
    %v762 = vunpack.c.0.s8 %v761
    %v763 = vlaneseq
    %v764 = vshrl.u32 %v763, 7
    %v765 = vsub.s32 %v762, %v764
    %v766 = vrot.slane %v692, %v765
    %v767 = vcombine.low %v752, %v759
    %v769 = vunpack.c.l.s4 1966171168
    %v770 = vunpack.c.0.s8 %v769
    %v771 = vlaneseq
    %v772 = vshrl.u32 %v771, 7
    %v773 = vsub.s32 %v770, %v772
    %v774 = vrot.slane %v767, %v773
    %v776 = vunpack.c.l.s4 1966171168
    %v777 = vunpack.c.0.s8 %v776
    %v778 = vlaneseq
    %v779 = vshrl.u32 %v778, 7
    %v780 = vsub.s32 %v777, %v779
    %v781 = vrot.slane %v766, %v780
    %v782 = vcombine.low %v774, %v781
    %vm785 = vcmask 258048
    %v786 = vsel %vm785, %v743, 0.0
    %787 = vadd.xlane.f32.xlu0 %v786
    %v788 = vpop.xlane.xlu0 %787
    %v789 = vsel %vm785, %v782, 0.0
    %790 = vadd.xlane.f32.xlu0 %v789
    %v791 = vpop.xlane.xlu0 %790
    %v792 = vrcp.pop 32.0
    %v793 = vmul.f32 %v788, %v792
    %v794 = vmul.f32 %v791, %v792
    %v797 = vlaneseq
    %v798 = vshrl.u32 %v797, 7
    %v799 = vsub.s32 0, %v798
    %v800 = vrot.slane %v793, %v799
    %v801 = vlaneseq
    %v802 = vshrl.u32 %v801, 7
    %v803 = vsub.s32 1, %v802
    %v804 = vrot.slane %v793, %v803
    %v805 = vlaneseq
    %v806 = vshrl.u32 %v805, 7
    %v807 = vsub.s32 2, %v806
    %v808 = vrot.slane %v793, %v807
    %v809 = vlaneseq
    %v810 = vshrl.u32 %v809, 7
    %v811 = vsub.s32 3, %v810
    %v812 = vrot.slane %v793, %v811
    %v813 = vlaneseq
    %v814 = vshrl.u32 %v813, 7
    %v815 = vsub.s32 4, %v814
    %v816 = vrot.slane %v793, %v815
    %v817 = vlaneseq
    %v818 = vshrl.u32 %v817, 7
    %v819 = vsub.s32 0, %v818
    %v820 = vrot.slane %v794, %v819
    %v821 = vlaneseq
    %v822 = vshrl.u32 %v821, 7
    %v823 = vsub.s32 1, %v822
    %v824 = vrot.slane %v794, %v823
    %v825 = vlaneseq
    %v826 = vshrl.u32 %v825, 7
    %v827 = vsub.s32 2, %v826
    %v828 = vrot.slane %v794, %v827
    %v829 = vlaneseq
    %v830 = vshrl.u32 %v829, 7
    %v831 = vsub.s32 3, %v830
    %v832 = vrot.slane %v794, %v831
    %v833 = vlaneseq
    %v834 = vshrl.u32 %v833, 7
    %v835 = vsub.s32 4, %v834
    %v836 = vrot.slane %v794, %v835
    %v847 = vsub.f32 %v683, %v800
    %v848 = vsub.f32 %v684, %v804
    %v849 = vsub.f32 %v685, %v808
    %v850 = vsub.f32 %v686, %v812
    %v851 = vsub.f32 %v687, %v816
    %v852 = vsub.f32 %v688, %v820
    %v853 = vsub.f32 %v689, %v824
    %v854 = vsub.f32 %v690, %v828
    %v855 = vsub.f32 %v691, %v832
    %v856 = vsub.f32 %v692, %v836
    %v857 = vmul.f32 %v847, %v847
    %v858 = vmul.f32 %v848, %v848
    %v859 = vmul.f32 %v849, %v849
    %v860 = vmul.f32 %v850, %v850
    %v861 = vmul.f32 %v851, %v851
    %v862 = vmul.f32 %v852, %v852
    %v863 = vmul.f32 %v853, %v853
    %v864 = vmul.f32 %v854, %v854
    %v865 = vmul.f32 %v855, %v855
    %v866 = vmul.f32 %v856, %v856
    %v877 = vcombine.low %v857, %v858
    %v878 = vcombine.low %v859, %v860
    %v880 = vunpack.c.l.s4 1966171168
    %v881 = vunpack.c.0.s8 %v880
    %v882 = vlaneseq
    %v883 = vshrl.u32 %v882, 7
    %v884 = vsub.s32 %v881, %v883
    %v885 = vrot.slane %v877, %v884
    %v887 = vunpack.c.l.s4 1966171168
    %v888 = vunpack.c.0.s8 %v887
    %v889 = vlaneseq
    %v890 = vshrl.u32 %v889, 7
    %v891 = vsub.s32 %v888, %v890
    %v892 = vrot.slane %v878, %v891
    %v894 = vunpack.c.l.s4 1966171168
    %v895 = vunpack.c.0.s8 %v894
    %v896 = vlaneseq
    %v897 = vshrl.u32 %v896, 7
    %v898 = vsub.s32 %v895, %v897
    %v899 = vrot.slane %v861, %v898
    %v900 = vcombine.low %v885, %v892
    %v902 = vunpack.c.l.s4 1966171168
    %v903 = vunpack.c.0.s8 %v902
    %v904 = vlaneseq
    %v905 = vshrl.u32 %v904, 7
    %v906 = vsub.s32 %v903, %v905
    %v907 = vrot.slane %v900, %v906
    %v909 = vunpack.c.l.s4 1966171168
    %v910 = vunpack.c.0.s8 %v909
    %v911 = vlaneseq
    %v912 = vshrl.u32 %v911, 7
    %v913 = vsub.s32 %v910, %v912
    %v914 = vrot.slane %v899, %v913
    %v915 = vcombine.low %v907, %v914
    %v916 = vcombine.low %v862, %v863
    %v917 = vcombine.low %v864, %v865
    %v919 = vunpack.c.l.s4 1966171168
    %v920 = vunpack.c.0.s8 %v919
    %v921 = vlaneseq
    %v922 = vshrl.u32 %v921, 7
    %v923 = vsub.s32 %v920, %v922
    %v924 = vrot.slane %v916, %v923
    %v926 = vunpack.c.l.s4 1966171168
    %v927 = vunpack.c.0.s8 %v926
    %v928 = vlaneseq
    %v929 = vshrl.u32 %v928, 7
    %v930 = vsub.s32 %v927, %v929
    %v931 = vrot.slane %v917, %v930
    %v933 = vunpack.c.l.s4 1966171168
    %v934 = vunpack.c.0.s8 %v933
    %v935 = vlaneseq
    %v936 = vshrl.u32 %v935, 7
    %v937 = vsub.s32 %v934, %v936
    %v938 = vrot.slane %v866, %v937
    %v939 = vcombine.low %v924, %v931
    %v941 = vunpack.c.l.s4 1966171168
    %v942 = vunpack.c.0.s8 %v941
    %v943 = vlaneseq
    %v944 = vshrl.u32 %v943, 7
    %v945 = vsub.s32 %v942, %v944
    %v946 = vrot.slane %v939, %v945
    %v948 = vunpack.c.l.s4 1966171168
    %v949 = vunpack.c.0.s8 %v948
    %v950 = vlaneseq
    %v951 = vshrl.u32 %v950, 7
    %v952 = vsub.s32 %v949, %v951
    %v953 = vrot.slane %v938, %v952
    %v954 = vcombine.low %v946, %v953
    %v957 = vsel %vm785, %v915, 0.0
    %958 = vadd.xlane.f32.xlu0 %v957
    %v959 = vpop.xlane.xlu0 %958
    %v960 = vsel %vm785, %v954, 0.0
    %961 = vadd.xlane.f32.xlu0 %v960
    %v962 = vpop.xlane.xlu0 %961
    %v963 = vmul.f32 %v959, %v792
    %v964 = vmul.f32 %v962, %v792
    %v965 = vadd.f32 %v963, 1e-05
    %v966 = vadd.f32 %v964, 1e-05
    %v967 = vrsqrt.pop %v965
    %v968 = vrsqrt.pop %v966
    %v971 = vlaneseq
    %v972 = vshrl.u32 %v971, 7
    %v973 = vsub.s32 0, %v972
    %v974 = vrot.slane %v967, %v973
    %v975 = vlaneseq
    %v976 = vshrl.u32 %v975, 7
    %v977 = vsub.s32 1, %v976
    %v978 = vrot.slane %v967, %v977
    %v979 = vlaneseq
    %v980 = vshrl.u32 %v979, 7
    %v981 = vsub.s32 2, %v980
    %v982 = vrot.slane %v967, %v981
    %v983 = vlaneseq
    %v984 = vshrl.u32 %v983, 7
    %v985 = vsub.s32 3, %v984
    %v986 = vrot.slane %v967, %v985
    %v987 = vlaneseq
    %v988 = vshrl.u32 %v987, 7
    %v989 = vsub.s32 4, %v988
    %v990 = vrot.slane %v967, %v989
    %v991 = vlaneseq
    %v992 = vshrl.u32 %v991, 7
    %v993 = vsub.s32 0, %v992
    %v994 = vrot.slane %v968, %v993
    %v995 = vlaneseq
    %v996 = vshrl.u32 %v995, 7
    %v997 = vsub.s32 1, %v996
    %v998 = vrot.slane %v968, %v997
    %v999 = vlaneseq
    %v1000 = vshrl.u32 %v999, 7
    %v1001 = vsub.s32 2, %v1000
    %v1002 = vrot.slane %v968, %v1001
    %v1003 = vlaneseq
    %v1004 = vshrl.u32 %v1003, 7
    %v1005 = vsub.s32 3, %v1004
    %v1006 = vrot.slane %v968, %v1005
    %v1007 = vlaneseq
    %v1008 = vshrl.u32 %v1007, 7
    %v1009 = vsub.s32 4, %v1008
    %v1010 = vrot.slane %v968, %v1009
    %v1021 = vmul.f32 %v847, %v974
    %v1022 = vmul.f32 %v848, %v978
    %v1023 = vmul.f32 %v849, %v982
    %v1024 = vmul.f32 %v850, %v986
    %v1025 = vmul.f32 %v851, %v990
    %v1026 = vmul.f32 %v852, %v994
    %v1027 = vmul.f32 %v853, %v998
    %v1028 = vmul.f32 %v854, %v1002
    %v1029 = vmul.f32 %v855, %v1006
    %v1030 = vmul.f32 %v856, %v1010
    %v1032 = vlaneseq
    %v1033 = vshrl.u32 %v1032, 7
    %v1034 = vsub.s32 0, %v1033
    %v1035 = vrot.slane %v693, %v1034
    %v1036 = vcombine.high %v1035, %v1035
    %v1038 = vunpack.c.l.s4 1966171168
    %v1039 = vunpack.c.0.s8 %v1038
    %v1040 = vlaneseq
    %v1041 = vshrl.u32 %v1040, 7
    %v1042 = vsub.s32 %v1039, %v1041
    %v1043 = vrot.slane %v1035, %v1042
    %v1045 = vunpack.c.l.s4 1966171168
    %v1046 = vunpack.c.0.s8 %v1045
    %v1047 = vlaneseq
    %v1048 = vshrl.u32 %v1047, 7
    %v1049 = vsub.s32 %v1046, %v1048
    %v1050 = vrot.slane %v1036, %v1049
    %v1051 = vcombine.high %v1043, %v1043
    %v1053 = vunpack.c.l.s4 1966171168
    %v1054 = vunpack.c.0.s8 %v1053
    %v1055 = vlaneseq
    %v1056 = vshrl.u32 %v1055, 7
    %v1057 = vsub.s32 %v1054, %v1056
    %v1058 = vrot.slane %v1043, %v1057
    %v1060 = vunpack.c.l.s4 1966171168
    %v1061 = vunpack.c.0.s8 %v1060
    %v1062 = vlaneseq
    %v1063 = vshrl.u32 %v1062, 7
    %v1064 = vsub.s32 %v1061, %v1063
    %v1065 = vrot.slane %v1050, %v1064
    %v1067 = vunpack.c.l.s4 1966171168
    %v1068 = vunpack.c.0.s8 %v1067
    %v1069 = vlaneseq
    %v1070 = vshrl.u32 %v1069, 7
    %v1071 = vsub.s32 %v1068, %v1070
    %v1072 = vrot.slane %v1051, %v1071
    %v1073 = vcombine.high %v1058, %v1058
    %v1074 = vcombine.high %v1072, %v1072
    %v1080 = vmul.f32 %v1021, %v1058
    %v1081 = vmul.f32 %v1022, %v1072
    %v1082 = vmul.f32 %v1023, %v1073
    %v1083 = vmul.f32 %v1024, %v1074
    %v1084 = vmul.f32 %v1025, %v1065
    %v1085 = vmul.f32 %v1026, %v1058
    %v1086 = vmul.f32 %v1027, %v1072
    %v1087 = vmul.f32 %v1028, %v1073
    %v1088 = vmul.f32 %v1029, %v1074
    %v1089 = vmul.f32 %v1030, %v1065
    %v1091 = vlaneseq
    %v1092 = vshrl.u32 %v1091, 7
    %v1093 = vsub.s32 0, %v1092
    %v1094 = vrot.slane %v694, %v1093
    %v1095 = vcombine.high %v1094, %v1094
    %v1097 = vunpack.c.l.s4 1966171168
    %v1098 = vunpack.c.0.s8 %v1097
    %v1099 = vlaneseq
    %v1100 = vshrl.u32 %v1099, 7
    %v1101 = vsub.s32 %v1098, %v1100
    %v1102 = vrot.slane %v1094, %v1101
    %v1104 = vunpack.c.l.s4 1966171168
    %v1105 = vunpack.c.0.s8 %v1104
    %v1106 = vlaneseq
    %v1107 = vshrl.u32 %v1106, 7
    %v1108 = vsub.s32 %v1105, %v1107
    %v1109 = vrot.slane %v1095, %v1108
    %v1110 = vcombine.high %v1102, %v1102
    %v1112 = vunpack.c.l.s4 1966171168
    %v1113 = vunpack.c.0.s8 %v1112
    %v1114 = vlaneseq
    %v1115 = vshrl.u32 %v1114, 7
    %v1116 = vsub.s32 %v1113, %v1115
    %v1117 = vrot.slane %v1102, %v1116
    %v1119 = vunpack.c.l.s4 1966171168
    %v1120 = vunpack.c.0.s8 %v1119
    %v1121 = vlaneseq
    %v1122 = vshrl.u32 %v1121, 7
    %v1123 = vsub.s32 %v1120, %v1122
    %v1124 = vrot.slane %v1109, %v1123
    %v1126 = vunpack.c.l.s4 1966171168
    %v1127 = vunpack.c.0.s8 %v1126
    %v1128 = vlaneseq
    %v1129 = vshrl.u32 %v1128, 7
    %v1130 = vsub.s32 %v1127, %v1129
    %v1131 = vrot.slane %v1110, %v1130
    %v1132 = vcombine.high %v1117, %v1117
    %v1133 = vcombine.high %v1131, %v1131
    %v1139 = vadd.f32 %v1080, %v1117
    %v1140 = vadd.f32 %v1081, %v1131
    %v1141 = vadd.f32 %v1082, %v1132
    %v1142 = vadd.f32 %v1083, %v1133
    %v1143 = vadd.f32 %v1084, %v1124
    %v1144 = vadd.f32 %v1085, %v1117
    %v1145 = vadd.f32 %v1086, %v1131
    %v1146 = vadd.f32 %v1087, %v1132
    %v1147 = vadd.f32 %v1088, %v1133
    %v1148 = vadd.f32 %v1089, %v1124
    %v1149 = vxor.u32 %v1139, 2147483648
    %v1150 = vxor.u32 %v1140, 2147483648
    %v1151 = vxor.u32 %v1141, 2147483648
    %v1152 = vxor.u32 %v1142, 2147483648
    %v1153 = vxor.u32 %v1143, 2147483648
    %v1154 = vxor.u32 %v1144, 2147483648
    %v1155 = vxor.u32 %v1145, 2147483648
    %v1156 = vxor.u32 %v1146, 2147483648
    %v1157 = vxor.u32 %v1147, 2147483648
    %v1158 = vxor.u32 %v1148, 2147483648
    %v1159 = vmul.f32 %v1149, 1.442695
    %v1160 = vpow.pop %v1159
    %v1161 = vmul.f32 %v1150, 1.442695
    %v1162 = vpow.pop %v1161
    %v1163 = vmul.f32 %v1151, 1.442695
    %v1164 = vpow.pop %v1163
    %v1165 = vmul.f32 %v1152, 1.442695
    %v1166 = vpow.pop %v1165
    %v1167 = vmul.f32 %v1153, 1.442695
    %v1168 = vpow.pop %v1167
    %v1169 = vmul.f32 %v1154, 1.442695
    %v1170 = vpow.pop %v1169
    %v1171 = vmul.f32 %v1155, 1.442695
    %v1172 = vpow.pop %v1171
    %v1173 = vmul.f32 %v1156, 1.442695
    %v1174 = vpow.pop %v1173
    %v1175 = vmul.f32 %v1157, 1.442695
    %v1176 = vpow.pop %v1175
    %v1177 = vmul.f32 %v1158, 1.442695
    %v1178 = vpow.pop %v1177
    %v1179 = vadd.f32 %v1160, 1.0
    %v1180 = vadd.f32 %v1162, 1.0
    %v1181 = vadd.f32 %v1164, 1.0
    %v1182 = vadd.f32 %v1166, 1.0
    %v1183 = vadd.f32 %v1168, 1.0
    %v1184 = vadd.f32 %v1170, 1.0
    %v1185 = vadd.f32 %v1172, 1.0
    %v1186 = vadd.f32 %v1174, 1.0
    %v1187 = vadd.f32 %v1176, 1.0
    %v1188 = vadd.f32 %v1178, 1.0
    %v1189 = vrcp.pop %v1179
    %v1190 = vmul.f32 1.0, %v1189
    %v1191 = vrcp.pop %v1180
    %v1192 = vmul.f32 1.0, %v1191
    %v1193 = vrcp.pop %v1181
    %v1194 = vmul.f32 1.0, %v1193
    %v1195 = vrcp.pop %v1182
    %v1196 = vmul.f32 1.0, %v1195
    %v1197 = vrcp.pop %v1183
    %v1198 = vmul.f32 1.0, %v1197
    %v1199 = vrcp.pop %v1184
    %v1200 = vmul.f32 1.0, %v1199
    %v1201 = vrcp.pop %v1185
    %v1202 = vmul.f32 1.0, %v1201
    %v1203 = vrcp.pop %v1186
    %v1204 = vmul.f32 1.0, %v1203
    %v1205 = vrcp.pop %v1187
    %v1206 = vmul.f32 1.0, %v1205
    %v1207 = vrcp.pop %v1188
    %v1208 = vmul.f32 1.0, %v1207
    %1209 = vrot.lane.b32.xlu0 %v743, 96
    %v1210 = vpop.permute.xlu0 %1209
    %1211 = vrot.lane.b32.xlu0 %v782, 96
    %v1212 = vpop.permute.xlu0 %1211
    %v1215 = vsel %vm785, %v1210, 0.0
    %1216 = vadd.xlane.f32.xlu0 %v1215
    %v1217 = vpop.xlane.xlu0 %1216
    %v1218 = vsel %vm785, %v1212, 0.0
    %1219 = vadd.xlane.f32.xlu0 %v1218
    %v1220 = vpop.xlane.xlu0 %1219
    %v1221 = vmul.f32 %v1217, %v792
    %v1222 = vmul.f32 %v1220, %v792
    %v1225 = vlaneseq
    %v1226 = vshrl.u32 %v1225, 7
    %v1227 = vsub.s32 0, %v1226
    %v1228 = vrot.slane %v1221, %v1227
    %v1229 = vlaneseq
    %v1230 = vshrl.u32 %v1229, 7
    %v1231 = vsub.s32 1, %v1230
    %v1232 = vrot.slane %v1221, %v1231
    %v1233 = vlaneseq
    %v1234 = vshrl.u32 %v1233, 7
    %v1235 = vsub.s32 2, %v1234
    %v1236 = vrot.slane %v1221, %v1235
    %v1237 = vlaneseq
    %v1238 = vshrl.u32 %v1237, 7
    %v1239 = vsub.s32 3, %v1238
    %v1240 = vrot.slane %v1221, %v1239
    %v1241 = vlaneseq
    %v1242 = vshrl.u32 %v1241, 7
    %v1243 = vsub.s32 4, %v1242
    %v1244 = vrot.slane %v1221, %v1243
    %v1245 = vlaneseq
    %v1246 = vshrl.u32 %v1245, 7
    %v1247 = vsub.s32 0, %v1246
    %v1248 = vrot.slane %v1222, %v1247
    %v1249 = vlaneseq
    %v1250 = vshrl.u32 %v1249, 7
    %v1251 = vsub.s32 1, %v1250
    %v1252 = vrot.slane %v1222, %v1251
    %v1253 = vlaneseq
    %v1254 = vshrl.u32 %v1253, 7
    %v1255 = vsub.s32 2, %v1254
    %v1256 = vrot.slane %v1222, %v1255
    %v1257 = vlaneseq
    %v1258 = vshrl.u32 %v1257, 7
    %v1259 = vsub.s32 3, %v1258
    %v1260 = vrot.slane %v1222, %v1259
    %v1261 = vlaneseq
    %v1262 = vshrl.u32 %v1261, 7
    %v1263 = vsub.s32 4, %v1262
    %v1264 = vrot.slane %v1222, %v1263
    %v1275 = vsub.f32 %v683, %v1228
    %v1276 = vsub.f32 %v684, %v1232
    %v1277 = vsub.f32 %v685, %v1236
    %v1278 = vsub.f32 %v686, %v1240
    %v1279 = vsub.f32 %v687, %v1244
    %v1280 = vsub.f32 %v688, %v1248
    %v1281 = vsub.f32 %v689, %v1252
    %v1282 = vsub.f32 %v690, %v1256
    %v1283 = vsub.f32 %v691, %v1260
    %v1284 = vsub.f32 %v692, %v1264
    %v1285 = vmul.f32 %v1275, %v1275
    %v1286 = vmul.f32 %v1276, %v1276
    %v1287 = vmul.f32 %v1277, %v1277
    %v1288 = vmul.f32 %v1278, %v1278
    %v1289 = vmul.f32 %v1279, %v1279
    %v1290 = vmul.f32 %v1280, %v1280
    %v1291 = vmul.f32 %v1281, %v1281
    %v1292 = vmul.f32 %v1282, %v1282
    %v1293 = vmul.f32 %v1283, %v1283
    %v1294 = vmul.f32 %v1284, %v1284
    %v1305 = vcombine.low %v1285, %v1286
    %v1306 = vcombine.low %v1287, %v1288
    %v1308 = vunpack.c.l.s4 1966171168
    %v1309 = vunpack.c.0.s8 %v1308
    %v1310 = vlaneseq
    %v1311 = vshrl.u32 %v1310, 7
    %v1312 = vsub.s32 %v1309, %v1311
    %v1313 = vrot.slane %v1305, %v1312
    %v1315 = vunpack.c.l.s4 1966171168
    %v1316 = vunpack.c.0.s8 %v1315
    %v1317 = vlaneseq
    %v1318 = vshrl.u32 %v1317, 7
    %v1319 = vsub.s32 %v1316, %v1318
    %v1320 = vrot.slane %v1306, %v1319
    %v1322 = vunpack.c.l.s4 1966171168
    %v1323 = vunpack.c.0.s8 %v1322
    %v1324 = vlaneseq
    %v1325 = vshrl.u32 %v1324, 7
    %v1326 = vsub.s32 %v1323, %v1325
    %v1327 = vrot.slane %v1289, %v1326
    %v1328 = vcombine.low %v1313, %v1320
    %v1330 = vunpack.c.l.s4 1966171168
    %v1331 = vunpack.c.0.s8 %v1330
    %v1332 = vlaneseq
    %v1333 = vshrl.u32 %v1332, 7
    %v1334 = vsub.s32 %v1331, %v1333
    %v1335 = vrot.slane %v1328, %v1334
    %v1337 = vunpack.c.l.s4 1966171168
    %v1338 = vunpack.c.0.s8 %v1337
    %v1339 = vlaneseq
    %v1340 = vshrl.u32 %v1339, 7
    %v1341 = vsub.s32 %v1338, %v1340
    %v1342 = vrot.slane %v1327, %v1341
    %v1343 = vcombine.low %v1335, %v1342
    %v1344 = vcombine.low %v1290, %v1291
    %v1345 = vcombine.low %v1292, %v1293
    %v1347 = vunpack.c.l.s4 1966171168
    %v1348 = vunpack.c.0.s8 %v1347
    %v1349 = vlaneseq
    %v1350 = vshrl.u32 %v1349, 7
    %v1351 = vsub.s32 %v1348, %v1350
    %v1352 = vrot.slane %v1344, %v1351
    %v1354 = vunpack.c.l.s4 1966171168
    %v1355 = vunpack.c.0.s8 %v1354
    %v1356 = vlaneseq
    %v1357 = vshrl.u32 %v1356, 7
    %v1358 = vsub.s32 %v1355, %v1357
    %v1359 = vrot.slane %v1345, %v1358
    %v1361 = vunpack.c.l.s4 1966171168
    %v1362 = vunpack.c.0.s8 %v1361
    %v1363 = vlaneseq
    %v1364 = vshrl.u32 %v1363, 7
    %v1365 = vsub.s32 %v1362, %v1364
    %v1366 = vrot.slane %v1294, %v1365
    %v1367 = vcombine.low %v1352, %v1359
    %v1369 = vunpack.c.l.s4 1966171168
    %v1370 = vunpack.c.0.s8 %v1369
    %v1371 = vlaneseq
    %v1372 = vshrl.u32 %v1371, 7
    %v1373 = vsub.s32 %v1370, %v1372
    %v1374 = vrot.slane %v1367, %v1373
    %v1376 = vunpack.c.l.s4 1966171168
    %v1377 = vunpack.c.0.s8 %v1376
    %v1378 = vlaneseq
    %v1379 = vshrl.u32 %v1378, 7
    %v1380 = vsub.s32 %v1377, %v1379
    %v1381 = vrot.slane %v1366, %v1380
    %v1382 = vcombine.low %v1374, %v1381
    %1383 = vrot.lane.b32.xlu0 %v1343, 96
    %v1384 = vpop.permute.xlu0 %1383
    %1385 = vrot.lane.b32.xlu0 %v1382, 96
    %v1386 = vpop.permute.xlu0 %1385
    %v1389 = vsel %vm785, %v1384, 0.0
    %1390 = vadd.xlane.f32.xlu0 %v1389
    %v1391 = vpop.xlane.xlu0 %1390
    %v1392 = vsel %vm785, %v1386, 0.0
    %1393 = vadd.xlane.f32.xlu0 %v1392
    %v1394 = vpop.xlane.xlu0 %1393
    %v1395 = vmul.f32 %v1391, %v792
    %v1396 = vmul.f32 %v1394, %v792
    %v1397 = vadd.f32 %v1395, 1e-05
    %v1398 = vadd.f32 %v1396, 1e-05
    %v1399 = vrsqrt.pop %v1397
    %v1400 = vrsqrt.pop %v1398
    %v1403 = vlaneseq
    %v1404 = vshrl.u32 %v1403, 7
    %v1405 = vsub.s32 0, %v1404
    %v1406 = vrot.slane %v1399, %v1405
    %v1407 = vlaneseq
    %v1408 = vshrl.u32 %v1407, 7
    %v1409 = vsub.s32 1, %v1408
    %v1410 = vrot.slane %v1399, %v1409
    %v1411 = vlaneseq
    %v1412 = vshrl.u32 %v1411, 7
    %v1413 = vsub.s32 2, %v1412
    %v1414 = vrot.slane %v1399, %v1413
    %v1415 = vlaneseq
    %v1416 = vshrl.u32 %v1415, 7
    %v1417 = vsub.s32 3, %v1416
    %v1418 = vrot.slane %v1399, %v1417
    %v1419 = vlaneseq
    %v1420 = vshrl.u32 %v1419, 7
    %v1421 = vsub.s32 4, %v1420
    %v1422 = vrot.slane %v1399, %v1421
    %v1423 = vlaneseq
    %v1424 = vshrl.u32 %v1423, 7
    %v1425 = vsub.s32 0, %v1424
    %v1426 = vrot.slane %v1400, %v1425
    %v1427 = vlaneseq
    %v1428 = vshrl.u32 %v1427, 7
    %v1429 = vsub.s32 1, %v1428
    %v1430 = vrot.slane %v1400, %v1429
    %v1431 = vlaneseq
    %v1432 = vshrl.u32 %v1431, 7
    %v1433 = vsub.s32 2, %v1432
    %v1434 = vrot.slane %v1400, %v1433
    %v1435 = vlaneseq
    %v1436 = vshrl.u32 %v1435, 7
    %v1437 = vsub.s32 3, %v1436
    %v1438 = vrot.slane %v1400, %v1437
    %v1439 = vlaneseq
    %v1440 = vshrl.u32 %v1439, 7
    %v1441 = vsub.s32 4, %v1440
    %v1442 = vrot.slane %v1400, %v1441
    %v1453 = vmul.f32 %v1275, %v1406
    %v1454 = vmul.f32 %v1276, %v1410
    %v1455 = vmul.f32 %v1277, %v1414
    %v1456 = vmul.f32 %v1278, %v1418
    %v1457 = vmul.f32 %v1279, %v1422
    %v1458 = vmul.f32 %v1280, %v1426
    %v1459 = vmul.f32 %v1281, %v1430
    %v1460 = vmul.f32 %v1282, %v1434
    %v1461 = vmul.f32 %v1283, %v1438
    %v1462 = vmul.f32 %v1284, %v1442
    %v1463 = vmul.f32 %v1453, %v1058
    %v1464 = vmul.f32 %v1454, %v1072
    %v1465 = vmul.f32 %v1455, %v1073
    %v1466 = vmul.f32 %v1456, %v1074
    %v1467 = vmul.f32 %v1457, %v1065
    %v1468 = vmul.f32 %v1458, %v1058
    %v1469 = vmul.f32 %v1459, %v1072
    %v1470 = vmul.f32 %v1460, %v1073
    %v1471 = vmul.f32 %v1461, %v1074
    %v1472 = vmul.f32 %v1462, %v1065
    %v1473 = vadd.f32 %v1463, %v1117
    %v1474 = vadd.f32 %v1464, %v1131
    %v1475 = vadd.f32 %v1465, %v1132
    %v1476 = vadd.f32 %v1466, %v1133
    %v1477 = vadd.f32 %v1467, %v1124
    %v1478 = vadd.f32 %v1468, %v1117
    %v1479 = vadd.f32 %v1469, %v1131
    %v1480 = vadd.f32 %v1470, %v1132
    %v1481 = vadd.f32 %v1471, %v1133
    %v1482 = vadd.f32 %v1472, %v1124
    %v1483 = vxor.u32 %v1473, 2147483648
    %v1484 = vxor.u32 %v1474, 2147483648
    %v1485 = vxor.u32 %v1475, 2147483648
    %v1486 = vxor.u32 %v1476, 2147483648
    %v1487 = vxor.u32 %v1477, 2147483648
    %v1488 = vxor.u32 %v1478, 2147483648
    %v1489 = vxor.u32 %v1479, 2147483648
    %v1490 = vxor.u32 %v1480, 2147483648
    %v1491 = vxor.u32 %v1481, 2147483648
    %v1492 = vxor.u32 %v1482, 2147483648
    %v1493 = vmul.f32 %v1483, 1.442695
    %v1494 = vpow.pop %v1493
    %v1495 = vmul.f32 %v1484, 1.442695
    %v1496 = vpow.pop %v1495
    %v1497 = vmul.f32 %v1485, 1.442695
    %v1498 = vpow.pop %v1497
    %v1499 = vmul.f32 %v1486, 1.442695
    %v1500 = vpow.pop %v1499
    %v1501 = vmul.f32 %v1487, 1.442695
    %v1502 = vpow.pop %v1501
    %v1503 = vmul.f32 %v1488, 1.442695
    %v1504 = vpow.pop %v1503
    %v1505 = vmul.f32 %v1489, 1.442695
    %v1506 = vpow.pop %v1505
    %v1507 = vmul.f32 %v1490, 1.442695
    %v1508 = vpow.pop %v1507
    %v1509 = vmul.f32 %v1491, 1.442695
    %v1510 = vpow.pop %v1509
    %v1511 = vmul.f32 %v1492, 1.442695
    %v1512 = vpow.pop %v1511
    %v1513 = vadd.f32 %v1494, 1.0
    %v1514 = vadd.f32 %v1496, 1.0
    %v1515 = vadd.f32 %v1498, 1.0
    %v1516 = vadd.f32 %v1500, 1.0
    %v1517 = vadd.f32 %v1502, 1.0
    %v1518 = vadd.f32 %v1504, 1.0
    %v1519 = vadd.f32 %v1506, 1.0
    %v1520 = vadd.f32 %v1508, 1.0
    %v1521 = vadd.f32 %v1510, 1.0
    %v1522 = vadd.f32 %v1512, 1.0
    %v1523 = vrcp.pop %v1513
    %v1524 = vmul.f32 1.0, %v1523
    %v1525 = vrcp.pop %v1514
    %v1526 = vmul.f32 1.0, %v1525
    %v1527 = vrcp.pop %v1515
    %v1528 = vmul.f32 1.0, %v1527
    %v1529 = vrcp.pop %v1516
    %v1530 = vmul.f32 1.0, %v1529
    %v1531 = vrcp.pop %v1517
    %v1532 = vmul.f32 1.0, %v1531
    %v1533 = vrcp.pop %v1518
    %v1534 = vmul.f32 1.0, %v1533
    %v1535 = vrcp.pop %v1519
    %v1536 = vmul.f32 1.0, %v1535
    %v1537 = vrcp.pop %v1520
    %v1538 = vmul.f32 1.0, %v1537
    %v1539 = vrcp.pop %v1521
    %v1540 = vmul.f32 1.0, %v1539
    %v1541 = vrcp.pop %v1522
    %v1542 = vmul.f32 1.0, %v1541
    %1543 = vrot.lane.b32.xlu0 %v743, 64
    %v1544 = vpop.permute.xlu0 %1543
    %1545 = vrot.lane.b32.xlu0 %v782, 64
    %v1546 = vpop.permute.xlu0 %1545
    %v1549 = vsel %vm785, %v1544, 0.0
    %1550 = vadd.xlane.f32.xlu0 %v1549
    %v1551 = vpop.xlane.xlu0 %1550
    %v1552 = vsel %vm785, %v1546, 0.0
    %1553 = vadd.xlane.f32.xlu0 %v1552
    %v1554 = vpop.xlane.xlu0 %1553
    %v1555 = vmul.f32 %v1551, %v792
    %v1556 = vmul.f32 %v1554, %v792
    %v1559 = vlaneseq
    %v1560 = vshrl.u32 %v1559, 7
    %v1561 = vsub.s32 0, %v1560
    %v1562 = vrot.slane %v1555, %v1561
    %v1563 = vlaneseq
    %v1564 = vshrl.u32 %v1563, 7
    %v1565 = vsub.s32 1, %v1564
    %v1566 = vrot.slane %v1555, %v1565
    %v1567 = vlaneseq
    %v1568 = vshrl.u32 %v1567, 7
    %v1569 = vsub.s32 2, %v1568
    %v1570 = vrot.slane %v1555, %v1569
    %v1571 = vlaneseq
    %v1572 = vshrl.u32 %v1571, 7
    %v1573 = vsub.s32 3, %v1572
    %v1574 = vrot.slane %v1555, %v1573
    %v1575 = vlaneseq
    %v1576 = vshrl.u32 %v1575, 7
    %v1577 = vsub.s32 4, %v1576
    %v1578 = vrot.slane %v1555, %v1577
    %v1579 = vlaneseq
    %v1580 = vshrl.u32 %v1579, 7
    %v1581 = vsub.s32 0, %v1580
    %v1582 = vrot.slane %v1556, %v1581
    %v1583 = vlaneseq
    %v1584 = vshrl.u32 %v1583, 7
    %v1585 = vsub.s32 1, %v1584
    %v1586 = vrot.slane %v1556, %v1585
    %v1587 = vlaneseq
    %v1588 = vshrl.u32 %v1587, 7
    %v1589 = vsub.s32 2, %v1588
    %v1590 = vrot.slane %v1556, %v1589
    %v1591 = vlaneseq
    %v1592 = vshrl.u32 %v1591, 7
    %v1593 = vsub.s32 3, %v1592
    %v1594 = vrot.slane %v1556, %v1593
    %v1595 = vlaneseq
    %v1596 = vshrl.u32 %v1595, 7
    %v1597 = vsub.s32 4, %v1596
    %v1598 = vrot.slane %v1556, %v1597
    %v1609 = vsub.f32 %v683, %v1562
    %v1610 = vsub.f32 %v684, %v1566
    %v1611 = vsub.f32 %v685, %v1570
    %v1612 = vsub.f32 %v686, %v1574
    %v1613 = vsub.f32 %v687, %v1578
    %v1614 = vsub.f32 %v688, %v1582
    %v1615 = vsub.f32 %v689, %v1586
    %v1616 = vsub.f32 %v690, %v1590
    %v1617 = vsub.f32 %v691, %v1594
    %v1618 = vsub.f32 %v692, %v1598
    %v1619 = vmul.f32 %v1609, %v1609
    %v1620 = vmul.f32 %v1610, %v1610
    %v1621 = vmul.f32 %v1611, %v1611
    %v1622 = vmul.f32 %v1612, %v1612
    %v1623 = vmul.f32 %v1613, %v1613
    %v1624 = vmul.f32 %v1614, %v1614
    %v1625 = vmul.f32 %v1615, %v1615
    %v1626 = vmul.f32 %v1616, %v1616
    %v1627 = vmul.f32 %v1617, %v1617
    %v1628 = vmul.f32 %v1618, %v1618
    %v1639 = vcombine.low %v1619, %v1620
    %v1640 = vcombine.low %v1621, %v1622
    %v1642 = vunpack.c.l.s4 1966171168
    %v1643 = vunpack.c.0.s8 %v1642
    %v1644 = vlaneseq
    %v1645 = vshrl.u32 %v1644, 7
    %v1646 = vsub.s32 %v1643, %v1645
    %v1647 = vrot.slane %v1639, %v1646
    %v1649 = vunpack.c.l.s4 1966171168
    %v1650 = vunpack.c.0.s8 %v1649
    %v1651 = vlaneseq
    %v1652 = vshrl.u32 %v1651, 7
    %v1653 = vsub.s32 %v1650, %v1652
    %v1654 = vrot.slane %v1640, %v1653
    %v1656 = vunpack.c.l.s4 1966171168
    %v1657 = vunpack.c.0.s8 %v1656
    %v1658 = vlaneseq
    %v1659 = vshrl.u32 %v1658, 7
    %v1660 = vsub.s32 %v1657, %v1659
    %v1661 = vrot.slane %v1623, %v1660
    %v1662 = vcombine.low %v1647, %v1654
    %v1664 = vunpack.c.l.s4 1966171168
    %v1665 = vunpack.c.0.s8 %v1664
    %v1666 = vlaneseq
    %v1667 = vshrl.u32 %v1666, 7
    %v1668 = vsub.s32 %v1665, %v1667
    %v1669 = vrot.slane %v1662, %v1668
    %v1671 = vunpack.c.l.s4 1966171168
    %v1672 = vunpack.c.0.s8 %v1671
    %v1673 = vlaneseq
    %v1674 = vshrl.u32 %v1673, 7
    %v1675 = vsub.s32 %v1672, %v1674
    %v1676 = vrot.slane %v1661, %v1675
    %v1677 = vcombine.low %v1669, %v1676
    %v1678 = vcombine.low %v1624, %v1625
    %v1679 = vcombine.low %v1626, %v1627
    %v1681 = vunpack.c.l.s4 1966171168
    %v1682 = vunpack.c.0.s8 %v1681
    %v1683 = vlaneseq
    %v1684 = vshrl.u32 %v1683, 7
    %v1685 = vsub.s32 %v1682, %v1684
    %v1686 = vrot.slane %v1678, %v1685
    %v1688 = vunpack.c.l.s4 1966171168
    %v1689 = vunpack.c.0.s8 %v1688
    %v1690 = vlaneseq
    %v1691 = vshrl.u32 %v1690, 7
    %v1692 = vsub.s32 %v1689, %v1691
    %v1693 = vrot.slane %v1679, %v1692
    %v1695 = vunpack.c.l.s4 1966171168
    %v1696 = vunpack.c.0.s8 %v1695
    %v1697 = vlaneseq
    %v1698 = vshrl.u32 %v1697, 7
    %v1699 = vsub.s32 %v1696, %v1698
    %v1700 = vrot.slane %v1628, %v1699
    %v1701 = vcombine.low %v1686, %v1693
    %v1703 = vunpack.c.l.s4 1966171168
    %v1704 = vunpack.c.0.s8 %v1703
    %v1705 = vlaneseq
    %v1706 = vshrl.u32 %v1705, 7
    %v1707 = vsub.s32 %v1704, %v1706
    %v1708 = vrot.slane %v1701, %v1707
    %v1710 = vunpack.c.l.s4 1966171168
    %v1711 = vunpack.c.0.s8 %v1710
    %v1712 = vlaneseq
    %v1713 = vshrl.u32 %v1712, 7
    %v1714 = vsub.s32 %v1711, %v1713
    %v1715 = vrot.slane %v1700, %v1714
    %v1716 = vcombine.low %v1708, %v1715
    %1717 = vrot.lane.b32.xlu0 %v1677, 64
    %v1718 = vpop.permute.xlu0 %1717
    %1719 = vrot.lane.b32.xlu0 %v1716, 64
    %v1720 = vpop.permute.xlu0 %1719
    %v1723 = vsel %vm785, %v1718, 0.0
    %1724 = vadd.xlane.f32.xlu0 %v1723
    %v1725 = vpop.xlane.xlu0 %1724
    %v1726 = vsel %vm785, %v1720, 0.0
    %1727 = vadd.xlane.f32.xlu0 %v1726
    %v1728 = vpop.xlane.xlu0 %1727
    %v1729 = vmul.f32 %v1725, %v792
    %v1730 = vmul.f32 %v1728, %v792
    %v1731 = vadd.f32 %v1729, 1e-05
    %v1732 = vadd.f32 %v1730, 1e-05
    %v1733 = vrsqrt.pop %v1731
    %v1734 = vrsqrt.pop %v1732
    %v1737 = vlaneseq
    %v1738 = vshrl.u32 %v1737, 7
    %v1739 = vsub.s32 0, %v1738
    %v1740 = vrot.slane %v1733, %v1739
    %v1741 = vlaneseq
    %v1742 = vshrl.u32 %v1741, 7
    %v1743 = vsub.s32 1, %v1742
    %v1744 = vrot.slane %v1733, %v1743
    %v1745 = vlaneseq
    %v1746 = vshrl.u32 %v1745, 7
    %v1747 = vsub.s32 2, %v1746
    %v1748 = vrot.slane %v1733, %v1747
    %v1749 = vlaneseq
    %v1750 = vshrl.u32 %v1749, 7
    %v1751 = vsub.s32 3, %v1750
    %v1752 = vrot.slane %v1733, %v1751
    %v1753 = vlaneseq
    %v1754 = vshrl.u32 %v1753, 7
    %v1755 = vsub.s32 4, %v1754
    %v1756 = vrot.slane %v1733, %v1755
    %v1757 = vlaneseq
    %v1758 = vshrl.u32 %v1757, 7
    %v1759 = vsub.s32 0, %v1758
    %v1760 = vrot.slane %v1734, %v1759
    %v1761 = vlaneseq
    %v1762 = vshrl.u32 %v1761, 7
    %v1763 = vsub.s32 1, %v1762
    %v1764 = vrot.slane %v1734, %v1763
    %v1765 = vlaneseq
    %v1766 = vshrl.u32 %v1765, 7
    %v1767 = vsub.s32 2, %v1766
    %v1768 = vrot.slane %v1734, %v1767
    %v1769 = vlaneseq
    %v1770 = vshrl.u32 %v1769, 7
    %v1771 = vsub.s32 3, %v1770
    %v1772 = vrot.slane %v1734, %v1771
    %v1773 = vlaneseq
    %v1774 = vshrl.u32 %v1773, 7
    %v1775 = vsub.s32 4, %v1774
    %v1776 = vrot.slane %v1734, %v1775
    %v1787 = vmul.f32 %v1609, %v1740
    %v1788 = vmul.f32 %v1610, %v1744
    %v1789 = vmul.f32 %v1611, %v1748
    %v1790 = vmul.f32 %v1612, %v1752
    %v1791 = vmul.f32 %v1613, %v1756
    %v1792 = vmul.f32 %v1614, %v1760
    %v1793 = vmul.f32 %v1615, %v1764
    %v1794 = vmul.f32 %v1616, %v1768
    %v1795 = vmul.f32 %v1617, %v1772
    %v1796 = vmul.f32 %v1618, %v1776
    %v1797 = vmul.f32 %v1787, %v1058
    %v1798 = vmul.f32 %v1788, %v1072
    %v1799 = vmul.f32 %v1789, %v1073
    %v1800 = vmul.f32 %v1790, %v1074
    %v1801 = vmul.f32 %v1791, %v1065
    %v1802 = vmul.f32 %v1792, %v1058
    %v1803 = vmul.f32 %v1793, %v1072
    %v1804 = vmul.f32 %v1794, %v1073
    %v1805 = vmul.f32 %v1795, %v1074
    %v1806 = vmul.f32 %v1796, %v1065
    %v1807 = vadd.f32 %v1797, %v1117
    %v1808 = vadd.f32 %v1798, %v1131
    %v1809 = vadd.f32 %v1799, %v1132
    %v1810 = vadd.f32 %v1800, %v1133
    %v1811 = vadd.f32 %v1801, %v1124
    %v1812 = vadd.f32 %v1802, %v1117
    %v1813 = vadd.f32 %v1803, %v1131
    %v1814 = vadd.f32 %v1804, %v1132
    %v1815 = vadd.f32 %v1805, %v1133
    %v1816 = vadd.f32 %v1806, %v1124
    %v1817 = vtanh.pop %v1807
    %v1818 = vtanh.pop %v1808
    %v1819 = vtanh.pop %v1809
    %v1820 = vtanh.pop %v1810
    %v1821 = vtanh.pop %v1811
    %v1822 = vtanh.pop %v1812
    %v1823 = vtanh.pop %v1813
    %v1824 = vtanh.pop %v1814
    %v1825 = vtanh.pop %v1815
    %v1826 = vtanh.pop %v1816
    %1827 = vrot.lane.b32.xlu0 %v278, 32
    %v1828 = vpop.permute.xlu0 %1827
    %1829 = vrot.lane.b32.xlu0 %v292, 32
    %v1830 = vpop.permute.xlu0 %1829
    %1831 = vrot.lane.b32.xlu0 %v293, 32
    %v1832 = vpop.permute.xlu0 %1831
    %1833 = vrot.lane.b32.xlu0 %v294, 32
    %v1834 = vpop.permute.xlu0 %1833
    %1835 = vrot.lane.b32.xlu0 %v285, 32
    %v1836 = vpop.permute.xlu0 %1835
    %1837 = vrot.lane.b32.xlu0 %v317, 32
    %v1838 = vpop.permute.xlu0 %1837
    %1839 = vrot.lane.b32.xlu0 %v331, 32
    %v1840 = vpop.permute.xlu0 %1839
    %1841 = vrot.lane.b32.xlu0 %v332, 32
    %v1842 = vpop.permute.xlu0 %1841
    %1843 = vrot.lane.b32.xlu0 %v333, 32
    %v1844 = vpop.permute.xlu0 %1843
    %1845 = vrot.lane.b32.xlu0 %v324, 32
    %v1846 = vpop.permute.xlu0 %1845
    %v1857 = vmul.f32 %v1524, %v1828
    %v1858 = vmul.f32 %v1526, %v1830
    %v1859 = vmul.f32 %v1528, %v1832
    %v1860 = vmul.f32 %v1530, %v1834
    %v1861 = vmul.f32 %v1532, %v1836
    %v1862 = vmul.f32 %v1534, %v1838
    %v1863 = vmul.f32 %v1536, %v1840
    %v1864 = vmul.f32 %v1538, %v1842
    %v1865 = vmul.f32 %v1540, %v1844
    %v1866 = vmul.f32 %v1542, %v1846
    %1877 = vrot.lane.b32.xlu0 %v1817, 64
    %v1878 = vpop.permute.xlu0 %1877
    %1879 = vrot.lane.b32.xlu0 %v1818, 64
    %v1880 = vpop.permute.xlu0 %1879
    %1881 = vrot.lane.b32.xlu0 %v1819, 64
    %v1882 = vpop.permute.xlu0 %1881
    %1883 = vrot.lane.b32.xlu0 %v1820, 64
    %v1884 = vpop.permute.xlu0 %1883
    %1885 = vrot.lane.b32.xlu0 %v1821, 64
    %v1886 = vpop.permute.xlu0 %1885
    %1887 = vrot.lane.b32.xlu0 %v1822, 64
    %v1888 = vpop.permute.xlu0 %1887
    %1889 = vrot.lane.b32.xlu0 %v1823, 64
    %v1890 = vpop.permute.xlu0 %1889
    %1891 = vrot.lane.b32.xlu0 %v1824, 64
    %v1892 = vpop.permute.xlu0 %1891
    %1893 = vrot.lane.b32.xlu0 %v1825, 64
    %v1894 = vpop.permute.xlu0 %1893
    %1895 = vrot.lane.b32.xlu0 %v1826, 64
    %v1896 = vpop.permute.xlu0 %1895
    %v1907 = vmul.f32 %v1190, %v1878
    %v1908 = vmul.f32 %v1192, %v1880
    %v1909 = vmul.f32 %v1194, %v1882
    %v1910 = vmul.f32 %v1196, %v1884
    %v1911 = vmul.f32 %v1198, %v1886
    %v1912 = vmul.f32 %v1200, %v1888
    %v1913 = vmul.f32 %v1202, %v1890
    %v1914 = vmul.f32 %v1204, %v1892
    %v1915 = vmul.f32 %v1206, %v1894
    %v1916 = vmul.f32 %v1208, %v1896
    %1927 = vrot.lane.b32.xlu0 %v1907, 32
    %v1928 = vpop.permute.xlu0 %1927
    %1929 = vrot.lane.b32.xlu0 %v1908, 32
    %v1930 = vpop.permute.xlu0 %1929
    %1931 = vrot.lane.b32.xlu0 %v1909, 32
    %v1932 = vpop.permute.xlu0 %1931
    %1933 = vrot.lane.b32.xlu0 %v1910, 32
    %v1934 = vpop.permute.xlu0 %1933
    %1935 = vrot.lane.b32.xlu0 %v1911, 32
    %v1936 = vpop.permute.xlu0 %1935
    %1937 = vrot.lane.b32.xlu0 %v1912, 32
    %v1938 = vpop.permute.xlu0 %1937
    %1939 = vrot.lane.b32.xlu0 %v1913, 32
    %v1940 = vpop.permute.xlu0 %1939
    %1941 = vrot.lane.b32.xlu0 %v1914, 32
    %v1942 = vpop.permute.xlu0 %1941
    %1943 = vrot.lane.b32.xlu0 %v1915, 32
    %v1944 = vpop.permute.xlu0 %1943
    %1945 = vrot.lane.b32.xlu0 %v1916, 32
    %v1946 = vpop.permute.xlu0 %1945
    %v1957 = vadd.f32 %v1857, %v1928
    %v1958 = vadd.f32 %v1858, %v1930
    %v1959 = vadd.f32 %v1859, %v1932
    %v1960 = vadd.f32 %v1860, %v1934
    %v1961 = vadd.f32 %v1861, %v1936
    %v1962 = vadd.f32 %v1862, %v1938
    %v1963 = vadd.f32 %v1863, %v1940
    %v1964 = vadd.f32 %v1864, %v1942
    %v1965 = vadd.f32 %v1865, %v1944
    %v1966 = vadd.f32 %v1866, %v1946
    %v1967 = vmul.f32 %v1957, 0.95
    %v1968 = vmul.f32 %v1958, 0.95
    %v1969 = vmul.f32 %v1959, 0.95
    %v1970 = vmul.f32 %v1960, 0.95
    %v1971 = vmul.f32 %v1961, 0.95
    %v1972 = vmul.f32 %v1962, 0.95
    %v1973 = vmul.f32 %v1963, 0.95
    %v1974 = vmul.f32 %v1964, 0.95
    %v1975 = vmul.f32 %v1965, 0.95
    %v1976 = vmul.f32 %v1966, 0.95
    %v1987 = vcombine.low %v1967, %v1968
    %v1988 = vcombine.low %v1969, %v1970
    %v1990 = vunpack.c.l.s4 1966171168
    %v1991 = vunpack.c.0.s8 %v1990
    %v1992 = vlaneseq
    %v1993 = vshrl.u32 %v1992, 7
    %v1994 = vsub.s32 %v1991, %v1993
    %v1995 = vrot.slane %v1987, %v1994
    %v1997 = vunpack.c.l.s4 1966171168
    %v1998 = vunpack.c.0.s8 %v1997
    %v1999 = vlaneseq
    %v2000 = vshrl.u32 %v1999, 7
    %v2001 = vsub.s32 %v1998, %v2000
    %v2002 = vrot.slane %v1988, %v2001
    %v2004 = vunpack.c.l.s4 1966171168
    %v2005 = vunpack.c.0.s8 %v2004
    %v2006 = vlaneseq
    %v2007 = vshrl.u32 %v2006, 7
    %v2008 = vsub.s32 %v2005, %v2007
    %v2009 = vrot.slane %v1971, %v2008
    %v2010 = vcombine.low %v1995, %v2002
    %v2012 = vunpack.c.l.s4 1966171168
    %v2013 = vunpack.c.0.s8 %v2012
    %v2014 = vlaneseq
    %v2015 = vshrl.u32 %v2014, 7
    %v2016 = vsub.s32 %v2013, %v2015
    %v2017 = vrot.slane %v2010, %v2016
    %v2019 = vunpack.c.l.s4 1966171168
    %v2020 = vunpack.c.0.s8 %v2019
    %v2021 = vlaneseq
    %v2022 = vshrl.u32 %v2021, 7
    %v2023 = vsub.s32 %v2020, %v2022
    %v2024 = vrot.slane %v2009, %v2023
    %v2025 = vcombine.low %v2017, %v2024
    %v2026 = vcombine.low %v1972, %v1973
    %v2027 = vcombine.low %v1974, %v1975
    %v2029 = vunpack.c.l.s4 1966171168
    %v2030 = vunpack.c.0.s8 %v2029
    %v2031 = vlaneseq
    %v2032 = vshrl.u32 %v2031, 7
    %v2033 = vsub.s32 %v2030, %v2032
    %v2034 = vrot.slane %v2026, %v2033
    %v2036 = vunpack.c.l.s4 1966171168
    %v2037 = vunpack.c.0.s8 %v2036
    %v2038 = vlaneseq
    %v2039 = vshrl.u32 %v2038, 7
    %v2040 = vsub.s32 %v2037, %v2039
    %v2041 = vrot.slane %v2027, %v2040
    %v2043 = vunpack.c.l.s4 1966171168
    %v2044 = vunpack.c.0.s8 %v2043
    %v2045 = vlaneseq
    %v2046 = vshrl.u32 %v2045, 7
    %v2047 = vsub.s32 %v2044, %v2046
    %v2048 = vrot.slane %v1976, %v2047
    %v2049 = vcombine.low %v2034, %v2041
    %v2051 = vunpack.c.l.s4 1966171168
    %v2052 = vunpack.c.0.s8 %v2051
    %v2053 = vlaneseq
    %v2054 = vshrl.u32 %v2053, 7
    %v2055 = vsub.s32 %v2052, %v2054
    %v2056 = vrot.slane %v2049, %v2055
    %v2058 = vunpack.c.l.s4 1966171168
    %v2059 = vunpack.c.0.s8 %v2058
    %v2060 = vlaneseq
    %v2061 = vshrl.u32 %v2060, 7
    %v2062 = vsub.s32 %v2059, %v2061
    %v2063 = vrot.slane %v2048, %v2062
    %v2064 = vcombine.low %v2056, %v2063
    %2065 = vrot.lane.b32.xlu0 %v2025, 96
    %v2066 = vpop.permute.xlu0 %2065
    %2067 = vrot.lane.b32.xlu0 %v2064, 96
    %v2068 = vpop.permute.xlu0 %2067
    %2071 = vst.msk [vmem:[%s17] sm:$0x1f] %vm785, %v2066
    %2072 = vst.msk [vmem:[%s17 + $0x8] sm:$0x1f] %vm785, %v2068
    %v2073 = vld [vmem:[#allocation11] sm:$0xff]
    %v2074 = vld [vmem:[#allocation11 + $0x8] sm:$0xff]
    %v2075 = vld [vmem:[#allocation11 + $0x10] sm:$0xff]
    %v2076 = vld [vmem:[#allocation11 + $0x18] sm:$0xff]
    %v2077 = vld [vmem:[#allocation13] sm:$0x1]
    %v2079 = vlaneseq
    %v2080 = vshrl.u32 %v2079, 7
    %v2081 = vsub.s32 0, %v2080
    %v2082 = vrot.slane %v2077, %v2081
    %v2084 = vcombine.low %v1971, %v1972
    %v2085 = vcombine.low %v1973, %v1974
    %v2087 = vunpack.c.l.s4 1966171168
    %v2088 = vunpack.c.0.s8 %v2087
    %v2089 = vlaneseq
    %v2090 = vshrl.u32 %v2089, 7
    %v2091 = vsub.s32 %v2088, %v2090
    %v2092 = vrot.slane %v2084, %v2091
    %v2094 = vunpack.c.l.s4 1966171168
    %v2095 = vunpack.c.0.s8 %v2094
    %v2096 = vlaneseq
    %v2097 = vshrl.u32 %v2096, 7
    %v2098 = vsub.s32 %v2095, %v2097
    %v2099 = vrot.slane %v2085, %v2098
    %v2100 = vcombine.low %v2092, %v2099
    %v2102 = vunpack.c.l.s4 1966171168
    %v2103 = vunpack.c.0.s8 %v2102
    %v2104 = vlaneseq
    %v2105 = vshrl.u32 %v2104, 7
    %v2106 = vsub.s32 %v2103, %v2105
    %v2107 = vrot.slane %v2100, %v2106
    %v2108 = vcombine.low %v2017, %v2107
    %v2109 = vcombine.low %v1975, %v1976
    %v2111 = vunpack.c.l.s4 1966171168
    %v2112 = vunpack.c.0.s8 %v2111
    %v2113 = vlaneseq
    %v2114 = vshrl.u32 %v2113, 7
    %v2115 = vsub.s32 %v2112, %v2114
    %v2116 = vrot.slane %v2109, %v2115
    %v2118 = vunpack.c.l.s4 1966171168
    %v2119 = vunpack.c.0.s8 %v2118
    %v2120 = vlaneseq
    %v2121 = vshrl.u32 %v2120, 7
    %v2122 = vsub.s32 %v2119, %v2121
    %v2123 = vrot.slane %v2116, %v2122
    %2124 = vrot.lane.b32.xlu0 %v2108, 96
    %v2125 = vpop.permute.xlu0 %2124
    %2126 = vrot.lane.b32.xlu0 %v2123, 96
    %v2127 = vpop.permute.xlu0 %2126
    %v2128 = vsel %vm178, %v2125, 0
    %v2130 = vsel %vm178, %v2127, 0
    %2132 = vmatprep.subr.mxu0 0.0
    %2133 = vmatpush1.msra.mxu0 0.0
    %2134 = vmatprep.subr.mxu0 0.0
    %2135 = vmatpush1.msra.mxu0 0.0
    %2136 = vmatprep.subr.mxu0 0.0
    %2137 = vmatpush1.msra.mxu0 0.0
    %2138 = vmatprep.subr.mxu0 0.0
    %2139 = vmatpush1.msra.mxu0 0.0
    %2140 = vmatprep.subr.mxu0 0.0
    %2141 = vmatpush1.msra.mxu0 0.0
    %2142 = vmatprep.subr.mxu0 0.0
    %2143 = vmatpush1.msra.mxu0 0.0
    %2144 = vmatprep.subr.mxu0 0.0
    %2145 = vmatpush1.msra.mxu0 0.0
    %2146 = vmatprep.subr.mxu0 0.0
    %2147 = vmatpush1.msra.mxu0 0.0
    %2148 = vmatprep.subr.mxu0 0.0
    %2149 = vmatpush1.msra.mxu0 0.0
    %2150 = vmatprep.subr.mxu0 0.0
    %2151 = vmatpush1.msra.mxu0 0.0
    %2152 = vmatprep.subr.mxu0 0.0
    %2153 = vmatpush1.msra.mxu0 0.0
    %2154 = vmatprep.subr.mxu0 0.0
    %2155 = vmatpush1.msra.mxu0 0.0
    %2156 = vmatprep.subr.mxu0 0.0
    %2157 = vmatpush1.msra.mxu0 %v2076
    %2158 = vmatprep.subr.mxu0 0.0
    %2159 = vmatpush1.msra.mxu0 %v2075
    %2160 = vmatprep.subr.mxu0 0.0
    %2161 = vmatpush1.msra.mxu0 %v2074
    %2162 = vmatprep.subr.mxu0 0.0
    %2163 = vmatpush1.msra.mxu0 %v2073
    %2164 = vmatprep.subr.mxu0 0.0
    %2165 = vmatpush2.msra.mxu0 0.0
    %2166 = vmatprep.subr.mxu0 0.0
    %2167 = vmatpush2.msra.mxu0 0.0
    %2168 = vmatprep.subr.mxu0 0.0
    %2169 = vmatpush2.msra.mxu0 0.0
    %2170 = vmatprep.subr.mxu0 0.0
    %2171 = vmatpush2.msra.mxu0 0.0
    %2172 = vmatprep.subr.mxu0 0.0
    %2173 = vmatpush2.msra.mxu0 0.0
    %2174 = vmatprep.subr.mxu0 0.0
    %2175 = vmatpush2.msra.mxu0 0.0
    %2176 = vmatprep.subr.mxu0 0.0
    %2177 = vmatpush2.msra.mxu0 0.0
    %2178 = vmatprep.subr.mxu0 0.0
    %2179 = vmatpush2.msra.mxu0 0.0
    %2180 = vmatprep.subr.mxu0 0.0
    %2181 = vmatpush2.msra.mxu0 0.0
    %2182 = vmatprep.subr.mxu0 0.0
    %2183 = vmatpush2.msra.mxu0 0.0
    %2184 = vmatprep.subr.mxu0 0.0
    %2185 = vmatpush2.msra.mxu0 0.0
    %2186 = vmatprep.subr.mxu0 0.0
    %2187 = vmatpush2.msra.mxu0 0.0
    %2188 = vmatprep.subr.mxu0 0.0
    %2189 = vmatpush2.msra.mxu0 0.0
    %2190 = vmatprep.subr.mxu0 0.0
    %2191 = vmatpush2.msra.mxu0 0.0
    %2192 = vmatprep.subr.mxu0 0.0
    %2193 = vmatpush2.msra.mxu0 0.0
    %2194 = vmatprep.subr.mxu0 0.0
    %2195 = vmatpush2.msra.mxu0 0.0
    %2196 = vmatprep.mubr.f32.mxu0 0.0
    %2197 = vmatmul.mubr.f32.gmra.mxu0 %v2128
    %v2198 = vpop.f32.mrf.mxu0
    %v2199 = vadd.f32 %v2082, %v2198
    %v2200 = vpop.f32.mrf.mxu0
    %2201 = vmatprep.mubr.f32.mxu0 0.0
    %2202 = vmatmul.mubr.f32.gmra.mxu0 %v2130
    %v2203 = vpop.f32.mrf.mxu0
    %v2204 = vadd.f32 %v2082, %v2203
    %v2205 = vpop.f32.mrf.mxu0
    %2206 = vdwg.mxu0
    %v2209 = vcombine.high %v2199, %v2199
    %v2211 = vunpack.c.l.s4 1966171168
    %v2212 = vunpack.c.0.s8 %v2211
    %v2213 = vlaneseq
    %v2214 = vshrl.u32 %v2213, 7
    %v2215 = vsub.s32 %v2212, %v2214
    %v2216 = vrot.slane %v2199, %v2215
    %v2218 = vunpack.c.l.s4 1966171168
    %v2219 = vunpack.c.0.s8 %v2218
    %v2220 = vlaneseq
    %v2221 = vshrl.u32 %v2220, 7
    %v2222 = vsub.s32 %v2219, %v2221
    %v2223 = vrot.slane %v2209, %v2222
    %v2224 = vcombine.high %v2216, %v2216
    %v2225 = vcombine.high %v2223, %v2223
    %v2227 = vunpack.c.l.s4 1966171168
    %v2228 = vunpack.c.0.s8 %v2227
    %v2229 = vlaneseq
    %v2230 = vshrl.u32 %v2229, 7
    %v2231 = vsub.s32 %v2228, %v2230
    %v2232 = vrot.slane %v2216, %v2231
    %v2234 = vunpack.c.l.s4 1966171168
    %v2235 = vunpack.c.0.s8 %v2234
    %v2236 = vlaneseq
    %v2237 = vshrl.u32 %v2236, 7
    %v2238 = vsub.s32 %v2235, %v2237
    %v2239 = vrot.slane %v2223, %v2238
    %v2241 = vunpack.c.l.s4 1966171168
    %v2242 = vunpack.c.0.s8 %v2241
    %v2243 = vlaneseq
    %v2244 = vshrl.u32 %v2243, 7
    %v2245 = vsub.s32 %v2242, %v2244
    %v2246 = vrot.slane %v2224, %v2245
    %v2248 = vunpack.c.l.s4 1966171168
    %v2249 = vunpack.c.0.s8 %v2248
    %v2250 = vlaneseq
    %v2251 = vshrl.u32 %v2250, 7
    %v2252 = vsub.s32 %v2249, %v2251
    %v2253 = vrot.slane %v2225, %v2252
    %v2254 = vcombine.high %v2232, %v2232
    %v2255 = vcombine.high %v2239, %v2239
    %v2256 = vcombine.high %v2246, %v2246
    %v2257 = vcombine.high %v2253, %v2253
    %v2259 = vunpack.c.l.s4 1966171168
    %v2260 = vunpack.c.0.s8 %v2259
    %v2261 = vlaneseq
    %v2262 = vshrl.u32 %v2261, 7
    %v2263 = vsub.s32 %v2260, %v2262
    %v2264 = vrot.slane %v2204, %v2263
    %v2265 = vcombine.high %v2264, %v2264
    %v2267 = vunpack.c.l.s4 1966171168
    %v2268 = vunpack.c.0.s8 %v2267
    %v2269 = vlaneseq
    %v2270 = vshrl.u32 %v2269, 7
    %v2271 = vsub.s32 %v2268, %v2270
    %v2272 = vrot.slane %v2264, %v2271
    %v2274 = vunpack.c.l.s4 1966171168
    %v2275 = vunpack.c.0.s8 %v2274
    %v2276 = vlaneseq
    %v2277 = vshrl.u32 %v2276, 7
    %v2278 = vsub.s32 %v2275, %v2277
    %v2279 = vrot.slane %v2265, %v2278
    %v2282 = vcombine.low %v2232, %v2246
    %v2283 = vcombine.low %v2254, %v2256
    %v2285 = vunpack.c.l.s4 1966171168
    %v2286 = vunpack.c.0.s8 %v2285
    %v2287 = vlaneseq
    %v2288 = vshrl.u32 %v2287, 7
    %v2289 = vsub.s32 %v2286, %v2288
    %v2290 = vrot.slane %v2282, %v2289
    %v2292 = vunpack.c.l.s4 1966171168
    %v2293 = vunpack.c.0.s8 %v2292
    %v2294 = vlaneseq
    %v2295 = vshrl.u32 %v2294, 7
    %v2296 = vsub.s32 %v2293, %v2295
    %v2297 = vrot.slane %v2283, %v2296
    %v2299 = vunpack.c.l.s4 1966171168
    %v2300 = vunpack.c.0.s8 %v2299
    %v2301 = vlaneseq
    %v2302 = vshrl.u32 %v2301, 7
    %v2303 = vsub.s32 %v2300, %v2302
    %v2304 = vrot.slane %v2239, %v2303
    %v2305 = vcombine.low %v2290, %v2297
    %v2307 = vunpack.c.l.s4 1966171168
    %v2308 = vunpack.c.0.s8 %v2307
    %v2309 = vlaneseq
    %v2310 = vshrl.u32 %v2309, 7
    %v2311 = vsub.s32 %v2308, %v2310
    %v2312 = vrot.slane %v2305, %v2311
    %v2314 = vunpack.c.l.s4 1966171168
    %v2315 = vunpack.c.0.s8 %v2314
    %v2316 = vlaneseq
    %v2317 = vshrl.u32 %v2316, 7
    %v2318 = vsub.s32 %v2315, %v2317
    %v2319 = vrot.slane %v2304, %v2318
    %v2320 = vcombine.low %v2312, %v2319
    %v2321 = vcombine.low %v2253, %v2255
    %v2322 = vcombine.low %v2257, %v2272
    %v2324 = vunpack.c.l.s4 1966171168
    %v2325 = vunpack.c.0.s8 %v2324
    %v2326 = vlaneseq
    %v2327 = vshrl.u32 %v2326, 7
    %v2328 = vsub.s32 %v2325, %v2327
    %v2329 = vrot.slane %v2321, %v2328
    %v2331 = vunpack.c.l.s4 1966171168
    %v2332 = vunpack.c.0.s8 %v2331
    %v2333 = vlaneseq
    %v2334 = vshrl.u32 %v2333, 7
    %v2335 = vsub.s32 %v2332, %v2334
    %v2336 = vrot.slane %v2322, %v2335
    %v2338 = vunpack.c.l.s4 1966171168
    %v2339 = vunpack.c.0.s8 %v2338
    %v2340 = vlaneseq
    %v2341 = vshrl.u32 %v2340, 7
    %v2342 = vsub.s32 %v2339, %v2341
    %v2343 = vrot.slane %v2279, %v2342
    %v2344 = vcombine.low %v2329, %v2336
    %v2346 = vunpack.c.l.s4 1966171168
    %v2347 = vunpack.c.0.s8 %v2346
    %v2348 = vlaneseq
    %v2349 = vshrl.u32 %v2348, 7
    %v2350 = vsub.s32 %v2347, %v2349
    %v2351 = vrot.slane %v2344, %v2350
    %v2353 = vunpack.c.l.s4 1966171168
    %v2354 = vunpack.c.0.s8 %v2353
    %v2355 = vlaneseq
    %v2356 = vshrl.u32 %v2355, 7
    %v2357 = vsub.s32 %v2354, %v2356
    %v2358 = vrot.slane %v2343, %v2357
    %v2359 = vcombine.low %v2351, %v2358
    %2360 = vrot.lane.b32.xlu0 %v2320, 96
    %v2361 = vpop.permute.xlu0 %2360
    %2362 = vrot.lane.b32.xlu0 %v2359, 96
    %v2363 = vpop.permute.xlu0 %2362
    %v2366 = vmul.f32 %v590, %v2361
    %v2367 = vmul.f32 %v594, %v2363
    %v2370 = vcombine.high %v2366, %v2366
    %v2372 = vunpack.c.l.s4 1966171168
    %v2373 = vunpack.c.0.s8 %v2372
    %v2374 = vlaneseq
    %v2375 = vshrl.u32 %v2374, 7
    %v2376 = vsub.s32 %v2373, %v2375
    %v2377 = vrot.slane %v2366, %v2376
    %v2379 = vunpack.c.l.s4 1966171168
    %v2380 = vunpack.c.0.s8 %v2379
    %v2381 = vlaneseq
    %v2382 = vshrl.u32 %v2381, 7
    %v2383 = vsub.s32 %v2380, %v2382
    %v2384 = vrot.slane %v2370, %v2383
    %v2385 = vcombine.high %v2377, %v2377
    %v2387 = vunpack.c.l.s4 1966171168
    %v2388 = vunpack.c.0.s8 %v2387
    %v2389 = vlaneseq
    %v2390 = vshrl.u32 %v2389, 7
    %v2391 = vsub.s32 %v2388, %v2390
    %v2392 = vrot.slane %v2377, %v2391
    %v2394 = vunpack.c.l.s4 1966171168
    %v2395 = vunpack.c.0.s8 %v2394
    %v2396 = vlaneseq
    %v2397 = vshrl.u32 %v2396, 7
    %v2398 = vsub.s32 %v2395, %v2397
    %v2399 = vrot.slane %v2384, %v2398
    %v2401 = vunpack.c.l.s4 1966171168
    %v2402 = vunpack.c.0.s8 %v2401
    %v2403 = vlaneseq
    %v2404 = vshrl.u32 %v2403, 7
    %v2405 = vsub.s32 %v2402, %v2404
    %v2406 = vrot.slane %v2385, %v2405
    %v2407 = vcombine.high %v2392, %v2392
    %v2408 = vcombine.high %v2406, %v2406
    %v2409 = vcombine.high %v2367, %v2367
    %v2411 = vunpack.c.l.s4 1966171168
    %v2412 = vunpack.c.0.s8 %v2411
    %v2413 = vlaneseq
    %v2414 = vshrl.u32 %v2413, 7
    %v2415 = vsub.s32 %v2412, %v2414
    %v2416 = vrot.slane %v2367, %v2415
    %v2418 = vunpack.c.l.s4 1966171168
    %v2419 = vunpack.c.0.s8 %v2418
    %v2420 = vlaneseq
    %v2421 = vshrl.u32 %v2420, 7
    %v2422 = vsub.s32 %v2419, %v2421
    %v2423 = vrot.slane %v2409, %v2422
    %v2424 = vcombine.high %v2416, %v2416
    %v2426 = vunpack.c.l.s4 1966171168
    %v2427 = vunpack.c.0.s8 %v2426
    %v2428 = vlaneseq
    %v2429 = vshrl.u32 %v2428, 7
    %v2430 = vsub.s32 %v2427, %v2429
    %v2431 = vrot.slane %v2416, %v2430
    %v2433 = vunpack.c.l.s4 1966171168
    %v2434 = vunpack.c.0.s8 %v2433
    %v2435 = vlaneseq
    %v2436 = vshrl.u32 %v2435, 7
    %v2437 = vsub.s32 %v2434, %v2436
    %v2438 = vrot.slane %v2423, %v2437
    %v2440 = vunpack.c.l.s4 1966171168
    %v2441 = vunpack.c.0.s8 %v2440
    %v2442 = vlaneseq
    %v2443 = vshrl.u32 %v2442, 7
    %v2444 = vsub.s32 %v2441, %v2443
    %v2445 = vrot.slane %v2424, %v2444
    %v2446 = vcombine.high %v2431, %v2431
    %v2447 = vcombine.high %v2445, %v2445
    %v2448 = vld [vmem:[%s9] sm:$0xff]
    %v2449 = vld [vmem:[%s9 + $0x8] sm:$0xff]
    %v2450 = vld [vmem:[%s9 + $0x10] sm:$0xff]
    %v2451 = vld [vmem:[%s9 + $0x18] sm:$0xff]
    %v2452 = vcombine.low %v2392, %v2406
    %v2453 = vcombine.low %v2407, %v2408
    %v2454 = vcombine.low %v2399, %v2431
    %v2455 = vcombine.low %v2445, %v2446
    %v2457 = vunpack.c.l.s4 1966171168
    %v2458 = vunpack.c.0.s8 %v2457
    %v2459 = vlaneseq
    %v2460 = vshrl.u32 %v2459, 7
    %v2461 = vsub.s32 %v2458, %v2460
    %v2462 = vrot.slane %v2452, %v2461
    %v2464 = vunpack.c.l.s4 1966171168
    %v2465 = vunpack.c.0.s8 %v2464
    %v2466 = vlaneseq
    %v2467 = vshrl.u32 %v2466, 7
    %v2468 = vsub.s32 %v2465, %v2467
    %v2469 = vrot.slane %v2453, %v2468
    %v2471 = vunpack.c.l.s4 1966171168
    %v2472 = vunpack.c.0.s8 %v2471
    %v2473 = vlaneseq
    %v2474 = vshrl.u32 %v2473, 7
    %v2475 = vsub.s32 %v2472, %v2474
    %v2476 = vrot.slane %v2454, %v2475
    %v2478 = vunpack.c.l.s4 1966171168
    %v2479 = vunpack.c.0.s8 %v2478
    %v2480 = vlaneseq
    %v2481 = vshrl.u32 %v2480, 7
    %v2482 = vsub.s32 %v2479, %v2481
    %v2483 = vrot.slane %v2455, %v2482
    %v2484 = vcombine.low %v2462, %v2469
    %v2485 = vcombine.low %v2476, %v2483
    %v2487 = vunpack.c.l.s4 1966171168
    %v2488 = vunpack.c.0.s8 %v2487
    %v2489 = vlaneseq
    %v2490 = vshrl.u32 %v2489, 7
    %v2491 = vsub.s32 %v2488, %v2490
    %v2492 = vrot.slane %v2484, %v2491
    %v2494 = vunpack.c.l.s4 1966171168
    %v2495 = vunpack.c.0.s8 %v2494
    %v2496 = vlaneseq
    %v2497 = vshrl.u32 %v2496, 7
    %v2498 = vsub.s32 %v2495, %v2497
    %v2499 = vrot.slane %v2485, %v2498
    %v2500 = vcombine.low %v2492, %v2499
    %v2501 = vcombine.low %v2447, %v2438
    %v2503 = vunpack.c.l.s4 1966171168
    %v2504 = vunpack.c.0.s8 %v2503
    %v2505 = vlaneseq
    %v2506 = vshrl.u32 %v2505, 7
    %v2507 = vsub.s32 %v2504, %v2506
    %v2508 = vrot.slane %v2501, %v2507
    %v2510 = vunpack.c.l.s4 1966171168
    %v2511 = vunpack.c.0.s8 %v2510
    %v2512 = vlaneseq
    %v2513 = vshrl.u32 %v2512, 7
    %v2514 = vsub.s32 %v2511, %v2513
    %v2515 = vrot.slane %v2508, %v2514
    %2516 = vrot.lane.b32.xlu0 %v2500, 32
    %v2517 = vpop.permute.xlu0 %2516
    %2518 = vrot.lane.b32.xlu0 %v2515, 32
    %v2519 = vpop.permute.xlu0 %2518
    %v2520 = vsel %vm178, %v2517, 0
    %v2522 = vsel %vm178, %v2519, 0
    %2524 = vmatprep.subr.mxu0 0.0
    %2525 = vmatpush1.msra.mxu0 0.0
    %2526 = vmatprep.subr.mxu0 0.0
    %2527 = vmatpush1.msra.mxu0 0.0
    %2528 = vmatprep.subr.mxu0 0.0
    %2529 = vmatpush1.msra.mxu0 0.0
    %2530 = vmatprep.subr.mxu0 0.0
    %2531 = vmatpush1.msra.mxu0 0.0
    %2532 = vmatprep.subr.mxu0 0.0
    %2533 = vmatpush1.msra.mxu0 0.0
    %2534 = vmatprep.subr.mxu0 0.0
    %2535 = vmatpush1.msra.mxu0 0.0
    %2536 = vmatprep.subr.mxu0 0.0
    %2537 = vmatpush1.msra.mxu0 0.0
    %2538 = vmatprep.subr.mxu0 0.0
    %2539 = vmatpush1.msra.mxu0 0.0
    %2540 = vmatprep.subr.mxu0 0.0
    %2541 = vmatpush1.msra.mxu0 0.0
    %2542 = vmatprep.subr.mxu0 0.0
    %2543 = vmatpush1.msra.mxu0 0.0
    %2544 = vmatprep.subr.mxu0 0.0
    %2545 = vmatpush1.msra.mxu0 0.0
    %2546 = vmatprep.subr.mxu0 0.0
    %2547 = vmatpush1.msra.mxu0 0.0
    %2548 = vmatprep.subr.mxu0 0.0
    %2549 = vmatpush1.msra.mxu0 %v2451
    %2550 = vmatprep.subr.mxu0 0.0
    %2551 = vmatpush1.msra.mxu0 %v2450
    %2552 = vmatprep.subr.mxu0 0.0
    %2553 = vmatpush1.msra.mxu0 %v2449
    %2554 = vmatprep.subr.mxu0 0.0
    %2555 = vmatpush1.msra.mxu0 %v2448
    %2556 = vmatprep.subr.mxu0 0.0
    %2557 = vmatpush2.msra.mxu0 0.0
    %2558 = vmatprep.subr.mxu0 0.0
    %2559 = vmatpush2.msra.mxu0 0.0
    %2560 = vmatprep.subr.mxu0 0.0
    %2561 = vmatpush2.msra.mxu0 0.0
    %2562 = vmatprep.subr.mxu0 0.0
    %2563 = vmatpush2.msra.mxu0 0.0
    %2564 = vmatprep.subr.mxu0 0.0
    %2565 = vmatpush2.msra.mxu0 0.0
    %2566 = vmatprep.subr.mxu0 0.0
    %2567 = vmatpush2.msra.mxu0 0.0
    %2568 = vmatprep.subr.mxu0 0.0
    %2569 = vmatpush2.msra.mxu0 0.0
    %2570 = vmatprep.subr.mxu0 0.0
    %2571 = vmatpush2.msra.mxu0 0.0
    %2572 = vmatprep.subr.mxu0 0.0
    %2573 = vmatpush2.msra.mxu0 0.0
    %2574 = vmatprep.subr.mxu0 0.0
    %2575 = vmatpush2.msra.mxu0 0.0
    %2576 = vmatprep.subr.mxu0 0.0
    %2577 = vmatpush2.msra.mxu0 0.0
    %2578 = vmatprep.subr.mxu0 0.0
    %2579 = vmatpush2.msra.mxu0 0.0
    %2580 = vmatprep.subr.mxu0 0.0
    %2581 = vmatpush2.msra.mxu0 0.0
    %2582 = vmatprep.subr.mxu0 0.0
    %2583 = vmatpush2.msra.mxu0 0.0
    %2584 = vmatprep.subr.mxu0 0.0
    %2585 = vmatpush2.msra.mxu0 0.0
    %2586 = vmatprep.subr.mxu0 0.0
    %2587 = vmatpush2.msra.mxu0 0.0
    %2588 = vmatprep.mubr.f32.mxu0 0.0
    %2589 = vmatmul.mubr.f32.gmra.mxu0 %v2520
    %v2590 = vpop.f32.mrf.mxu0
    %v2591 = vadd.f32 0.0, %v2590
    %v2592 = vpop.f32.mrf.mxu0
    %2593 = vmatprep.mubr.f32.mxu0 0.0
    %2594 = vmatmul.mubr.f32.gmra.mxu0 %v2522
    %v2595 = vpop.f32.mrf.mxu0
    %v2596 = vadd.f32 0.0, %v2595
    %v2597 = vpop.f32.mrf.mxu0
    %2598 = vdwg.mxu0
    %v2601 = vcombine.high %v2591, %v2591
    %v2603 = vunpack.c.l.s4 1966171168
    %v2604 = vunpack.c.0.s8 %v2603
    %v2605 = vlaneseq
    %v2606 = vshrl.u32 %v2605, 7
    %v2607 = vsub.s32 %v2604, %v2606
    %v2608 = vrot.slane %v2591, %v2607
    %v2610 = vunpack.c.l.s4 1966171168
    %v2611 = vunpack.c.0.s8 %v2610
    %v2612 = vlaneseq
    %v2613 = vshrl.u32 %v2612, 7
    %v2614 = vsub.s32 %v2611, %v2613
    %v2615 = vrot.slane %v2601, %v2614
    %v2616 = vcombine.high %v2608, %v2608
    %v2617 = vcombine.high %v2615, %v2615
    %v2619 = vunpack.c.l.s4 1966171168
    %v2620 = vunpack.c.0.s8 %v2619
    %v2621 = vlaneseq
    %v2622 = vshrl.u32 %v2621, 7
    %v2623 = vsub.s32 %v2620, %v2622
    %v2624 = vrot.slane %v2608, %v2623
    %v2626 = vunpack.c.l.s4 1966171168
    %v2627 = vunpack.c.0.s8 %v2626
    %v2628 = vlaneseq
    %v2629 = vshrl.u32 %v2628, 7
    %v2630 = vsub.s32 %v2627, %v2629
    %v2631 = vrot.slane %v2615, %v2630
    %v2633 = vunpack.c.l.s4 1966171168
    %v2634 = vunpack.c.0.s8 %v2633
    %v2635 = vlaneseq
    %v2636 = vshrl.u32 %v2635, 7
    %v2637 = vsub.s32 %v2634, %v2636
    %v2638 = vrot.slane %v2616, %v2637
    %v2640 = vunpack.c.l.s4 1966171168
    %v2641 = vunpack.c.0.s8 %v2640
    %v2642 = vlaneseq
    %v2643 = vshrl.u32 %v2642, 7
    %v2644 = vsub.s32 %v2641, %v2643
    %v2645 = vrot.slane %v2617, %v2644
    %v2646 = vcombine.high %v2624, %v2624
    %v2647 = vcombine.high %v2631, %v2631
    %v2648 = vcombine.high %v2638, %v2638
    %v2649 = vcombine.high %v2645, %v2645
    %v2651 = vunpack.c.l.s4 1966171168
    %v2652 = vunpack.c.0.s8 %v2651
    %v2653 = vlaneseq
    %v2654 = vshrl.u32 %v2653, 7
    %v2655 = vsub.s32 %v2652, %v2654
    %v2656 = vrot.slane %v2596, %v2655
    %v2657 = vcombine.high %v2656, %v2656
    %v2659 = vunpack.c.l.s4 1966171168
    %v2660 = vunpack.c.0.s8 %v2659
    %v2661 = vlaneseq
    %v2662 = vshrl.u32 %v2661, 7
    %v2663 = vsub.s32 %v2660, %v2662
    %v2664 = vrot.slane %v2656, %v2663
    %v2666 = vunpack.c.l.s4 1966171168
    %v2667 = vunpack.c.0.s8 %v2666
    %v2668 = vlaneseq
    %v2669 = vshrl.u32 %v2668, 7
    %v2670 = vsub.s32 %v2667, %v2669
    %v2671 = vrot.slane %v2657, %v2670
    %v2682 = vcombine.low %v2624, %v2638
    %v2683 = vcombine.low %v2646, %v2648
    %v2685 = vunpack.c.l.s4 1966171168
    %v2686 = vunpack.c.0.s8 %v2685
    %v2687 = vlaneseq
    %v2688 = vshrl.u32 %v2687, 7
    %v2689 = vsub.s32 %v2686, %v2688
    %v2690 = vrot.slane %v2682, %v2689
    %v2692 = vunpack.c.l.s4 1966171168
    %v2693 = vunpack.c.0.s8 %v2692
    %v2694 = vlaneseq
    %v2695 = vshrl.u32 %v2694, 7
    %v2696 = vsub.s32 %v2693, %v2695
    %v2697 = vrot.slane %v2683, %v2696
    %v2699 = vunpack.c.l.s4 1966171168
    %v2700 = vunpack.c.0.s8 %v2699
    %v2701 = vlaneseq
    %v2702 = vshrl.u32 %v2701, 7
    %v2703 = vsub.s32 %v2700, %v2702
    %v2704 = vrot.slane %v2631, %v2703
    %v2705 = vcombine.low %v2690, %v2697
    %v2707 = vunpack.c.l.s4 1966171168
    %v2708 = vunpack.c.0.s8 %v2707
    %v2709 = vlaneseq
    %v2710 = vshrl.u32 %v2709, 7
    %v2711 = vsub.s32 %v2708, %v2710
    %v2712 = vrot.slane %v2705, %v2711
    %v2714 = vunpack.c.l.s4 1966171168
    %v2715 = vunpack.c.0.s8 %v2714
    %v2716 = vlaneseq
    %v2717 = vshrl.u32 %v2716, 7
    %v2718 = vsub.s32 %v2715, %v2717
    %v2719 = vrot.slane %v2704, %v2718
    %v2720 = vcombine.low %v2712, %v2719
    %v2721 = vcombine.low %v2645, %v2647
    %v2722 = vcombine.low %v2649, %v2664
    %v2724 = vunpack.c.l.s4 1966171168
    %v2725 = vunpack.c.0.s8 %v2724
    %v2726 = vlaneseq
    %v2727 = vshrl.u32 %v2726, 7
    %v2728 = vsub.s32 %v2725, %v2727
    %v2729 = vrot.slane %v2721, %v2728
    %v2731 = vunpack.c.l.s4 1966171168
    %v2732 = vunpack.c.0.s8 %v2731
    %v2733 = vlaneseq
    %v2734 = vshrl.u32 %v2733, 7
    %v2735 = vsub.s32 %v2732, %v2734
    %v2736 = vrot.slane %v2722, %v2735
    %v2738 = vunpack.c.l.s4 1966171168
    %v2739 = vunpack.c.0.s8 %v2738
    %v2740 = vlaneseq
    %v2741 = vshrl.u32 %v2740, 7
    %v2742 = vsub.s32 %v2739, %v2741
    %v2743 = vrot.slane %v2671, %v2742
    %v2744 = vcombine.low %v2729, %v2736
    %v2746 = vunpack.c.l.s4 1966171168
    %v2747 = vunpack.c.0.s8 %v2746
    %v2748 = vlaneseq
    %v2749 = vshrl.u32 %v2748, 7
    %v2750 = vsub.s32 %v2747, %v2749
    %v2751 = vrot.slane %v2744, %v2750
    %v2753 = vunpack.c.l.s4 1966171168
    %v2754 = vunpack.c.0.s8 %v2753
    %v2755 = vlaneseq
    %v2756 = vshrl.u32 %v2755, 7
    %v2757 = vsub.s32 %v2754, %v2756
    %v2758 = vrot.slane %v2743, %v2757
    %v2759 = vcombine.low %v2751, %v2758
    %vm2762 = vcmask 28672
    %v2763 = vsel %vm2762, %v2720, -inf
    %v2764 = vrot.slane %v2763, 4
    %v2765 = vmax.f32 %v2763, %v2764
    %v2766 = vrot.slane %v2765, 2
    %v2767 = vmax.f32 %v2765, %v2766
    %v2768 = vrot.slane %v2767, 1
    %v2769 = vmax.f32 %v2767, %v2768
    %v2770 = vsel %vm2762, %v2759, -inf
    %v2771 = vrot.slane %v2770, 4
    %v2772 = vmax.f32 %v2770, %v2771
    %v2773 = vrot.slane %v2772, 2
    %v2774 = vmax.f32 %v2772, %v2773
    %v2775 = vrot.slane %v2774, 1
    %v2776 = vmax.f32 %v2774, %v2775
    %v2779 = vcombine.high %v2769, %v2769
    %v2781 = vunpack.c.l.s4 1966171168
    %v2782 = vunpack.c.0.s8 %v2781
    %v2783 = vlaneseq
    %v2784 = vshrl.u32 %v2783, 7
    %v2785 = vsub.s32 %v2782, %v2784
    %v2786 = vrot.slane %v2769, %v2785
    %v2788 = vunpack.c.l.s4 1966171168
    %v2789 = vunpack.c.0.s8 %v2788
    %v2790 = vlaneseq
    %v2791 = vshrl.u32 %v2790, 7
    %v2792 = vsub.s32 %v2789, %v2791
    %v2793 = vrot.slane %v2779, %v2792
    %v2794 = vcombine.high %v2786, %v2786
    %v2796 = vunpack.c.l.s4 1966171168
    %v2797 = vunpack.c.0.s8 %v2796
    %v2798 = vlaneseq
    %v2799 = vshrl.u32 %v2798, 7
    %v2800 = vsub.s32 %v2797, %v2799
    %v2801 = vrot.slane %v2786, %v2800
    %v2803 = vunpack.c.l.s4 1966171168
    %v2804 = vunpack.c.0.s8 %v2803
    %v2805 = vlaneseq
    %v2806 = vshrl.u32 %v2805, 7
    %v2807 = vsub.s32 %v2804, %v2806
    %v2808 = vrot.slane %v2793, %v2807
    %v2810 = vunpack.c.l.s4 1966171168
    %v2811 = vunpack.c.0.s8 %v2810
    %v2812 = vlaneseq
    %v2813 = vshrl.u32 %v2812, 7
    %v2814 = vsub.s32 %v2811, %v2813
    %v2815 = vrot.slane %v2794, %v2814
    %v2816 = vcombine.high %v2801, %v2801
    %v2817 = vcombine.high %v2815, %v2815
    %v2818 = vcombine.high %v2776, %v2776
    %v2820 = vunpack.c.l.s4 1966171168
    %v2821 = vunpack.c.0.s8 %v2820
    %v2822 = vlaneseq
    %v2823 = vshrl.u32 %v2822, 7
    %v2824 = vsub.s32 %v2821, %v2823
    %v2825 = vrot.slane %v2776, %v2824
    %v2827 = vunpack.c.l.s4 1966171168
    %v2828 = vunpack.c.0.s8 %v2827
    %v2829 = vlaneseq
    %v2830 = vshrl.u32 %v2829, 7
    %v2831 = vsub.s32 %v2828, %v2830
    %v2832 = vrot.slane %v2818, %v2831
    %v2833 = vcombine.high %v2825, %v2825
    %v2835 = vunpack.c.l.s4 1966171168
    %v2836 = vunpack.c.0.s8 %v2835
    %v2837 = vlaneseq
    %v2838 = vshrl.u32 %v2837, 7
    %v2839 = vsub.s32 %v2836, %v2838
    %v2840 = vrot.slane %v2825, %v2839
    %v2842 = vunpack.c.l.s4 1966171168
    %v2843 = vunpack.c.0.s8 %v2842
    %v2844 = vlaneseq
    %v2845 = vshrl.u32 %v2844, 7
    %v2846 = vsub.s32 %v2843, %v2845
    %v2847 = vrot.slane %v2832, %v2846
    %v2849 = vunpack.c.l.s4 1966171168
    %v2850 = vunpack.c.0.s8 %v2849
    %v2851 = vlaneseq
    %v2852 = vshrl.u32 %v2851, 7
    %v2853 = vsub.s32 %v2850, %v2852
    %v2854 = vrot.slane %v2833, %v2853
    %v2855 = vcombine.high %v2840, %v2840
    %v2856 = vcombine.high %v2854, %v2854
    %v2867 = vsub.f32 %v2624, %v2801
    %v2868 = vsub.f32 %v2638, %v2815
    %v2869 = vsub.f32 %v2646, %v2816
    %v2870 = vsub.f32 %v2648, %v2817
    %v2871 = vsub.f32 %v2631, %v2808
    %v2872 = vsub.f32 %v2645, %v2840
    %v2873 = vsub.f32 %v2647, %v2854
    %v2874 = vsub.f32 %v2649, %v2855
    %v2875 = vsub.f32 %v2664, %v2856
    %v2876 = vsub.f32 %v2671, %v2847
    %v2877 = vmul.f32 %v2867, 1.442695
    %v2878 = vpow.pop %v2877
    %v2879 = vmul.f32 %v2868, 1.442695
    %v2880 = vpow.pop %v2879
    %v2881 = vmul.f32 %v2869, 1.442695
    %v2882 = vpow.pop %v2881
    %v2883 = vmul.f32 %v2870, 1.442695
    %v2884 = vpow.pop %v2883
    %v2885 = vmul.f32 %v2871, 1.442695
    %v2886 = vpow.pop %v2885
    %v2887 = vmul.f32 %v2872, 1.442695
    %v2888 = vpow.pop %v2887
    %v2889 = vmul.f32 %v2873, 1.442695
    %v2890 = vpow.pop %v2889
    %v2891 = vmul.f32 %v2874, 1.442695
    %v2892 = vpow.pop %v2891
    %v2893 = vmul.f32 %v2875, 1.442695
    %v2894 = vpow.pop %v2893
    %v2895 = vmul.f32 %v2876, 1.442695
    %v2896 = vpow.pop %v2895
    %v2907 = vcombine.low %v2878, %v2880
    %v2908 = vcombine.low %v2882, %v2884
    %v2910 = vunpack.c.l.s4 1966171168
    %v2911 = vunpack.c.0.s8 %v2910
    %v2912 = vlaneseq
    %v2913 = vshrl.u32 %v2912, 7
    %v2914 = vsub.s32 %v2911, %v2913
    %v2915 = vrot.slane %v2907, %v2914
    %v2917 = vunpack.c.l.s4 1966171168
    %v2918 = vunpack.c.0.s8 %v2917
    %v2919 = vlaneseq
    %v2920 = vshrl.u32 %v2919, 7
    %v2921 = vsub.s32 %v2918, %v2920
    %v2922 = vrot.slane %v2908, %v2921
    %v2924 = vunpack.c.l.s4 1966171168
    %v2925 = vunpack.c.0.s8 %v2924
    %v2926 = vlaneseq
    %v2927 = vshrl.u32 %v2926, 7
    %v2928 = vsub.s32 %v2925, %v2927
    %v2929 = vrot.slane %v2886, %v2928
    %v2930 = vcombine.low %v2915, %v2922
    %v2932 = vunpack.c.l.s4 1966171168
    %v2933 = vunpack.c.0.s8 %v2932
    %v2934 = vlaneseq
    %v2935 = vshrl.u32 %v2934, 7
    %v2936 = vsub.s32 %v2933, %v2935
    %v2937 = vrot.slane %v2930, %v2936
    %v2939 = vunpack.c.l.s4 1966171168
    %v2940 = vunpack.c.0.s8 %v2939
    %v2941 = vlaneseq
    %v2942 = vshrl.u32 %v2941, 7
    %v2943 = vsub.s32 %v2940, %v2942
    %v2944 = vrot.slane %v2929, %v2943
    %v2945 = vcombine.low %v2937, %v2944
    %v2946 = vcombine.low %v2888, %v2890
    %v2947 = vcombine.low %v2892, %v2894
    %v2949 = vunpack.c.l.s4 1966171168
    %v2950 = vunpack.c.0.s8 %v2949
    %v2951 = vlaneseq
    %v2952 = vshrl.u32 %v2951, 7
    %v2953 = vsub.s32 %v2950, %v2952
    %v2954 = vrot.slane %v2946, %v2953
    %v2956 = vunpack.c.l.s4 1966171168
    %v2957 = vunpack.c.0.s8 %v2956
    %v2958 = vlaneseq
    %v2959 = vshrl.u32 %v2958, 7
    %v2960 = vsub.s32 %v2957, %v2959
    %v2961 = vrot.slane %v2947, %v2960
    %v2963 = vunpack.c.l.s4 1966171168
    %v2964 = vunpack.c.0.s8 %v2963
    %v2965 = vlaneseq
    %v2966 = vshrl.u32 %v2965, 7
    %v2967 = vsub.s32 %v2964, %v2966
    %v2968 = vrot.slane %v2896, %v2967
    %v2969 = vcombine.low %v2954, %v2961
    %v2971 = vunpack.c.l.s4 1966171168
    %v2972 = vunpack.c.0.s8 %v2971
    %v2973 = vlaneseq
    %v2974 = vshrl.u32 %v2973, 7
    %v2975 = vsub.s32 %v2972, %v2974
    %v2976 = vrot.slane %v2969, %v2975
    %v2978 = vunpack.c.l.s4 1966171168
    %v2979 = vunpack.c.0.s8 %v2978
    %v2980 = vlaneseq
    %v2981 = vshrl.u32 %v2980, 7
    %v2982 = vsub.s32 %v2979, %v2981
    %v2983 = vrot.slane %v2968, %v2982
    %v2984 = vcombine.low %v2976, %v2983
    %v2987 = vsel %vm2762, %v2945, 0.0
    %v2988 = vrot.slane %v2987, 4
    %v2989 = vadd.f32 %v2987, %v2988
    %v2990 = vrot.slane %v2989, 2
    %v2991 = vadd.f32 %v2989, %v2990
    %v2992 = vrot.slane %v2991, 1
    %v2993 = vadd.f32 %v2991, %v2992
    %v2994 = vsel %vm2762, %v2984, 0.0
    %v2995 = vrot.slane %v2994, 4
    %v2996 = vadd.f32 %v2994, %v2995
    %v2997 = vrot.slane %v2996, 2
    %v2998 = vadd.f32 %v2996, %v2997
    %v2999 = vrot.slane %v2998, 1
    %v3000 = vadd.f32 %v2998, %v2999
    %v3003 = vcombine.high %v2993, %v2993
    %v3005 = vunpack.c.l.s4 1966171168
    %v3006 = vunpack.c.0.s8 %v3005
    %v3007 = vlaneseq
    %v3008 = vshrl.u32 %v3007, 7
    %v3009 = vsub.s32 %v3006, %v3008
    %v3010 = vrot.slane %v2993, %v3009
    %v3012 = vunpack.c.l.s4 1966171168
    %v3013 = vunpack.c.0.s8 %v3012
    %v3014 = vlaneseq
    %v3015 = vshrl.u32 %v3014, 7
    %v3016 = vsub.s32 %v3013, %v3015
    %v3017 = vrot.slane %v3003, %v3016
    %v3018 = vcombine.high %v3010, %v3010
    %v3020 = vunpack.c.l.s4 1966171168
    %v3021 = vunpack.c.0.s8 %v3020
    %v3022 = vlaneseq
    %v3023 = vshrl.u32 %v3022, 7
    %v3024 = vsub.s32 %v3021, %v3023
    %v3025 = vrot.slane %v3010, %v3024
    %v3027 = vunpack.c.l.s4 1966171168
    %v3028 = vunpack.c.0.s8 %v3027
    %v3029 = vlaneseq
    %v3030 = vshrl.u32 %v3029, 7
    %v3031 = vsub.s32 %v3028, %v3030
    %v3032 = vrot.slane %v3017, %v3031
    %v3034 = vunpack.c.l.s4 1966171168
    %v3035 = vunpack.c.0.s8 %v3034
    %v3036 = vlaneseq
    %v3037 = vshrl.u32 %v3036, 7
    %v3038 = vsub.s32 %v3035, %v3037
    %v3039 = vrot.slane %v3018, %v3038
    %v3040 = vcombine.high %v3025, %v3025
    %v3041 = vcombine.high %v3039, %v3039
    %v3042 = vcombine.high %v3000, %v3000
    %v3044 = vunpack.c.l.s4 1966171168
    %v3045 = vunpack.c.0.s8 %v3044
    %v3046 = vlaneseq
    %v3047 = vshrl.u32 %v3046, 7
    %v3048 = vsub.s32 %v3045, %v3047
    %v3049 = vrot.slane %v3000, %v3048
    %v3051 = vunpack.c.l.s4 1966171168
    %v3052 = vunpack.c.0.s8 %v3051
    %v3053 = vlaneseq
    %v3054 = vshrl.u32 %v3053, 7
    %v3055 = vsub.s32 %v3052, %v3054
    %v3056 = vrot.slane %v3042, %v3055
    %v3057 = vcombine.high %v3049, %v3049
    %v3059 = vunpack.c.l.s4 1966171168
    %v3060 = vunpack.c.0.s8 %v3059
    %v3061 = vlaneseq
    %v3062 = vshrl.u32 %v3061, 7
    %v3063 = vsub.s32 %v3060, %v3062
    %v3064 = vrot.slane %v3049, %v3063
    %v3066 = vunpack.c.l.s4 1966171168
    %v3067 = vunpack.c.0.s8 %v3066
    %v3068 = vlaneseq
    %v3069 = vshrl.u32 %v3068, 7
    %v3070 = vsub.s32 %v3067, %v3069
    %v3071 = vrot.slane %v3056, %v3070
    %v3073 = vunpack.c.l.s4 1966171168
    %v3074 = vunpack.c.0.s8 %v3073
    %v3075 = vlaneseq
    %v3076 = vshrl.u32 %v3075, 7
    %v3077 = vsub.s32 %v3074, %v3076
    %v3078 = vrot.slane %v3057, %v3077
    %v3079 = vcombine.high %v3064, %v3064
    %v3080 = vcombine.high %v3078, %v3078
    %v3091 = vrcp.pop %v3025
    %v3092 = vmul.f32 %v2878, %v3091
    %v3093 = vrcp.pop %v3039
    %v3094 = vmul.f32 %v2880, %v3093
    %v3095 = vrcp.pop %v3040
    %v3096 = vmul.f32 %v2882, %v3095
    %v3097 = vrcp.pop %v3041
    %v3098 = vmul.f32 %v2884, %v3097
    %v3099 = vrcp.pop %v3032
    %v3100 = vmul.f32 %v2886, %v3099
    %v3101 = vrcp.pop %v3064
    %v3102 = vmul.f32 %v2888, %v3101
    %v3103 = vrcp.pop %v3078
    %v3104 = vmul.f32 %v2890, %v3103
    %v3105 = vrcp.pop %v3079
    %v3106 = vmul.f32 %v2892, %v3105
    %v3107 = vrcp.pop %v3080
    %v3108 = vmul.f32 %v2894, %v3107
    %v3109 = vrcp.pop %v3071
    %v3110 = vmul.f32 %v2896, %v3109
    %v3111 = vld [vmem:[%s10] sm:$0xf]
    %v3122 = vcombine.low %v3092, %v3094
    %v3123 = vcombine.low %v3096, %v3098
    %v3124 = vcombine.low %v3100, %v3102
    %v3125 = vcombine.low %v3104, %v3106
    %v3127 = vunpack.c.l.s4 1966171168
    %v3128 = vunpack.c.0.s8 %v3127
    %v3129 = vlaneseq
    %v3130 = vshrl.u32 %v3129, 7
    %v3131 = vsub.s32 %v3128, %v3130
    %v3132 = vrot.slane %v3122, %v3131
    %v3134 = vunpack.c.l.s4 1966171168
    %v3135 = vunpack.c.0.s8 %v3134
    %v3136 = vlaneseq
    %v3137 = vshrl.u32 %v3136, 7
    %v3138 = vsub.s32 %v3135, %v3137
    %v3139 = vrot.slane %v3123, %v3138
    %v3141 = vunpack.c.l.s4 1966171168
    %v3142 = vunpack.c.0.s8 %v3141
    %v3143 = vlaneseq
    %v3144 = vshrl.u32 %v3143, 7
    %v3145 = vsub.s32 %v3142, %v3144
    %v3146 = vrot.slane %v3124, %v3145
    %v3148 = vunpack.c.l.s4 1966171168
    %v3149 = vunpack.c.0.s8 %v3148
    %v3150 = vlaneseq
    %v3151 = vshrl.u32 %v3150, 7
    %v3152 = vsub.s32 %v3149, %v3151
    %v3153 = vrot.slane %v3125, %v3152
    %v3154 = vcombine.low %v3132, %v3139
    %v3155 = vcombine.low %v3146, %v3153
    %v3157 = vunpack.c.l.s4 1966171168
    %v3158 = vunpack.c.0.s8 %v3157
    %v3159 = vlaneseq
    %v3160 = vshrl.u32 %v3159, 7
    %v3161 = vsub.s32 %v3158, %v3160
    %v3162 = vrot.slane %v3154, %v3161
    %v3164 = vunpack.c.l.s4 1966171168
    %v3165 = vunpack.c.0.s8 %v3164
    %v3166 = vlaneseq
    %v3167 = vshrl.u32 %v3166, 7
    %v3168 = vsub.s32 %v3165, %v3167
    %v3169 = vrot.slane %v3155, %v3168
    %v3170 = vcombine.low %v3162, %v3169
    %v3171 = vcombine.low %v3108, %v3110
    %v3173 = vunpack.c.l.s4 1966171168
    %v3174 = vunpack.c.0.s8 %v3173
    %v3175 = vlaneseq
    %v3176 = vshrl.u32 %v3175, 7
    %v3177 = vsub.s32 %v3174, %v3176
    %v3178 = vrot.slane %v3171, %v3177
    %v3180 = vunpack.c.l.s4 1966171168
    %v3181 = vunpack.c.0.s8 %v3180
    %v3182 = vlaneseq
    %v3183 = vshrl.u32 %v3182, 7
    %v3184 = vsub.s32 %v3181, %v3183
    %v3185 = vrot.slane %v3178, %v3184
    %vm3186 = vcmask 31744
    %v3187 = vsel %vm3186, %v3170, 0
    %v3189 = vsel %vm3186, %v3185, 0
    %vm3191 = vcmask 1043456
    %v3193 = vsel %vm3191, %v3111, 0
    %3195 = vmatprep.subr.mxu0 0.0
    %3196 = vmatpush1.msra.mxu0 0.0
    %3197 = vmatprep.subr.mxu0 0.0
    %3198 = vmatpush1.msra.mxu0 0.0
    %3199 = vmatprep.subr.mxu0 0.0
    %3200 = vmatpush1.msra.mxu0 0.0
    %3201 = vmatprep.subr.mxu0 0.0
    %3202 = vmatpush1.msra.mxu0 0.0
    %3203 = vmatprep.subr.mxu0 0.0
    %3204 = vmatpush1.msra.mxu0 0.0
    %3205 = vmatprep.subr.mxu0 0.0
    %3206 = vmatpush1.msra.mxu0 0.0
    %3207 = vmatprep.subr.mxu0 0.0
    %3208 = vmatpush1.msra.mxu0 0.0
    %3209 = vmatprep.subr.mxu0 0.0
    %3210 = vmatpush1.msra.mxu0 0.0
    %3211 = vmatprep.subr.mxu0 0.0
    %3212 = vmatpush1.msra.mxu0 0.0
    %3213 = vmatprep.subr.mxu0 0.0
    %3214 = vmatpush1.msra.mxu0 0.0
    %3215 = vmatprep.subr.mxu0 0.0
    %3216 = vmatpush1.msra.mxu0 0.0
    %3217 = vmatprep.subr.mxu0 0.0
    %3218 = vmatpush1.msra.mxu0 0.0
    %3219 = vmatprep.subr.mxu0 0.0
    %3220 = vmatpush1.msra.mxu0 0.0
    %3221 = vmatprep.subr.mxu0 0.0
    %3222 = vmatpush1.msra.mxu0 0.0
    %3223 = vmatprep.subr.mxu0 0.0
    %3224 = vmatpush1.msra.mxu0 0.0
    %3225 = vmatprep.subr.mxu0 0.0
    %3226 = vmatpush1.msra.mxu0 %v3193
    %3227 = vmatprep.subr.mxu0 0.0
    %3228 = vmatpush2.msra.mxu0 0.0
    %3229 = vmatprep.subr.mxu0 0.0
    %3230 = vmatpush2.msra.mxu0 0.0
    %3231 = vmatprep.subr.mxu0 0.0
    %3232 = vmatpush2.msra.mxu0 0.0
    %3233 = vmatprep.subr.mxu0 0.0
    %3234 = vmatpush2.msra.mxu0 0.0
    %3235 = vmatprep.subr.mxu0 0.0
    %3236 = vmatpush2.msra.mxu0 0.0
    %3237 = vmatprep.subr.mxu0 0.0
    %3238 = vmatpush2.msra.mxu0 0.0
    %3239 = vmatprep.subr.mxu0 0.0
    %3240 = vmatpush2.msra.mxu0 0.0
    %3241 = vmatprep.subr.mxu0 0.0
    %3242 = vmatpush2.msra.mxu0 0.0
    %3243 = vmatprep.subr.mxu0 0.0
    %3244 = vmatpush2.msra.mxu0 0.0
    %3245 = vmatprep.subr.mxu0 0.0
    %3246 = vmatpush2.msra.mxu0 0.0
    %3247 = vmatprep.subr.mxu0 0.0
    %3248 = vmatpush2.msra.mxu0 0.0
    %3249 = vmatprep.subr.mxu0 0.0
    %3250 = vmatpush2.msra.mxu0 0.0
    %3251 = vmatprep.subr.mxu0 0.0
    %3252 = vmatpush2.msra.mxu0 0.0
    %3253 = vmatprep.subr.mxu0 0.0
    %3254 = vmatpush2.msra.mxu0 0.0
    %3255 = vmatprep.subr.mxu0 0.0
    %3256 = vmatpush2.msra.mxu0 0.0
    %3257 = vmatprep.subr.mxu0 0.0
    %3258 = vmatpush2.msra.mxu0 0.0
    %3259 = vmatprep.mubr.f32.mxu0 0.0
    %3260 = vmatmul.mubr.f32.gmra.mxu0 %v3187
    %v3261 = vpop.f32.mrf.mxu0
    %v3262 = vadd.f32 0.0, %v3261
    %v3263 = vpop.f32.mrf.mxu0
    %3264 = vmatprep.mubr.f32.mxu0 0.0
    %3265 = vmatmul.mubr.f32.gmra.mxu0 %v3189
    %v3266 = vpop.f32.mrf.mxu0
    %v3267 = vadd.f32 0.0, %v3266
    %v3268 = vpop.f32.mrf.mxu0
    %3269 = vdwg.mxu0
    %v3272 = vcombine.high %v3262, %v3262
    %v3274 = vunpack.c.l.s4 1966171168
    %v3275 = vunpack.c.0.s8 %v3274
    %v3276 = vlaneseq
    %v3277 = vshrl.u32 %v3276, 7
    %v3278 = vsub.s32 %v3275, %v3277
    %v3279 = vrot.slane %v3262, %v3278
    %v3281 = vunpack.c.l.s4 1966171168
    %v3282 = vunpack.c.0.s8 %v3281
    %v3283 = vlaneseq
    %v3284 = vshrl.u32 %v3283, 7
    %v3285 = vsub.s32 %v3282, %v3284
    %v3286 = vrot.slane %v3272, %v3285
    %v3287 = vcombine.high %v3279, %v3279
    %v3288 = vcombine.high %v3286, %v3286
    %v3290 = vunpack.c.l.s4 1966171168
    %v3291 = vunpack.c.0.s8 %v3290
    %v3292 = vlaneseq
    %v3293 = vshrl.u32 %v3292, 7
    %v3294 = vsub.s32 %v3291, %v3293
    %v3295 = vrot.slane %v3279, %v3294
    %v3297 = vunpack.c.l.s4 1966171168
    %v3298 = vunpack.c.0.s8 %v3297
    %v3299 = vlaneseq
    %v3300 = vshrl.u32 %v3299, 7
    %v3301 = vsub.s32 %v3298, %v3300
    %v3302 = vrot.slane %v3286, %v3301
    %v3304 = vunpack.c.l.s4 1966171168
    %v3305 = vunpack.c.0.s8 %v3304
    %v3306 = vlaneseq
    %v3307 = vshrl.u32 %v3306, 7
    %v3308 = vsub.s32 %v3305, %v3307
    %v3309 = vrot.slane %v3287, %v3308
    %v3311 = vunpack.c.l.s4 1966171168
    %v3312 = vunpack.c.0.s8 %v3311
    %v3313 = vlaneseq
    %v3314 = vshrl.u32 %v3313, 7
    %v3315 = vsub.s32 %v3312, %v3314
    %v3316 = vrot.slane %v3288, %v3315
    %v3317 = vcombine.high %v3295, %v3295
    %v3318 = vcombine.high %v3302, %v3302
    %v3319 = vcombine.high %v3309, %v3309
    %v3320 = vcombine.high %v3316, %v3316
    %v3322 = vunpack.c.l.s4 1966171168
    %v3323 = vunpack.c.0.s8 %v3322
    %v3324 = vlaneseq
    %v3325 = vshrl.u32 %v3324, 7
    %v3326 = vsub.s32 %v3323, %v3325
    %v3327 = vrot.slane %v3267, %v3326
    %v3328 = vcombine.high %v3327, %v3327
    %v3330 = vunpack.c.l.s4 1966171168
    %v3331 = vunpack.c.0.s8 %v3330
    %v3332 = vlaneseq
    %v3333 = vshrl.u32 %v3332, 7
    %v3334 = vsub.s32 %v3331, %v3333
    %v3335 = vrot.slane %v3327, %v3334
    %v3337 = vunpack.c.l.s4 1966171168
    %v3338 = vunpack.c.0.s8 %v3337
    %v3339 = vlaneseq
    %v3340 = vshrl.u32 %v3339, 7
    %v3341 = vsub.s32 %v3338, %v3340
    %v3342 = vrot.slane %v3328, %v3341
    %3353 = vrot.lane.b32.xlu0 %v2232, 96
    %v3354 = vpop.permute.xlu0 %3353
    %3355 = vrot.lane.b32.xlu0 %v2246, 96
    %v3356 = vpop.permute.xlu0 %3355
    %3357 = vrot.lane.b32.xlu0 %v2254, 96
    %v3358 = vpop.permute.xlu0 %3357
    %3359 = vrot.lane.b32.xlu0 %v2256, 96
    %v3360 = vpop.permute.xlu0 %3359
    %3361 = vrot.lane.b32.xlu0 %v2239, 96
    %v3362 = vpop.permute.xlu0 %3361
    %3363 = vrot.lane.b32.xlu0 %v2253, 96
    %v3364 = vpop.permute.xlu0 %3363
    %3365 = vrot.lane.b32.xlu0 %v2255, 96
    %v3366 = vpop.permute.xlu0 %3365
    %3367 = vrot.lane.b32.xlu0 %v2257, 96
    %v3368 = vpop.permute.xlu0 %3367
    %3369 = vrot.lane.b32.xlu0 %v2272, 96
    %v3370 = vpop.permute.xlu0 %3369
    %3371 = vrot.lane.b32.xlu0 %v2279, 96
    %v3372 = vpop.permute.xlu0 %3371
    %v3383 = vmul.f32 %v3295, %v3354
    %v3384 = vmul.f32 %v3309, %v3356
    %v3385 = vmul.f32 %v3317, %v3358
    %v3386 = vmul.f32 %v3319, %v3360
    %v3387 = vmul.f32 %v3302, %v3362
    %v3388 = vmul.f32 %v3316, %v3364
    %v3389 = vmul.f32 %v3318, %v3366
    %v3390 = vmul.f32 %v3320, %v3368
    %v3391 = vmul.f32 %v3335, %v3370
    %v3392 = vmul.f32 %v3342, %v3372
    %v3403 = vcombine.low %v3383, %v3384
    %v3404 = vcombine.low %v3385, %v3386
    %v3406 = vunpack.c.l.s4 1966171168
    %v3407 = vunpack.c.0.s8 %v3406
    %v3408 = vlaneseq
    %v3409 = vshrl.u32 %v3408, 7
    %v3410 = vsub.s32 %v3407, %v3409
    %v3411 = vrot.slane %v3403, %v3410
    %v3413 = vunpack.c.l.s4 1966171168
    %v3414 = vunpack.c.0.s8 %v3413
    %v3415 = vlaneseq
    %v3416 = vshrl.u32 %v3415, 7
    %v3417 = vsub.s32 %v3414, %v3416
    %v3418 = vrot.slane %v3404, %v3417
    %v3420 = vunpack.c.l.s4 1966171168
    %v3421 = vunpack.c.0.s8 %v3420
    %v3422 = vlaneseq
    %v3423 = vshrl.u32 %v3422, 7
    %v3424 = vsub.s32 %v3421, %v3423
    %v3425 = vrot.slane %v3387, %v3424
    %v3426 = vcombine.low %v3411, %v3418
    %v3428 = vunpack.c.l.s4 1966171168
    %v3429 = vunpack.c.0.s8 %v3428
    %v3430 = vlaneseq
    %v3431 = vshrl.u32 %v3430, 7
    %v3432 = vsub.s32 %v3429, %v3431
    %v3433 = vrot.slane %v3426, %v3432
    %v3435 = vunpack.c.l.s4 1966171168
    %v3436 = vunpack.c.0.s8 %v3435
    %v3437 = vlaneseq
    %v3438 = vshrl.u32 %v3437, 7
    %v3439 = vsub.s32 %v3436, %v3438
    %v3440 = vrot.slane %v3425, %v3439
    %v3441 = vcombine.low %v3433, %v3440
    %v3442 = vcombine.low %v3388, %v3389
    %v3443 = vcombine.low %v3390, %v3391
    %v3445 = vunpack.c.l.s4 1966171168
    %v3446 = vunpack.c.0.s8 %v3445
    %v3447 = vlaneseq
    %v3448 = vshrl.u32 %v3447, 7
    %v3449 = vsub.s32 %v3446, %v3448
    %v3450 = vrot.slane %v3442, %v3449
    %v3452 = vunpack.c.l.s4 1966171168
    %v3453 = vunpack.c.0.s8 %v3452
    %v3454 = vlaneseq
    %v3455 = vshrl.u32 %v3454, 7
    %v3456 = vsub.s32 %v3453, %v3455
    %v3457 = vrot.slane %v3443, %v3456
    %v3459 = vunpack.c.l.s4 1966171168
    %v3460 = vunpack.c.0.s8 %v3459
    %v3461 = vlaneseq
    %v3462 = vshrl.u32 %v3461, 7
    %v3463 = vsub.s32 %v3460, %v3462
    %v3464 = vrot.slane %v3392, %v3463
    %v3465 = vcombine.low %v3450, %v3457
    %v3467 = vunpack.c.l.s4 1966171168
    %v3468 = vunpack.c.0.s8 %v3467
    %v3469 = vlaneseq
    %v3470 = vshrl.u32 %v3469, 7
    %v3471 = vsub.s32 %v3468, %v3470
    %v3472 = vrot.slane %v3465, %v3471
    %v3474 = vunpack.c.l.s4 1966171168
    %v3475 = vunpack.c.0.s8 %v3474
    %v3476 = vlaneseq
    %v3477 = vshrl.u32 %v3476, 7
    %v3478 = vsub.s32 %v3475, %v3477
    %v3479 = vrot.slane %v3464, %v3478
    %v3480 = vcombine.low %v3472, %v3479
    %v3483 = vsel %vm785, %v3441, 0.0
    %v3484 = vrot.slane %v3483, 4
    %v3485 = vadd.f32 %v3483, %v3484
    %v3486 = vrot.slane %v3485, 2
    %v3487 = vadd.f32 %v3485, %v3486
    %v3488 = vrot.slane %v3487, 1
    %v3489 = vadd.f32 %v3487, %v3488
    %v3490 = vsel %vm785, %v3480, 0.0
    %v3491 = vrot.slane %v3490, 4
    %v3492 = vadd.f32 %v3490, %v3491
    %v3493 = vrot.slane %v3492, 2
    %v3494 = vadd.f32 %v3492, %v3493
    %v3495 = vrot.slane %v3494, 1
    %v3496 = vadd.f32 %v3494, %v3495
    %v3497 = vld [vmem:[%s12] sm:$0xff]
    %v3498 = vld [vmem:[%s13] sm:$0x1]
    %v3500 = vlaneseq
    %v3501 = vshrl.u32 %v3500, 7
    %v3502 = vsub.s32 0, %v3501
    %v3503 = vrot.slane %v3498, %v3502
    %vm3505 = vcmask 64512
    %v3507 = vsel %vm3505, %v253, 0
    %3509 = vmatprep.subr.mxu0 0.0
    %3510 = vmatpush1.msra.mxu0 0.0
    %3511 = vmatprep.subr.mxu0 0.0
    %3512 = vmatpush1.msra.mxu0 0.0
    %3513 = vmatprep.subr.mxu0 0.0
    %3514 = vmatpush1.msra.mxu0 0.0
    %3515 = vmatprep.subr.mxu0 0.0
    %3516 = vmatpush1.msra.mxu0 0.0
    %3517 = vmatprep.subr.mxu0 0.0
    %3518 = vmatpush1.msra.mxu0 0.0
    %3519 = vmatprep.subr.mxu0 0.0
    %3520 = vmatpush1.msra.mxu0 0.0
    %3521 = vmatprep.subr.mxu0 0.0
    %3522 = vmatpush1.msra.mxu0 0.0
    %3523 = vmatprep.subr.mxu0 0.0
    %3524 = vmatpush1.msra.mxu0 0.0
    %3525 = vmatprep.subr.mxu0 0.0
    %3526 = vmatpush1.msra.mxu0 0.0
    %3527 = vmatprep.subr.mxu0 0.0
    %3528 = vmatpush1.msra.mxu0 0.0
    %3529 = vmatprep.subr.mxu0 0.0
    %3530 = vmatpush1.msra.mxu0 0.0
    %3531 = vmatprep.subr.mxu0 0.0
    %3532 = vmatpush1.msra.mxu0 0.0
    %3533 = vmatprep.subr.mxu0 0.0
    %3534 = vmatpush1.msra.mxu0 0.0
    %3535 = vmatprep.subr.mxu0 0.0
    %3536 = vmatpush1.msra.mxu0 0.0
    %3537 = vmatprep.subr.mxu0 0.0
    %3538 = vmatpush1.msra.mxu0 0.0
    %3539 = vmatprep.subr.mxu0 0.0
    %3540 = vmatpush1.msra.mxu0 %v3497
    %3541 = vmatprep.subr.mxu0 0.0
    %3542 = vmatpush2.msra.mxu0 0.0
    %3543 = vmatprep.subr.mxu0 0.0
    %3544 = vmatpush2.msra.mxu0 0.0
    %3545 = vmatprep.subr.mxu0 0.0
    %3546 = vmatpush2.msra.mxu0 0.0
    %3547 = vmatprep.subr.mxu0 0.0
    %3548 = vmatpush2.msra.mxu0 0.0
    %3549 = vmatprep.subr.mxu0 0.0
    %3550 = vmatpush2.msra.mxu0 0.0
    %3551 = vmatprep.subr.mxu0 0.0
    %3552 = vmatpush2.msra.mxu0 0.0
    %3553 = vmatprep.subr.mxu0 0.0
    %3554 = vmatpush2.msra.mxu0 0.0
    %3555 = vmatprep.subr.mxu0 0.0
    %3556 = vmatpush2.msra.mxu0 0.0
    %3557 = vmatprep.subr.mxu0 0.0
    %3558 = vmatpush2.msra.mxu0 0.0
    %3559 = vmatprep.subr.mxu0 0.0
    %3560 = vmatpush2.msra.mxu0 0.0
    %3561 = vmatprep.subr.mxu0 0.0
    %3562 = vmatpush2.msra.mxu0 0.0
    %3563 = vmatprep.subr.mxu0 0.0
    %3564 = vmatpush2.msra.mxu0 0.0
    %3565 = vmatprep.subr.mxu0 0.0
    %3566 = vmatpush2.msra.mxu0 0.0
    %3567 = vmatprep.subr.mxu0 0.0
    %3568 = vmatpush2.msra.mxu0 0.0
    %3569 = vmatprep.subr.mxu0 0.0
    %3570 = vmatpush2.msra.mxu0 0.0
    %3571 = vmatprep.subr.mxu0 0.0
    %3572 = vmatpush2.msra.mxu0 0.0
    %3573 = vmatprep.mubr.f32.mxu0 0.0
    %3574 = vmatmul.mubr.f32.gmra.mxu0 %v3507
    %v3575 = vpop.f32.mrf.mxu0
    %v3576 = vadd.f32 %v3503, %v3575
    %v3577 = vpop.f32.mrf.mxu0
    %3578 = vdwg.mxu0
    %v3579 = vld [vmem:[%s11] sm:$0x1]
    %v3581 = vlaneseq
    %v3582 = vshrl.u32 %v3581, 7
    %v3583 = vsub.s32 0, %v3582
    %v3584 = vrot.slane %v3579, %v3583
    %v3586 = vadd.f32 %v3489, %v3584
    %v3587 = vadd.f32 %v3496, %v3584
    %v3588 = vadd.f32 %v3576, 1.0
    %v3590 = vrot.slane %v3588, 1
    %v3593 = vmul.f32 %v3586, %v3588
    %v3594 = vmul.f32 %v3587, %v3590
    %v3595 = vld [vmem:[#allocation14] sm:$0xff]
    %v3596 = vld [vmem:[#allocation14 + $0x8] sm:$0xff]
    %v3597 = vld [vmem:[#allocation14 + $0x10] sm:$0xff]
    %v3598 = vld [vmem:[#allocation14 + $0x18] sm:$0xff]
    %v3599 = vld [vmem:[%s15] sm:$0x1]
    %v3601 = vlaneseq
    %v3602 = vshrl.u32 %v3601, 7
    %v3603 = vsub.s32 0, %v3602
    %v3604 = vrot.slane %v3599, %v3603
    %v3608 = vrot.slane %v3594, 7
    %vm3609 = vcmask 1041409
    %v3610 = vsel %vm3609, %v3608, %v3593
    %v3611 = vsel %vm178, %v3610, 0
    %3613 = vmatprep.subr.mxu0 0.0
    %3614 = vmatpush1.msra.mxu0 0.0
    %3615 = vmatprep.subr.mxu0 0.0
    %3616 = vmatpush1.msra.mxu0 0.0
    %3617 = vmatprep.subr.mxu0 0.0
    %3618 = vmatpush1.msra.mxu0 0.0
    %3619 = vmatprep.subr.mxu0 0.0
    %3620 = vmatpush1.msra.mxu0 0.0
    %3621 = vmatprep.subr.mxu0 0.0
    %3622 = vmatpush1.msra.mxu0 0.0
    %3623 = vmatprep.subr.mxu0 0.0
    %3624 = vmatpush1.msra.mxu0 0.0
    %3625 = vmatprep.subr.mxu0 0.0
    %3626 = vmatpush1.msra.mxu0 0.0
    %3627 = vmatprep.subr.mxu0 0.0
    %3628 = vmatpush1.msra.mxu0 0.0
    %3629 = vmatprep.subr.mxu0 0.0
    %3630 = vmatpush1.msra.mxu0 0.0
    %3631 = vmatprep.subr.mxu0 0.0
    %3632 = vmatpush1.msra.mxu0 0.0
    %3633 = vmatprep.subr.mxu0 0.0
    %3634 = vmatpush1.msra.mxu0 0.0
    %3635 = vmatprep.subr.mxu0 0.0
    %3636 = vmatpush1.msra.mxu0 0.0
    %3637 = vmatprep.subr.mxu0 0.0
    %3638 = vmatpush1.msra.mxu0 %v3598
    %3639 = vmatprep.subr.mxu0 0.0
    %3640 = vmatpush1.msra.mxu0 %v3597
    %3641 = vmatprep.subr.mxu0 0.0
    %3642 = vmatpush1.msra.mxu0 %v3596
    %3643 = vmatprep.subr.mxu0 0.0
    %3644 = vmatpush1.msra.mxu0 %v3595
    %3645 = vmatprep.subr.mxu0 0.0
    %3646 = vmatpush2.msra.mxu0 0.0
    %3647 = vmatprep.subr.mxu0 0.0
    %3648 = vmatpush2.msra.mxu0 0.0
    %3649 = vmatprep.subr.mxu0 0.0
    %3650 = vmatpush2.msra.mxu0 0.0
    %3651 = vmatprep.subr.mxu0 0.0
    %3652 = vmatpush2.msra.mxu0 0.0
    %3653 = vmatprep.subr.mxu0 0.0
    %3654 = vmatpush2.msra.mxu0 0.0
    %3655 = vmatprep.subr.mxu0 0.0
    %3656 = vmatpush2.msra.mxu0 0.0
    %3657 = vmatprep.subr.mxu0 0.0
    %3658 = vmatpush2.msra.mxu0 0.0
    %3659 = vmatprep.subr.mxu0 0.0
    %3660 = vmatpush2.msra.mxu0 0.0
    %3661 = vmatprep.subr.mxu0 0.0
    %3662 = vmatpush2.msra.mxu0 0.0
    %3663 = vmatprep.subr.mxu0 0.0
    %3664 = vmatpush2.msra.mxu0 0.0
    %3665 = vmatprep.subr.mxu0 0.0
    %3666 = vmatpush2.msra.mxu0 0.0
    %3667 = vmatprep.subr.mxu0 0.0
    %3668 = vmatpush2.msra.mxu0 0.0
    %3669 = vmatprep.subr.mxu0 0.0
    %3670 = vmatpush2.msra.mxu0 0.0
    %3671 = vmatprep.subr.mxu0 0.0
    %3672 = vmatpush2.msra.mxu0 0.0
    %3673 = vmatprep.subr.mxu0 0.0
    %3674 = vmatpush2.msra.mxu0 0.0
    %3675 = vmatprep.subr.mxu0 0.0
    %3676 = vmatpush2.msra.mxu0 0.0
    %3677 = vmatprep.mubr.f32.mxu0 0.0
    %3678 = vmatmul.mubr.f32.gmra.mxu0 %v3611
    %v3679 = vpop.f32.mrf.mxu0
    %v3680 = vadd.f32 %v3604, %v3679
    %v3681 = vpop.f32.mrf.mxu0
    %3682 = vdwg.mxu0
    %v3683 = vadd.f32 %v155, %v3680
    %vm3684 = vcmask 254976
    %3685 = vst.msk [vmem:[#allocation16] sm:$0x3] %vm3684, %v3683
    // Predicated region
    $region98: #{tpu_custom_call.1} parent=1 // pred_check
      _
    $region99: #{tpu_custom_call.1} parent=1 // pred_check_branch
      %3687 = sbr.rel (0) target = $region101
    $region100: #{tpu_custom_call.1} parent=1 // pred_region
      %s3689 = ssub.s32 32, 32
      %3690 = vsyncadd [#allocation4], %s3689
      %s3692 = sshll.u32 [#allocation16], 4
      %s3693 = int_to_ptr.vmem [resolvable:$true] %s3692
      %3695 = dma.vmem_to_hbm [thread:$0]  %s3693, 32, %s16, [#allocation4]
    $region101: #{tpu_custom_call.1} parent=1 // pred_fallthru
      _
    // Predicated region
    $region102: #{tpu_custom_call.1} parent=1 // pred_check
      _
    $region103: #{tpu_custom_call.1} parent=1 // pred_check_branch
      %3697 = sbr.rel (0) target = $region105
    $region104: #{tpu_custom_call.1} parent=1 // pred_region
      _
    $region105: #{tpu_custom_call.1} parent=1 // pred_fallthru
      _
    // Predicated region
    $region106: #{tpu_custom_call.1} parent=1 // pred_check
      _
    $region107: #{tpu_custom_call.1} parent=1 // pred_check_branch
      %3699 = sbr.rel (0) target = $region109
    $region108: #{tpu_custom_call.1} parent=1 // pred_region
      %3700 = dma.done [#allocation4], 32
    $region109: #{tpu_custom_call.1} parent=1 // pred_fallthru
      _
    // Predicated region
    $region110: #{tpu_custom_call.1} parent=1 // pred_check
      _
    $region111: #{tpu_custom_call.1} parent=1 // pred_check_branch
      %3702 = sbr.rel (0) target = $region113
    $region112: #{tpu_custom_call.1} parent=1 // pred_region
      _
    $region113: #{tpu_custom_call.1} parent=1 // pred_fallthru
      _
    %3703 = vsyncpa [#allocation3], 1
    %3704 = vsyncpa [#allocation6], 1
    %3705 = vsyncpa [#allocation9], 1
    %3706 = vsyncpa [#allocation12], 1
    %3707 = vsyncpa [#allocation15], 1
    %3708 = vsyncpa [#allocation4], 1

</llo_original>
